<compile_context>
chip_gen: v6e
topology: v6e:2x2x1
jax: 0.10.0
libtpu: 0.0.40
codegen_flags: <defaults>
</compile_context>

<pallas_src>
import functools

import jax
import jax.numpy as jnp
import numpy as np
from jax.experimental import pallas as pl
from jax.experimental.pallas import tpu as pltpu

EPS = 1e-5  # PyTorch BatchNorm2d default


def _round_up(x, m):
    return ((x + m - 1) // m) * m


# ----------------------------------------------------------------------------
# Fused residual-block kernel: one batch element per grid step, all
# intermediates VMEM-resident, convs as implicit GEMMs over the 9 taps.
#
# Flat-frame convention: output position (h, w) lives at flat row
#   r = h * Wp2 + w,   Wp2 = Wo + 2.
# Rows with (r % Wp2) >= Wo are "padding columns" (garbage / zeros); they make
# every 3x3 tap a constant row shift of the padded frame, so each tap's A
# operand is a contiguous static slice -> no im2col, no gathers.
# ----------------------------------------------------------------------------
def _residual_block_kernel(x_ref, w1_ref, wsc_ref, w2_ref, b_ref,
                           o_ref, out1_ref, *, stride, Ho, Wo, base):
    s = stride
    Wp2 = Wo + 2                      # padded frame width
    Hpad = Ho + 3                     # rows per activation phase (see wrapper)
    P2 = Hpad * Wp2                   # flattened rows per activation phase
    Mrows = Ho * Wp2                  # rows of the flat accumulation frame
    coutp = o_ref.shape[-1]

    # validity mask: flat row r = h*Wp2 + w is a real output only when w < Wo
    col = jax.lax.broadcasted_iota(jnp.int32, (Mrows, 1), 0) % Wp2
    interior = col < Wo

    # ---- conv1 (3x3, stride s, pad 1) + folded BN1 + ReLU ------------------
    acc1 = jnp.zeros((Mrows, coutp), jnp.float32)
    for ki in range(3):
        for kj in range(3):
            p = (ki % s) * s + (kj % s)                       # stride phase
            start = p * P2 + (ki // s) * Wp2 + (kj // s)      # flat shift
            a = x_ref[0, start:start + Mrows, :].astype(jnp.bfloat16)
            acc1 += jnp.dot(a, w1_ref[ki * 3 + kj],
                            preferred_element_type=jnp.float32)
    # zero the padding-column rows so they act as conv2's zero padding
    out1 = jnp.where(interior, jnp.maximum(acc1 + b_ref[0:1, :], 0.0), 0.0)

    # ---- stage out1 in its zero-padded frame (VMEM only, never to HBM) -----
    out1_ref[...] = jnp.zeros_like(out1_ref)
    out1_ref[base:base + Mrows, :] = out1

    # ---- shortcut: 1x1 projection(+BN) or identity (as matmul with I) ------
    p_sc = (1 % s) * s + (1 % s)
    start_sc = p_sc * P2 + (1 // s) * Wp2 + (1 // s)
    xs = x_ref[0, start_sc:start_sc + Mrows, :].astype(jnp.bfloat16)
    sc = jnp.dot(xs, wsc_ref[...], preferred_element_type=jnp.float32)
    sc = sc + b_ref[1:2, :]

    # ---- conv2 (3x3, stride 1, pad 1) + folded BN2 + residual + ReLU -------
    acc2 = jnp.zeros((Mrows, coutp), jnp.float32)
    for ki in range(3):
        for kj in range(3):
            start = base - Wp2 - 1 + ki * Wp2 + kj
            a = out1_ref[start:start + Mrows, :].astype(jnp.bfloat16)
            acc2 += jnp.dot(a, w2_ref[ki * 3 + kj],
                            preferred_element_type=jnp.float32)
    out = jnp.maximum(acc2 + b_ref[2:3, :] + sc, 0.0)
    o_ref[0] = out.astype(o_ref.dtype)


# ----------------------------------------------------------------------------
# Weight transform: fold eval-mode BN into the conv weights (one-time cost).
# ----------------------------------------------------------------------------
def _fold_bn_into_conv(w_oihw, gamma, beta, mean, var, cinp, coutp, eps=EPS):
    Cout, Cin, kh, kw = w_oihw.shape
    scale = gamma / jnp.sqrt(var + eps)
    bias = beta - mean * scale
    w = jnp.transpose(w_oihw, (2, 3, 1, 0)) * scale[None, None, None, :]
    w = w.reshape(kh * kw, Cin, Cout)
    w = jnp.pad(w, ((0, 0), (0, cinp - Cin), (0, coutp - Cout)))
    b = jnp.pad(bias, (0, coutp - Cout))
    return w.astype(jnp.bfloat16), b.astype(jnp.float32)


# ----------------------------------------------------------------------------
# ResidualBlock forward (single fused Pallas kernel)
# ----------------------------------------------------------------------------
def residual_block_forward(x_nchw, params, stride):
    s = int(stride)
    N, Cin, H, W = x_nchw.shape
    Cout = params["conv1_w"].shape[0]
    Ho = (H - 1) // s + 1
    Wo = (W - 1) // s + 1
    Wp2 = Wo + 2
    Hpad = Ho + 3
    P2 = Hpad * Wp2
    S2 = s * s
    Mrows = Ho * Wp2
    Coutp = _round_up(Cout, 128)           # lane-dense output / MXU N dim
    base = _round_up(Wp2 + 1, 8)           # sublane-aligned start of out1
    P2s = _round_up(base + (Ho + 1) * Wp2 + 1, 8)   # out1 scratch rows

    # --- activation: NCHW -> NHWC, zero-pad, stride-phase decomposition -----
    # (~1.3x of the raw activation instead of the previous 9x im2col matrix)
    x = jnp.transpose(x_nchw, (0, 2, 3, 1)).astype(jnp.float32)
    pad_h = s * Hpad - H - 1
    pad_w = s * Wp2 - W - 1
    xp = jnp.pad(x, ((0, 0), (1, pad_h), (1, pad_w), (0, 0)))
    phases = [xp[:, pi::s, pj::s, :] for pi in range(s) for pj in range(s)]
    x_flat = jnp.stack(phases, axis=1).reshape(N, S2 * P2, Cin)

    # --- BN folded into the GEMM weights ------------------------------------
    w1, b1 = _fold_bn_into_conv(params["conv1_w"], params["bn1_gamma"],
                                params["bn1_beta"], params["bn1_mean"],
                                params["bn1_var"], Cin, Coutp)
    w2, b2 = _fold_bn_into_conv(params["conv2_w"], params["bn2_gamma"],
                                params["bn2_beta"], params["bn2_mean"],
                                params["bn2_var"], Coutp, Coutp)
    if s != 1 or Cin != Cout:
        wsc, bsc = _fold_bn_into_conv(params["conv_sc_w"],
                                      params["bn_sc_gamma"],
                                      params["bn_sc_beta"],
                                      params["bn_sc_mean"],
                                      params["bn_sc_var"], Cin, Coutp)
        wsc = wsc.reshape(Cin, Coutp)
    else:
        # identity shortcut expressed as a matmul with I (uniform kernel path)
        wsc = jnp.pad(jnp.eye(Cin, dtype=jnp.float32),
                      ((0, 0), (0, Coutp - Cin))).astype(jnp.bfloat16)
        bsc = jnp.zeros((Coutp,), jnp.float32)
    b_all = jnp.stack([b1, bsc, b2], axis=0)        # (3, Coutp) f32

    # --- VMEM / cost accounting ---------------------------------------------
    w_bytes = (w1.size + wsc.size + w2.size) * 2
    block_bytes = (2 * S2 * P2 * Cin * 4            # x block (double buffered)
                   + 2 * Mrows * Coutp * 4          # out block
                   + 2 * w_bytes                    # weights (resident)
                   + P2s * Coutp * 4                # out1 scratch
                   + 6 * Mrows * Coutp * 4)         # live accumulators / temps
    # 64 MiB cap keeps the same config safe on v7x (64 MiB/TC); v5e/v6e have
    # 128 MiB and simply get more headroom.
    vmem_limit = int(min(64 * 1024 * 1024,
                         max(32 * 1024 * 1024, 2 * block_bytes)))
    flops = 2 * N * Mrows * Coutp * (9 * Cin + 9 * Coutp + Cin)
    bytes_accessed = (x_flat.size * 4 + w_bytes + b_all.size * 4
                      + N * Mrows * Coutp * 4)

    kernel = functools.partial(_residual_block_kernel, stride=s, Ho=Ho, Wo=Wo,
                               base=base)

    out_flat = pl.pallas_call(
        kernel,
        out_shape=jax.ShapeDtypeStruct((N, Mrows, Coutp), jnp.float32),
        grid_spec=pltpu.PrefetchScalarGridSpec(
            num_scalar_prefetch=0,
            grid=(N,),                              # batch -> parallel axis
            in_specs=[
                pl.BlockSpec((1, S2 * P2, Cin), lambda n: (n, 0, 0)),
                pl.BlockSpec((9, Cin, Coutp), lambda n: (0, 0, 0)),
                pl.BlockSpec((Cin, Coutp), lambda n: (0, 0)),
                pl.BlockSpec((9, Coutp, Coutp), lambda n: (0, 0, 0)),
                pl.BlockSpec((3, Coutp), lambda n: (0, 0)),
            ],
            out_specs=pl.BlockSpec((1, Mrows, Coutp), lambda n: (n, 0, 0)),
            scratch_shapes=[pltpu.VMEM((P2s, Coutp), jnp.float32)],
        ),
        compiler_params=pltpu.CompilerParams(
            dimension_semantics=("parallel",),
            vmem_limit_bytes=vmem_limit),
        cost_estimate=pl.CostEstimate(flops=int(flops), transcendentals=0,
                                      bytes_accessed=int(bytes_accessed)),
    )(x_flat, w1, wsc, w2, b_all)

    # drop the two padding columns per row and the padded channels (~1.2x of
    # the final output, the only post-kernel slice left).
    out = out_flat.reshape(N, Ho, Wp2, Coutp)[:, :, :Wo, :Cout]
    return jnp.transpose(out, (0, 3, 1, 2))         # NHWC -> NCHW


# ----------------------------------------------------------------------------
# Pure-JAX reference (eval-mode BN) for correctness checking
# ----------------------------------------------------------------------------
def reference_forward(x, params, stride):
    def conv(x, w, s, p):
        return jax.lax.conv_general_dilated(
            x, w, (s, s), [(p, p), (p, p)],
            dimension_numbers=("NCHW", "OIHW", "NCHW"),
            precision=jax.lax.Precision.HIGHEST)

    def bn(x, g, b, m, v):
        g, b, m, v = (t[None, :, None, None] for t in (g, b, m, v))
        return (x - m) / jnp.sqrt(v + EPS) * g + b

    out = jax.nn.relu(bn(conv(x, params["conv1_w"], stride, 1),
                         params["bn1_gamma"], params["bn1_beta"],
                         params["bn1_mean"], params["bn1_var"]))
    out = bn(conv(out, params["conv2_w"], 1, 1),
             params["bn2_gamma"], params["bn2_beta"],
             params["bn2_mean"], params["bn2_var"])
    Cin = x.shape[1]
    Cout = params["conv1_w"].shape[0]
    if stride != 1 or Cin != Cout:
        sc = bn(conv(x, params["conv_sc_w"], stride, 0),
                params["bn_sc_gamma"], params["bn_sc_beta"],
                params["bn_sc_mean"], params["bn_sc_var"])
    else:
        sc = x
    return jax.nn.relu(out + sc)


# ----------------------------------------------------------------------------
def make_params(key, in_channels, out_channels, stride):
    ks = jax.random.split(key, 8)
    p = {
        "conv1_w": 0.1 * jax.random.normal(ks[0], (out_channels, in_channels, 3, 3), jnp.float32),
        "conv2_w": 0.1 * jax.random.normal(ks[1], (out_channels, out_channels, 3, 3), jnp.float32),
        "bn1_gamma": 1.0 + 0.1 * jax.random.normal(ks[2], (out_channels,), jnp.float32),
        "bn1_beta": 0.1 * jax.random.normal(ks[3], (out_channels,), jnp.float32),
        "bn1_mean": 0.05 * jax.random.normal(ks[4], (out_channels,), jnp.float32),
        "bn1_var": jnp.abs(1.0 + 0.1 * jax.random.normal(ks[5], (out_channels,), jnp.float32)),
        "bn2_gamma": jnp.ones((out_channels,), jnp.float32),
        "bn2_beta": jnp.zeros((out_channels,), jnp.float32),
        "bn2_mean": jnp.zeros((out_channels,), jnp.float32),
        "bn2_var": jnp.ones((out_channels,), jnp.float32),
    }
    if stride != 1 or in_channels != out_channels:
        p["conv_sc_w"] = 0.1 * jax.random.normal(ks[6], (out_channels, in_channels, 1, 1), jnp.float32)
        p["bn_sc_gamma"] = jnp.ones((out_channels,), jnp.float32)
        p["bn_sc_beta"] = jnp.zeros((out_channels,), jnp.float32)
        p["bn_sc_mean"] = jnp.zeros((out_channels,), jnp.float32)
        p["bn_sc_var"] = jnp.ones((out_channels,), jnp.float32)
    return p


if __name__ == "__main__":
    key = jax.random.PRNGKey(0)
    fwd = jax.jit(residual_block_forward, static_argnums=2)

    # Config 1: strided block with 1x1 projection shortcut.
    k_x, k_p, key = jax.random.split(key, 3)
    N, Cin, Cout, H, W, stride = 2, 4, 8, 16, 16, 2
    x = jax.random.normal(k_x, (N, Cin, H, W), jnp.float32)
    params = make_params(k_p, Cin, Cout, stride)
    out = jax.block_until_ready(fwd(x, params, stride))
    ref = jax.block_until_ready(reference_forward(x, params, stride))
    assert out.shape == ref.shape == (N, Cout, H // stride, W // stride)
    np.testing.assert_allclose(np.asarray(out), np.asarray(ref),
                               rtol=3e-2, atol=3e-2)

    # Config 2: identity-shortcut block (stride=1, Cin==Cout).
    k_x2, k_p2, key = jax.random.split(key, 3)
    N2, C2, H2, W2, stride2 = 2, 8, 16, 16, 1
    x2 = jax.random.normal(k_x2, (N2, C2, H2, W2), jnp.float32)
    params2 = make_params(k_p2, C2, C2, stride2)
    out2 = jax.block_until_ready(fwd(x2, params2, stride2))
    ref2 = jax.block_until_ready(reference_forward(x2, params2, stride2))
    assert out2.shape == ref2.shape == (N2, C2, H2, W2)
    np.testing.assert_allclose(np.asarray(out2), np.asarray(ref2),
                               rtol=3e-2, atol=3e-2)

    print("KERNEL_OK")
</pallas_src>

<mosaic_0001>
module attributes {stable_mosaic.version = 11 : i64} {
  func.func @_residual_block_kernel(%arg0: i32, %arg1: memref<1x440x4xf32, #tpu.memory_space<vmem>>, %arg2: memref<9x4x128xbf16, #tpu.memory_space<vmem>>, %arg3: memref<4x128xbf16, #tpu.memory_space<vmem>>, %arg4: memref<9x128x128xbf16, #tpu.memory_space<vmem>>, %arg5: memref<3x128xf32, #tpu.memory_space<vmem>>, %arg6: memref<1x80x128xf32, #tpu.memory_space<vmem>>, %arg7: memref<112x128xf32, #tpu.memory_space<vmem>>) attributes {dimension_semantics = [#tpu.dimension_semantics<parallel>], iteration_bounds = array<i64: 2>, scalar_prefetch = 0 : i64, scratch_operands = 1 : i64, tpu.core_type = #tpu.core_type<tc>, window_params = [{transform_indices = @transform_0, window_bounds = array<i64: 1, 440, 4>}, {pipeline_mode = #tpu.pipeline_mode<synchronous>, transform_indices = @transform_1, window_bounds = array<i64: 9, 4, 128>}, {pipeline_mode = #tpu.pipeline_mode<synchronous>, transform_indices = @transform_2, window_bounds = array<i64: 4, 128>}, {pipeline_mode = #tpu.pipeline_mode<synchronous>, transform_indices = @transform_3, window_bounds = array<i64: 9, 128, 128>}, {pipeline_mode = #tpu.pipeline_mode<synchronous>, transform_indices = @transform_4, window_bounds = array<i64: 3, 128>}, {transform_indices = @transform_5, window_bounds = array<i64: 1, 80, 128>}]} {
    %0 = tpu.iota {dimensions = array<i32: 0>} : vector<80x1xi32>
    %c10_i32 = arith.constant 10 : i32
    %c0_i32 = arith.constant 0 : i32
    %1 = arith.cmpi eq, %c10_i32, %c0_i32 : i32
    %c1_i32 = arith.constant 1 : i32
    %2 = arith.select %1, %c1_i32, %c10_i32 : i32
    %3 = vector.broadcast %2 : i32 to vector<80x1xi32>
    %4 = arith.remsi %0, %3 : vector<80x1xi32>
    %c0_i32_0 = arith.constant 0 : i32
    %5 = vector.broadcast %c0_i32_0 : i32 to vector<80x1xi32>
    %6 = arith.cmpi ne, %4, %5 : vector<80x1xi32>
    %c0_i32_1 = arith.constant 0 : i32
    %7 = vector.broadcast %c0_i32_1 : i32 to vector<80x1xi32>
    %8 = arith.cmpi slt, %4, %7 : vector<80x1xi32>
    %c0_i32_2 = arith.constant 0 : i32
    %9 = arith.cmpi slt, %2, %c0_i32_2 : i32
    %10 = vector.broadcast %9 : i1 to vector<80x1xi1>
    %11 = vector.broadcast %10 : vector<80x1xi1> to vector<80x1xi1>
    %12 = arith.xori %8, %11 : vector<80x1xi1>
    %13 = arith.andi %12, %6 : vector<80x1xi1>
    %14 = vector.broadcast %2 : i32 to vector<80x1xi32>
    %15 = arith.addi %4, %14 : vector<80x1xi32>
    %16 = arith.select %13, %15, %4 : vector<80x1xi1>, vector<80x1xi32>
    %c8_i32 = arith.constant 8 : i32
    %17 = vector.broadcast %c8_i32 : i32 to vector<80x1xi32>
    %18 = arith.cmpi slt, %16, %17 : vector<80x1xi32>
    %cst = arith.constant 0.000000e+00 : f32
    %19 = vector.broadcast %cst : f32 to vector<80x128xf32>
    %c0 = arith.constant 0 : index
    %c0_3 = arith.constant 0 : index
    %c0_4 = arith.constant 0 : index
    %20 = vector.load %arg1[%c0, %c0_3, %c0_4] : memref<1x440x4xf32, #tpu.memory_space<vmem>>, vector<1x80x4xf32>
    %21 = vector.shape_cast %20 : vector<1x80x4xf32> to vector<80x4xf32>
    %22 = arith.truncf %21 : vector<80x4xf32> to vector<80x4xbf16>
    %c0_5 = arith.constant 0 : index
    %c0_6 = arith.constant 0 : index
    %c0_7 = arith.constant 0 : index
    %23 = vector.load %arg2[%c0_5, %c0_6, %c0_7] : memref<9x4x128xbf16, #tpu.memory_space<vmem>>, vector<1x4x128xbf16>
    %24 = vector.shape_cast %23 : vector<1x4x128xbf16> to vector<4x128xbf16>
    %cst_8 = arith.constant dense<0.000000e+00> : vector<80x128xf32>
    %25 = tpu.matmul %22, %24, %cst_8 {dimension_numbers = #tpu.dot_dimension_numbers<[1], [0], [0], [1], [0, 0, 1, 1], [], []>} : vector<80x4xbf16>, vector<4x128xbf16>, vector<80x128xf32> -> vector<80x128xf32>
    %26 = arith.addf %19, %25 : vector<80x128xf32>
    %c0_9 = arith.constant 0 : index
    %c110 = arith.constant 110 : index
    %c0_10 = arith.constant 0 : index
    %27 = vector.load %arg1[%c0_9, %c110, %c0_10] : memref<1x440x4xf32, #tpu.memory_space<vmem>>, vector<1x80x4xf32>
    %28 = vector.shape_cast %27 : vector<1x80x4xf32> to vector<80x4xf32>
    %29 = arith.truncf %28 : vector<80x4xf32> to vector<80x4xbf16>
    %c1 = arith.constant 1 : index
    %c0_11 = arith.constant 0 : index
    %c0_12 = arith.constant 0 : index
    %30 = vector.load %arg2[%c1, %c0_11, %c0_12] : memref<9x4x128xbf16, #tpu.memory_space<vmem>>, vector<1x4x128xbf16>
    %31 = vector.shape_cast %30 : vector<1x4x128xbf16> to vector<4x128xbf16>
    %cst_13 = arith.constant dense<0.000000e+00> : vector<80x128xf32>
    %32 = tpu.matmul %29, %31, %cst_13 {dimension_numbers = #tpu.dot_dimension_numbers<[1], [0], [0], [1], [0, 0, 1, 1], [], []>} : vector<80x4xbf16>, vector<4x128xbf16>, vector<80x128xf32> -> vector<80x128xf32>
    %33 = arith.addf %26, %32 : vector<80x128xf32>
    %c0_14 = arith.constant 0 : index
    %c1_15 = arith.constant 1 : index
    %c0_16 = arith.constant 0 : index
    %34 = vector.load %arg1[%c0_14, %c1_15, %c0_16] : memref<1x440x4xf32, #tpu.memory_space<vmem>>, vector<1x80x4xf32>
    %35 = vector.shape_cast %34 : vector<1x80x4xf32> to vector<80x4xf32>
    %36 = arith.truncf %35 : vector<80x4xf32> to vector<80x4xbf16>
    %c2 = arith.constant 2 : index
    %c0_17 = arith.constant 0 : index
    %c0_18 = arith.constant 0 : index
    %37 = vector.load %arg2[%c2, %c0_17, %c0_18] : memref<9x4x128xbf16, #tpu.memory_space<vmem>>, vector<1x4x128xbf16>
    %38 = vector.shape_cast %37 : vector<1x4x128xbf16> to vector<4x128xbf16>
    %cst_19 = arith.constant dense<0.000000e+00> : vector<80x128xf32>
    %39 = tpu.matmul %36, %38, %cst_19 {dimension_numbers = #tpu.dot_dimension_numbers<[1], [0], [0], [1], [0, 0, 1, 1], [], []>} : vector<80x4xbf16>, vector<4x128xbf16>, vector<80x128xf32> -> vector<80x128xf32>
    %40 = arith.addf %33, %39 : vector<80x128xf32>
    %c0_20 = arith.constant 0 : index
    %c220 = arith.constant 220 : index
    %c0_21 = arith.constant 0 : index
    %41 = vector.load %arg1[%c0_20, %c220, %c0_21] : memref<1x440x4xf32, #tpu.memory_space<vmem>>, vector<1x80x4xf32>
    %42 = vector.shape_cast %41 : vector<1x80x4xf32> to vector<80x4xf32>
    %43 = arith.truncf %42 : vector<80x4xf32> to vector<80x4xbf16>
    %c3 = arith.constant 3 : index
    %c0_22 = arith.constant 0 : index
    %c0_23 = arith.constant 0 : index
    %44 = vector.load %arg2[%c3, %c0_22, %c0_23] : memref<9x4x128xbf16, #tpu.memory_space<vmem>>, vector<1x4x128xbf16>
    %45 = vector.shape_cast %44 : vector<1x4x128xbf16> to vector<4x128xbf16>
    %cst_24 = arith.constant dense<0.000000e+00> : vector<80x128xf32>
    %46 = tpu.matmul %43, %45, %cst_24 {dimension_numbers = #tpu.dot_dimension_numbers<[1], [0], [0], [1], [0, 0, 1, 1], [], []>} : vector<80x4xbf16>, vector<4x128xbf16>, vector<80x128xf32> -> vector<80x128xf32>
    %47 = arith.addf %40, %46 : vector<80x128xf32>
    %c0_25 = arith.constant 0 : index
    %c330 = arith.constant 330 : index
    %c0_26 = arith.constant 0 : index
    %48 = vector.load %arg1[%c0_25, %c330, %c0_26] : memref<1x440x4xf32, #tpu.memory_space<vmem>>, vector<1x80x4xf32>
    %49 = vector.shape_cast %48 : vector<1x80x4xf32> to vector<80x4xf32>
    %50 = arith.truncf %49 : vector<80x4xf32> to vector<80x4xbf16>
    %c4 = arith.constant 4 : index
    %c0_27 = arith.constant 0 : index
    %c0_28 = arith.constant 0 : index
    %51 = vector.load %arg2[%c4, %c0_27, %c0_28] : memref<9x4x128xbf16, #tpu.memory_space<vmem>>, vector<1x4x128xbf16>
    %52 = vector.shape_cast %51 : vector<1x4x128xbf16> to vector<4x128xbf16>
    %cst_29 = arith.constant dense<0.000000e+00> : vector<80x128xf32>
    %53 = tpu.matmul %50, %52, %cst_29 {dimension_numbers = #tpu.dot_dimension_numbers<[1], [0], [0], [1], [0, 0, 1, 1], [], []>} : vector<80x4xbf16>, vector<4x128xbf16>, vector<80x128xf32> -> vector<80x128xf32>
    %54 = arith.addf %47, %53 : vector<80x128xf32>
    %c0_30 = arith.constant 0 : index
    %c221 = arith.constant 221 : index
    %c0_31 = arith.constant 0 : index
    %55 = vector.load %arg1[%c0_30, %c221, %c0_31] : memref<1x440x4xf32, #tpu.memory_space<vmem>>, vector<1x80x4xf32>
    %56 = vector.shape_cast %55 : vector<1x80x4xf32> to vector<80x4xf32>
    %57 = arith.truncf %56 : vector<80x4xf32> to vector<80x4xbf16>
    %c5 = arith.constant 5 : index
    %c0_32 = arith.constant 0 : index
    %c0_33 = arith.constant 0 : index
    %58 = vector.load %arg2[%c5, %c0_32, %c0_33] : memref<9x4x128xbf16, #tpu.memory_space<vmem>>, vector<1x4x128xbf16>
    %59 = vector.shape_cast %58 : vector<1x4x128xbf16> to vector<4x128xbf16>
    %cst_34 = arith.constant dense<0.000000e+00> : vector<80x128xf32>
    %60 = tpu.matmul %57, %59, %cst_34 {dimension_numbers = #tpu.dot_dimension_numbers<[1], [0], [0], [1], [0, 0, 1, 1], [], []>} : vector<80x4xbf16>, vector<4x128xbf16>, vector<80x128xf32> -> vector<80x128xf32>
    %61 = arith.addf %54, %60 : vector<80x128xf32>
    %c0_35 = arith.constant 0 : index
    %c10 = arith.constant 10 : index
    %c0_36 = arith.constant 0 : index
    %62 = vector.load %arg1[%c0_35, %c10, %c0_36] : memref<1x440x4xf32, #tpu.memory_space<vmem>>, vector<1x80x4xf32>
    %63 = vector.shape_cast %62 : vector<1x80x4xf32> to vector<80x4xf32>
    %64 = arith.truncf %63 : vector<80x4xf32> to vector<80x4xbf16>
    %c6 = arith.constant 6 : index
    %c0_37 = arith.constant 0 : index
    %c0_38 = arith.constant 0 : index
    %65 = vector.load %arg2[%c6, %c0_37, %c0_38] : memref<9x4x128xbf16, #tpu.memory_space<vmem>>, vector<1x4x128xbf16>
    %66 = vector.shape_cast %65 : vector<1x4x128xbf16> to vector<4x128xbf16>
    %cst_39 = arith.constant dense<0.000000e+00> : vector<80x128xf32>
    %67 = tpu.matmul %64, %66, %cst_39 {dimension_numbers = #tpu.dot_dimension_numbers<[1], [0], [0], [1], [0, 0, 1, 1], [], []>} : vector<80x4xbf16>, vector<4x128xbf16>, vector<80x128xf32> -> vector<80x128xf32>
    %68 = arith.addf %61, %67 : vector<80x128xf32>
    %c0_40 = arith.constant 0 : index
    %c120 = arith.constant 120 : index
    %c0_41 = arith.constant 0 : index
    %69 = vector.load %arg1[%c0_40, %c120, %c0_41] : memref<1x440x4xf32, #tpu.memory_space<vmem>>, vector<1x80x4xf32>
    %70 = vector.shape_cast %69 : vector<1x80x4xf32> to vector<80x4xf32>
    %71 = arith.truncf %70 : vector<80x4xf32> to vector<80x4xbf16>
    %c7 = arith.constant 7 : index
    %c0_42 = arith.constant 0 : index
    %c0_43 = arith.constant 0 : index
    %72 = vector.load %arg2[%c7, %c0_42, %c0_43] : memref<9x4x128xbf16, #tpu.memory_space<vmem>>, vector<1x4x128xbf16>
    %73 = vector.shape_cast %72 : vector<1x4x128xbf16> to vector<4x128xbf16>
    %cst_44 = arith.constant dense<0.000000e+00> : vector<80x128xf32>
    %74 = tpu.matmul %71, %73, %cst_44 {dimension_numbers = #tpu.dot_dimension_numbers<[1], [0], [0], [1], [0, 0, 1, 1], [], []>} : vector<80x4xbf16>, vector<4x128xbf16>, vector<80x128xf32> -> vector<80x128xf32>
    %75 = arith.addf %68, %74 : vector<80x128xf32>
    %c0_45 = arith.constant 0 : index
    %c11 = arith.constant 11 : index
    %c0_46 = arith.constant 0 : index
    %76 = vector.load %arg1[%c0_45, %c11, %c0_46] : memref<1x440x4xf32, #tpu.memory_space<vmem>>, vector<1x80x4xf32>
    %77 = vector.shape_cast %76 : vector<1x80x4xf32> to vector<80x4xf32>
    %78 = arith.truncf %77 : vector<80x4xf32> to vector<80x4xbf16>
    %c8 = arith.constant 8 : index
    %c0_47 = arith.constant 0 : index
    %c0_48 = arith.constant 0 : index
    %79 = vector.load %arg2[%c8, %c0_47, %c0_48] : memref<9x4x128xbf16, #tpu.memory_space<vmem>>, vector<1x4x128xbf16>
    %80 = vector.shape_cast %79 : vector<1x4x128xbf16> to vector<4x128xbf16>
    %cst_49 = arith.constant dense<0.000000e+00> : vector<80x128xf32>
    %81 = tpu.matmul %78, %80, %cst_49 {dimension_numbers = #tpu.dot_dimension_numbers<[1], [0], [0], [1], [0, 0, 1, 1], [], []>} : vector<80x4xbf16>, vector<4x128xbf16>, vector<80x128xf32> -> vector<80x128xf32>
    %82 = arith.addf %75, %81 : vector<80x128xf32>
    %c0_50 = arith.constant 0 : index
    %c0_51 = arith.constant 0 : index
    %83 = vector.load %arg5[%c0_50, %c0_51] : memref<3x128xf32, #tpu.memory_space<vmem>>, vector<1x128xf32>
    %84 = vector.broadcast %83 : vector<1x128xf32> to vector<80x128xf32>
    %85 = arith.addf %82, %84 : vector<80x128xf32>
    %cst_52 = arith.constant 0.000000e+00 : f32
    %86 = vector.broadcast %cst_52 : f32 to vector<80x128xf32>
    %87 = arith.maximumf %85, %86 : vector<80x128xf32>
    %cst_53 = arith.constant 0.000000e+00 : f32
    %88 = vector.shape_cast %18 : vector<80x1xi1> to vector<80x1xi1>
    %89 = vector.broadcast %88 : vector<80x1xi1> to vector<80x128xi1>
    %90 = vector.broadcast %cst_53 : f32 to vector<80x128xf32>
    %91 = arith.select %89, %87, %90 : vector<80x128xi1>, vector<80x128xf32>
    %cst_54 = arith.constant 0.000000e+00 : f32
    %92 = vector.broadcast %cst_54 : f32 to vector<112x128xf32>
    %c0_55 = arith.constant 0 : index
    %c0_56 = arith.constant 0 : index
    %93 = vector.load %arg7[%c0_55, %c0_56] : memref<112x128xf32, #tpu.memory_space<vmem>>, vector<112x128xf32>
    tpu.vector_store %arg7[%c0_55, %c0_56], %92 {strides = array<i32>} : memref<112x128xf32, #tpu.memory_space<vmem>>, vector<112x128xf32>,
    %c16 = arith.constant 16 : index
    %c0_57 = arith.constant 0 : index
    %94 = vector.load %arg7[%c16, %c0_57] : memref<112x128xf32, #tpu.memory_space<vmem>>, vector<80x128xf32>
    tpu.vector_store %arg7[%c16, %c0_57], %91 {strides = array<i32>} : memref<112x128xf32, #tpu.memory_space<vmem>>, vector<80x128xf32>,
    %c0_58 = arith.constant 0 : index
    %c330_59 = arith.constant 330 : index
    %c0_60 = arith.constant 0 : index
    %95 = vector.load %arg1[%c0_58, %c330_59, %c0_60] : memref<1x440x4xf32, #tpu.memory_space<vmem>>, vector<1x80x4xf32>
    %96 = vector.shape_cast %95 : vector<1x80x4xf32> to vector<80x4xf32>
    %97 = arith.truncf %96 : vector<80x4xf32> to vector<80x4xbf16>
    %c0_61 = arith.constant 0 : index
    %c0_62 = arith.constant 0 : index
    %98 = vector.load %arg3[%c0_61, %c0_62] : memref<4x128xbf16, #tpu.memory_space<vmem>>, vector<4x128xbf16>
    %cst_63 = arith.constant dense<0.000000e+00> : vector<80x128xf32>
    %99 = tpu.matmul %97, %98, %cst_63 {dimension_numbers = #tpu.dot_dimension_numbers<[1], [0], [0], [1], [0, 0, 1, 1], [], []>} : vector<80x4xbf16>, vector<4x128xbf16>, vector<80x128xf32> -> vector<80x128xf32>
    %c1_64 = arith.constant 1 : index
    %c0_65 = arith.constant 0 : index
    %100 = vector.load %arg5[%c1_64, %c0_65] : memref<3x128xf32, #tpu.memory_space<vmem>>, vector<1x128xf32>
    %101 = vector.broadcast %100 : vector<1x128xf32> to vector<80x128xf32>
    %102 = arith.addf %99, %101 : vector<80x128xf32>
    %cst_66 = arith.constant 0.000000e+00 : f32
    %103 = vector.broadcast %cst_66 : f32 to vector<80x128xf32>
    %c5_67 = arith.constant 5 : index
    %c0_68 = arith.constant 0 : index
    %104 = vector.load %arg7[%c5_67, %c0_68] : memref<112x128xf32, #tpu.memory_space<vmem>>, vector<80x128xf32>
    %105 = arith.truncf %104 : vector<80x128xf32> to vector<80x128xbf16>
    %c0_69 = arith.constant 0 : index
    %c0_70 = arith.constant 0 : index
    %c0_71 = arith.constant 0 : index
    %106 = vector.load %arg4[%c0_69, %c0_70, %c0_71] : memref<9x128x128xbf16, #tpu.memory_space<vmem>>, vector<1x128x128xbf16>
    %107 = vector.shape_cast %106 : vector<1x128x128xbf16> to vector<128x128xbf16>
    %cst_72 = arith.constant dense<0.000000e+00> : vector<80x128xf32>
    %108 = tpu.matmul %105, %107, %cst_72 {dimension_numbers = #tpu.dot_dimension_numbers<[1], [0], [0], [1], [0, 0, 1, 1], [], []>} : vector<80x128xbf16>, vector<128x128xbf16>, vector<80x128xf32> -> vector<80x128xf32>
    %109 = arith.addf %103, %108 : vector<80x128xf32>
    %c6_73 = arith.constant 6 : index
    %c0_74 = arith.constant 0 : index
    %110 = vector.load %arg7[%c6_73, %c0_74] : memref<112x128xf32, #tpu.memory_space<vmem>>, vector<80x128xf32>
    %111 = arith.truncf %110 : vector<80x128xf32> to vector<80x128xbf16>
    %c1_75 = arith.constant 1 : index
    %c0_76 = arith.constant 0 : index
    %c0_77 = arith.constant 0 : index
    %112 = vector.load %arg4[%c1_75, %c0_76, %c0_77] : memref<9x128x128xbf16, #tpu.memory_space<vmem>>, vector<1x128x128xbf16>
    %113 = vector.shape_cast %112 : vector<1x128x128xbf16> to vector<128x128xbf16>
    %cst_78 = arith.constant dense<0.000000e+00> : vector<80x128xf32>
    %114 = tpu.matmul %111, %113, %cst_78 {dimension_numbers = #tpu.dot_dimension_numbers<[1], [0], [0], [1], [0, 0, 1, 1], [], []>} : vector<80x128xbf16>, vector<128x128xbf16>, vector<80x128xf32> -> vector<80x128xf32>
    %115 = arith.addf %109, %114 : vector<80x128xf32>
    %c7_79 = arith.constant 7 : index
    %c0_80 = arith.constant 0 : index
    %116 = vector.load %arg7[%c7_79, %c0_80] : memref<112x128xf32, #tpu.memory_space<vmem>>, vector<80x128xf32>
    %117 = arith.truncf %116 : vector<80x128xf32> to vector<80x128xbf16>
    %c2_81 = arith.constant 2 : index
    %c0_82 = arith.constant 0 : index
    %c0_83 = arith.constant 0 : index
    %118 = vector.load %arg4[%c2_81, %c0_82, %c0_83] : memref<9x128x128xbf16, #tpu.memory_space<vmem>>, vector<1x128x128xbf16>
    %119 = vector.shape_cast %118 : vector<1x128x128xbf16> to vector<128x128xbf16>
    %cst_84 = arith.constant dense<0.000000e+00> : vector<80x128xf32>
    %120 = tpu.matmul %117, %119, %cst_84 {dimension_numbers = #tpu.dot_dimension_numbers<[1], [0], [0], [1], [0, 0, 1, 1], [], []>} : vector<80x128xbf16>, vector<128x128xbf16>, vector<80x128xf32> -> vector<80x128xf32>
    %121 = arith.addf %115, %120 : vector<80x128xf32>
    %c15 = arith.constant 15 : index
    %c0_85 = arith.constant 0 : index
    %122 = vector.load %arg7[%c15, %c0_85] : memref<112x128xf32, #tpu.memory_space<vmem>>, vector<80x128xf32>
    %123 = arith.truncf %122 : vector<80x128xf32> to vector<80x128xbf16>
    %c3_86 = arith.constant 3 : index
    %c0_87 = arith.constant 0 : index
    %c0_88 = arith.constant 0 : index
    %124 = vector.load %arg4[%c3_86, %c0_87, %c0_88] : memref<9x128x128xbf16, #tpu.memory_space<vmem>>, vector<1x128x128xbf16>
    %125 = vector.shape_cast %124 : vector<1x128x128xbf16> to vector<128x128xbf16>
    %cst_89 = arith.constant dense<0.000000e+00> : vector<80x128xf32>
    %126 = tpu.matmul %123, %125, %cst_89 {dimension_numbers = #tpu.dot_dimension_numbers<[1], [0], [0], [1], [0, 0, 1, 1], [], []>} : vector<80x128xbf16>, vector<128x128xbf16>, vector<80x128xf32> -> vector<80x128xf32>
    %127 = arith.addf %121, %126 : vector<80x128xf32>
    %c16_90 = arith.constant 16 : index
    %c0_91 = arith.constant 0 : index
    %128 = vector.load %arg7[%c16_90, %c0_91] : memref<112x128xf32, #tpu.memory_space<vmem>>, vector<80x128xf32>
    %129 = arith.truncf %128 : vector<80x128xf32> to vector<80x128xbf16>
    %c4_92 = arith.constant 4 : index
    %c0_93 = arith.constant 0 : index
    %c0_94 = arith.constant 0 : index
    %130 = vector.load %arg4[%c4_92, %c0_93, %c0_94] : memref<9x128x128xbf16, #tpu.memory_space<vmem>>, vector<1x128x128xbf16>
    %131 = vector.shape_cast %130 : vector<1x128x128xbf16> to vector<128x128xbf16>
    %cst_95 = arith.constant dense<0.000000e+00> : vector<80x128xf32>
    %132 = tpu.matmul %129, %131, %cst_95 {dimension_numbers = #tpu.dot_dimension_numbers<[1], [0], [0], [1], [0, 0, 1, 1], [], []>} : vector<80x128xbf16>, vector<128x128xbf16>, vector<80x128xf32> -> vector<80x128xf32>
    %133 = arith.addf %127, %132 : vector<80x128xf32>
    %c17 = arith.constant 17 : index
    %c0_96 = arith.constant 0 : index
    %134 = vector.load %arg7[%c17, %c0_96] : memref<112x128xf32, #tpu.memory_space<vmem>>, vector<80x128xf32>
    %135 = arith.truncf %134 : vector<80x128xf32> to vector<80x128xbf16>
    %c5_97 = arith.constant 5 : index
    %c0_98 = arith.constant 0 : index
    %c0_99 = arith.constant 0 : index
    %136 = vector.load %arg4[%c5_97, %c0_98, %c0_99] : memref<9x128x128xbf16, #tpu.memory_space<vmem>>, vector<1x128x128xbf16>
    %137 = vector.shape_cast %136 : vector<1x128x128xbf16> to vector<128x128xbf16>
    %cst_100 = arith.constant dense<0.000000e+00> : vector<80x128xf32>
    %138 = tpu.matmul %135, %137, %cst_100 {dimension_numbers = #tpu.dot_dimension_numbers<[1], [0], [0], [1], [0, 0, 1, 1], [], []>} : vector<80x128xbf16>, vector<128x128xbf16>, vector<80x128xf32> -> vector<80x128xf32>
    %139 = arith.addf %133, %138 : vector<80x128xf32>
    %c25 = arith.constant 25 : index
    %c0_101 = arith.constant 0 : index
    %140 = vector.load %arg7[%c25, %c0_101] : memref<112x128xf32, #tpu.memory_space<vmem>>, vector<80x128xf32>
    %141 = arith.truncf %140 : vector<80x128xf32> to vector<80x128xbf16>
    %c6_102 = arith.constant 6 : index
    %c0_103 = arith.constant 0 : index
    %c0_104 = arith.constant 0 : index
    %142 = vector.load %arg4[%c6_102, %c0_103, %c0_104] : memref<9x128x128xbf16, #tpu.memory_space<vmem>>, vector<1x128x128xbf16>
    %143 = vector.shape_cast %142 : vector<1x128x128xbf16> to vector<128x128xbf16>
    %cst_105 = arith.constant dense<0.000000e+00> : vector<80x128xf32>
    %144 = tpu.matmul %141, %143, %cst_105 {dimension_numbers = #tpu.dot_dimension_numbers<[1], [0], [0], [1], [0, 0, 1, 1], [], []>} : vector<80x128xbf16>, vector<128x128xbf16>, vector<80x128xf32> -> vector<80x128xf32>
    %145 = arith.addf %139, %144 : vector<80x128xf32>
    %c26 = arith.constant 26 : index
    %c0_106 = arith.constant 0 : index
    %146 = vector.load %arg7[%c26, %c0_106] : memref<112x128xf32, #tpu.memory_space<vmem>>, vector<80x128xf32>
    %147 = arith.truncf %146 : vector<80x128xf32> to vector<80x128xbf16>
    %c7_107 = arith.constant 7 : index
    %c0_108 = arith.constant 0 : index
    %c0_109 = arith.constant 0 : index
    %148 = vector.load %arg4[%c7_107, %c0_108, %c0_109] : memref<9x128x128xbf16, #tpu.memory_space<vmem>>, vector<1x128x128xbf16>
    %149 = vector.shape_cast %148 : vector<1x128x128xbf16> to vector<128x128xbf16>
    %cst_110 = arith.constant dense<0.000000e+00> : vector<80x128xf32>
    %150 = tpu.matmul %147, %149, %cst_110 {dimension_numbers = #tpu.dot_dimension_numbers<[1], [0], [0], [1], [0, 0, 1, 1], [], []>} : vector<80x128xbf16>, vector<128x128xbf16>, vector<80x128xf32> -> vector<80x128xf32>
    %151 = arith.addf %145, %150 : vector<80x128xf32>
    %c27 = arith.constant 27 : index
    %c0_111 = arith.constant 0 : index
    %152 = vector.load %arg7[%c27, %c0_111] : memref<112x128xf32, #tpu.memory_space<vmem>>, vector<80x128xf32>
    %153 = arith.truncf %152 : vector<80x128xf32> to vector<80x128xbf16>
    %c8_112 = arith.constant 8 : index
    %c0_113 = arith.constant 0 : index
    %c0_114 = arith.constant 0 : index
    %154 = vector.load %arg4[%c8_112, %c0_113, %c0_114] : memref<9x128x128xbf16, #tpu.memory_space<vmem>>, vector<1x128x128xbf16>
    %155 = vector.shape_cast %154 : vector<1x128x128xbf16> to vector<128x128xbf16>
    %cst_115 = arith.constant dense<0.000000e+00> : vector<80x128xf32>
    %156 = tpu.matmul %153, %155, %cst_115 {dimension_numbers = #tpu.dot_dimension_numbers<[1], [0], [0], [1], [0, 0, 1, 1], [], []>} : vector<80x128xbf16>, vector<128x128xbf16>, vector<80x128xf32> -> vector<80x128xf32>
    %157 = arith.addf %151, %156 : vector<80x128xf32>
    %c2_116 = arith.constant 2 : index
    %c0_117 = arith.constant 0 : index
    %158 = vector.load %arg5[%c2_116, %c0_117] : memref<3x128xf32, #tpu.memory_space<vmem>>, vector<1x128xf32>
    %159 = vector.broadcast %158 : vector<1x128xf32> to vector<80x128xf32>
    %160 = arith.addf %157, %159 : vector<80x128xf32>
    %161 = arith.addf %160, %102 : vector<80x128xf32>
    %cst_118 = arith.constant 0.000000e+00 : f32
    %162 = vector.broadcast %cst_118 : f32 to vector<80x128xf32>
    %163 = arith.maximumf %161, %162 : vector<80x128xf32>
    %c0_119 = arith.constant 0 : index
    %c0_120 = arith.constant 0 : index
    %c0_121 = arith.constant 0 : index
    %164 = vector.load %arg6[%c0_119, %c0_120, %c0_121] : memref<1x80x128xf32, #tpu.memory_space<vmem>>, vector<1x80x128xf32>
    %165 = vector.shape_cast %164 : vector<1x80x128xf32> to vector<80x128xf32>
    %166 = vector.shape_cast %163 : vector<80x128xf32> to vector<1x80x128xf32>
    tpu.vector_store %arg6[%c0_119, %c0_120, %c0_121], %166 {strides = array<i32>} : memref<1x80x128xf32, #tpu.memory_space<vmem>>, vector<1x80x128xf32>,
    return
  }
  func.func @transform_0(%arg0: i32) -> (i32, i32, i32) {
    %c0_i32 = arith.constant 0 : i32
    %c0_i32_0 = arith.constant 0 : i32
    %c0_i32_1 = arith.constant 0 : i32
    return %arg0, %c0_i32, %c0_i32_0 : i32, i32, i32
  }
  func.func @transform_1(%arg0: i32) -> (i32, i32, i32) {
    %c0_i32 = arith.constant 0 : i32
    %c0_i32_0 = arith.constant 0 : i32
    %c0_i32_1 = arith.constant 0 : i32
    %c0_i32_2 = arith.constant 0 : i32
    return %c0_i32, %c0_i32_0, %c0_i32_1 : i32, i32, i32
  }
  func.func @transform_2(%arg0: i32) -> (i32, i32) {
    %c0_i32 = arith.constant 0 : i32
    %c0_i32_0 = arith.constant 0 : i32
    %c0_i32_1 = arith.constant 0 : i32
    return %c0_i32, %c0_i32_0 : i32, i32
  }
  func.func @transform_3(%arg0: i32) -> (i32, i32, i32) {
    %c0_i32 = arith.constant 0 : i32
    %c0_i32_0 = arith.constant 0 : i32
    %c0_i32_1 = arith.constant 0 : i32
    %c0_i32_2 = arith.constant 0 : i32
    return %c0_i32, %c0_i32_0, %c0_i32_1 : i32, i32, i32
  }
  func.func @transform_4(%arg0: i32) -> (i32, i32) {
    %c0_i32 = arith.constant 0 : i32
    %c0_i32_0 = arith.constant 0 : i32
    %c0_i32_1 = arith.constant 0 : i32
    return %c0_i32, %c0_i32_0 : i32, i32
  }
  func.func @transform_5(%arg0: i32) -> (i32, i32, i32) {
    %c0_i32 = arith.constant 0 : i32
    %c0_i32_0 = arith.constant 0 : i32
    %c0_i32_1 = arith.constant 0 : i32
    return %arg0, %c0_i32, %c0_i32_0 : i32, i32, i32
  }
}

</mosaic_0001>

<llo_original>
// kernel: residual_block_forward.1
$region0: #{residual_block_forward.1}
  #allocation0 [shape = 'u32[]', space=smem, size = 0x4, offset = 0x4, fixed_abs, tag = 'smem constant byte address 0x4 - core index']
  #allocation1 [shape = 'u32[144,128]{1,0:T(1,128)}', space=vmem, size = 0x12000, scoped, tag = 'internal scratch']
  #allocation2 [shape = 'f32[112,128]{1,0:T(8,128)}', space=vmem, size = 0xe000, scoped, tag = 'scratch operand']
  %s0 = inlined_call_operand.vmem [shape: f32[2,440,4], index: 0, kind: input, shape index: {}]
  %s1 = inlined_call_operand.vmem [shape: bf16[9,4,128], index: 1, kind: input, shape index: {}]
  %s2 = inlined_call_operand.vmem [shape: bf16[4,128], index: 2, kind: input, shape index: {}]
  %s3 = inlined_call_operand.vmem [shape: bf16[9,128,128], index: 3, kind: input, shape index: {}]
  %s4 = inlined_call_operand.vmem [shape: f32[3,128], index: 4, kind: input, shape index: {}]
  %s5 = inlined_call_operand.vmem [shape: f32[2,80,128], index: 5, kind: output, shape index: {}]
  %s6 = sld [smem:[#allocation0]]
  $region53: #{residual_block_forward.1} parent=0
    _
  %s8 = ssub.s32 1, %s6
  %s9 = scalar_select 0, %s8, %s6
  loop: start=0, step=1, limit=4
  $region2: #{residual_block_forward.1} parent=0 // loop_pre_header
    _
  $region3: #{residual_block_forward.1} parent=0 // loop_header
    %s11 = sphi 0, %s15
    %p12 = scmp.ge.s32.totalorder %s11, 4
    %s21 = sphi 0, %s23
    %s24 = sphi 0, %s21
    %s25 = sphi 0, %s24
    %s41 = sphi 0, %s25
    %s45 = sphi 0, %s45
    %s47 = sphi 0, %s45
    %s48 = sphi 0, %s47
    %s62 = sphi 0, %s48
    %s66 = sphi 0, %s66
    %s68 = sphi 0, %s66
    %s69 = sphi 0, %s68
    %s83 = sphi 0, %s69
    %s87 = sphi 0, %s87
    %s89 = sphi 0, %s87
    %s90 = sphi 0, %s89
    %s104 = sphi 0, %s90
    %s108 = sphi 0, %s108
    %s110 = sphi 0, %s108
    %s111 = sphi 0, %s110
    %s125 = sphi 0, %s111
    %s131 = sphi 0, %s133
    %s134 = sphi 0, %s131
    %s135 = sphi 0, %s134
    %s151 = sphi 0, %s135
  $region4: #{residual_block_forward.1} parent=0 // loop_header_branch
    %14 = sbr.rel (%p12) target = $region8
  $region5: #{residual_block_forward.1} parent=0 // loop_body
    %s16 = ssub.s32 %s11, 1
    %s17 = ssub.s32 %s11, 2
    %s18 = sadd.s32 %s11, 1
    %s19 = ssub.s32 %s11, %s18
    %p20 = scmp.eq.s32.totalorder %s19, 0
    %s22 = sadd.s32 %s21, 1
    %s23 = scalar_select %p20, %s21, %s22
    %p26 = pneg %p20
    %p27 = scmp.eq.s32.totalorder %s11, 1
    %p28 = por %p26, %p27
    %p29 = scmp.ne.s32.totalorder %s21, %s24
    %p30 = scmp.eq.s32.totalorder %s11, 0
    %p31 = por %p29, %p30
    %p32 = scmp.ne.s32.totalorder %s21, %s24
    %p33 = scmp.eq.s32.totalorder %s16, 1
    %p34 = por %p32, %p33
    %p35 = scmp.ne.s32.totalorder %s24, %s25
    %p36 = scmp.eq.s32.totalorder %s16, 0
    %p37 = por %p35, %p36
    %p38 = scmp.ne.s32.totalorder %s24, %s25
    %p39 = scmp.eq.s32.totalorder %s17, 1
    %p40 = por %p38, %p39
    %p42 = scmp.ne.s32.totalorder %s25, %s41
    %p43 = scmp.eq.s32.totalorder %s17, 0
    %p44 = por %p42, %p43
    %s46 = sadd.s32 %s45, 1
    %p49 = scmp.eq.s32.totalorder %s11, 1
    %p50 = scmp.ne.s32.totalorder %s45, %s47
    %p51 = scmp.eq.s32.totalorder %s11, 0
    %p52 = por %p50, %p51
    %p53 = scmp.ne.s32.totalorder %s45, %s47
    %p54 = scmp.eq.s32.totalorder %s16, 1
    %p55 = por %p53, %p54
    %p56 = scmp.ne.s32.totalorder %s47, %s48
    %p57 = scmp.eq.s32.totalorder %s16, 0
    %p58 = por %p56, %p57
    %p59 = scmp.ne.s32.totalorder %s47, %s48
    %p60 = scmp.eq.s32.totalorder %s17, 1
    %p61 = por %p59, %p60
    %p63 = scmp.ne.s32.totalorder %s48, %s62
    %p64 = scmp.eq.s32.totalorder %s17, 0
    %p65 = por %p63, %p64
    %s67 = sadd.s32 %s66, 1
    %p70 = scmp.eq.s32.totalorder %s11, 1
    %p71 = scmp.ne.s32.totalorder %s66, %s68
    %p72 = scmp.eq.s32.totalorder %s11, 0
    %p73 = por %p71, %p72
    %p74 = scmp.ne.s32.totalorder %s66, %s68
    %p75 = scmp.eq.s32.totalorder %s16, 1
    %p76 = por %p74, %p75
    %p77 = scmp.ne.s32.totalorder %s68, %s69
    %p78 = scmp.eq.s32.totalorder %s16, 0
    %p79 = por %p77, %p78
    %p80 = scmp.ne.s32.totalorder %s68, %s69
    %p81 = scmp.eq.s32.totalorder %s17, 1
    %p82 = por %p80, %p81
    %p84 = scmp.ne.s32.totalorder %s69, %s83
    %p85 = scmp.eq.s32.totalorder %s17, 0
    %p86 = por %p84, %p85
    %s88 = sadd.s32 %s87, 1
    %p91 = scmp.eq.s32.totalorder %s11, 1
    %p92 = scmp.ne.s32.totalorder %s87, %s89
    %p93 = scmp.eq.s32.totalorder %s11, 0
    %p94 = por %p92, %p93
    %p95 = scmp.ne.s32.totalorder %s87, %s89
    %p96 = scmp.eq.s32.totalorder %s16, 1
    %p97 = por %p95, %p96
    %p98 = scmp.ne.s32.totalorder %s89, %s90
    %p99 = scmp.eq.s32.totalorder %s16, 0
    %p100 = por %p98, %p99
    %p101 = scmp.ne.s32.totalorder %s89, %s90
    %p102 = scmp.eq.s32.totalorder %s17, 1
    %p103 = por %p101, %p102
    %p105 = scmp.ne.s32.totalorder %s90, %s104
    %p106 = scmp.eq.s32.totalorder %s17, 0
    %p107 = por %p105, %p106
    %s109 = sadd.s32 %s108, 1
    %p112 = scmp.eq.s32.totalorder %s11, 1
    %p113 = scmp.ne.s32.totalorder %s108, %s110
    %p114 = scmp.eq.s32.totalorder %s11, 0
    %p115 = por %p113, %p114
    %p116 = scmp.ne.s32.totalorder %s108, %s110
    %p117 = scmp.eq.s32.totalorder %s16, 1
    %p118 = por %p116, %p117
    %p119 = scmp.ne.s32.totalorder %s110, %s111
    %p120 = scmp.eq.s32.totalorder %s16, 0
    %p121 = por %p119, %p120
    %p122 = scmp.ne.s32.totalorder %s110, %s111
    %p123 = scmp.eq.s32.totalorder %s17, 1
    %p124 = por %p122, %p123
    %p126 = scmp.ne.s32.totalorder %s111, %s125
    %p127 = scmp.eq.s32.totalorder %s17, 0
    %p128 = por %p126, %p127
    %s129 = ssub.s32 %s11, %s18
    %p130 = scmp.eq.s32.totalorder %s129, 0
    %s132 = sadd.s32 %s131, 1
    %s133 = scalar_select %p130, %s131, %s132
    %p136 = pneg %p130
    %p137 = scmp.eq.s32.totalorder %s11, 1
    %p138 = por %p136, %p137
    %p139 = scmp.ne.s32.totalorder %s131, %s134
    %p140 = scmp.eq.s32.totalorder %s11, 0
    %p141 = por %p139, %p140
    %p142 = scmp.ne.s32.totalorder %s131, %s134
    %p143 = scmp.eq.s32.totalorder %s16, 1
    %p144 = por %p142, %p143
    %p145 = scmp.ne.s32.totalorder %s134, %s135
    %p146 = scmp.eq.s32.totalorder %s16, 0
    %p147 = por %p145, %p146
    %p148 = scmp.ne.s32.totalorder %s134, %s135
    %p149 = scmp.eq.s32.totalorder %s17, 1
    %p150 = por %p148, %p149
    %p152 = scmp.ne.s32.totalorder %s135, %s151
    %p153 = scmp.eq.s32.totalorder %s17, 0
    %p154 = por %p152, %p153
    %p155 = scmp.le.s32.totalorder 1, %s11
    %p156 = scmp.lt.s32.totalorder %s11, 3
    %p157 = pnand %p155, %p156
    %p158 = pneg %p157
    // Predicated region
    $region9: #{residual_block_forward.1} parent=5 // pred_check
      _
    $region10: #{residual_block_forward.1} parent=5 // pred_check_branch
      %160 = sbr.rel (%p157) target = $region12
    $region11: #{residual_block_forward.1} parent=5 // pred_region
      %s161 = ssub.s32 %s11, 1
      // Predicated region
      $region13: #{residual_block_forward.1} parent=11 // pred_check
        %p162 = pneg %p58
      $region14: #{residual_block_forward.1} parent=11 // pred_check_branch
        %164 = sbr.rel (%p162) target = $region16
      $region15: #{residual_block_forward.1} parent=11 // pred_region
        _
      $region16: #{residual_block_forward.1} parent=11 // pred_fallthru
        _
      // Predicated region
      $region17: #{residual_block_forward.1} parent=11 // pred_check
        %p165 = pneg %p79
      $region18: #{residual_block_forward.1} parent=11 // pred_check_branch
        %167 = sbr.rel (%p165) target = $region20
      $region19: #{residual_block_forward.1} parent=11 // pred_region
        _
      $region20: #{residual_block_forward.1} parent=11 // pred_fallthru
        _
      // Predicated region
      $region21: #{residual_block_forward.1} parent=11 // pred_check
        %p168 = pneg %p100
      $region22: #{residual_block_forward.1} parent=11 // pred_check_branch
        %170 = sbr.rel (%p168) target = $region24
      $region23: #{residual_block_forward.1} parent=11 // pred_region
        _
      $region24: #{residual_block_forward.1} parent=11 // pred_fallthru
        _
      // Predicated region
      $region25: #{residual_block_forward.1} parent=11 // pred_check
        %p171 = pneg %p121
      $region26: #{residual_block_forward.1} parent=11 // pred_check_branch
        %173 = sbr.rel (%p171) target = $region28
      $region27: #{residual_block_forward.1} parent=11 // pred_region
        _
      $region28: #{residual_block_forward.1} parent=11 // pred_fallthru
        _
    $region12: #{residual_block_forward.1} parent=5 // pred_fallthru
      _
    %p174 = scmp.lt.s32.totalorder %s11, 2
    // Predicated region
    $region29: #{residual_block_forward.1} parent=5 // pred_check
      %p175 = pneg %p174
    $region30: #{residual_block_forward.1} parent=5 // pred_check_branch
      %177 = sbr.rel (%p175) target = $region32
    $region31: #{residual_block_forward.1} parent=5 // pred_region
      // Predicated region
      $region33: #{residual_block_forward.1} parent=31 // pred_check
        %p178 = pneg %p31
      $region34: #{residual_block_forward.1} parent=31 // pred_check_branch
        %180 = sbr.rel (%p178) target = $region36
      $region35: #{residual_block_forward.1} parent=31 // pred_region
        %p181 = scmp.lt.s32.totalorder %s11, 1
        %s182 = scalar_select %p181, %s11, 1
        %s183 = smul.addr %s182, 55
        %s184 = smul.addr %s183, 8
        %s185 = scalar_lea.vmem %s0, %s184
      $region36: #{residual_block_forward.1} parent=31 // pred_fallthru
        _
    $region32: #{residual_block_forward.1} parent=5 // pred_fallthru
      _
    %p186 = scmp.le.s32.totalorder 1, %s11
    %p187 = scmp.lt.s32.totalorder %s11, 3
    %p188 = pnand %p186, %p187
    %p189 = pneg %p188
    // Predicated region
    $region37: #{residual_block_forward.1} parent=5 // pred_check
      _
    $region38: #{residual_block_forward.1} parent=5 // pred_check_branch
      %191 = sbr.rel (%p188) target = $region40
    $region39: #{residual_block_forward.1} parent=5 // pred_region
      %s192 = ssub.s32 %s11, 1
      %p193 = scmp.lt.s32.totalorder %s16, 1
      %s194 = scalar_select %p193, %s16, 1
      %s195 = smul.addr %s194, 55
      %s196 = smul.addr %s195, 8
      %s197 = scalar_lea.vmem %s0, %s196
      %p198 = pneg %p37
      %p199 = pneg %p34
      %p200 = pneg %p58
      %p201 = pneg %p55
      %p202 = pneg %p79
      %p203 = pneg %p76
      %p204 = pneg %p100
      %p205 = pneg %p97
      %p206 = pneg %p121
      %p207 = pneg %p118
      %p208 = pneg %p147
      %p209 = pneg %p144
      %p210 = scmp.lt.s32.totalorder %s16, 1
      %s211 = scalar_select %p210, %s16, 1
      %s212 = smul.addr %s211, 10
      %s213 = smul.addr %s212, 8
      %s214 = scalar_lea.vmem %s5, %s213
      %p215 = scmp.lt.s32.totalorder %s16, 1
      %s216 = scalar_select %p215, %s16, 1
      %s217 = smul.addr %s216, 55
      %s218 = smul.addr %s217, 8
      %s219 = scalar_lea.vmem %s0, %s218
      %p220 = scmp.lt.s32.totalorder %s16, 1
      %s221 = scalar_select %p220, %s16, 1
      %s222 = smul.addr %s221, 10
      %s223 = smul.addr %s222, 8
      %s224 = scalar_lea.vmem %s5, %s223
      %v226 = vlaneseq
      %v227 = vshrl.u32 %v226, 7
      %v228 = vadd.s32 %v227, 8
      %v229 = vadd.s32 %v227, 16
      %v230 = vadd.s32 %v227, 24
      %v231 = vadd.s32 %v227, 32
      %v232 = vadd.s32 %v227, 40
      %v233 = vadd.s32 %v227, 48
      %v234 = vadd.s32 %v227, 56
      %v235 = vadd.s32 %v227, 64
      %v236 = vadd.s32 %v227, 72
      %vm237 = vcmp.lt.s32.totalorder %v227, 0
      %v238 = vsub.s32 0, %v227
      %v239 = vsel %vm237, %v238, %v227
      %v240 = vmul.u32.u64.compose %v239, 3435973837
      %v241 = vextract.low.u32 %v240
      %v242 = vextract.high.u32 %v240
      %v243 = vshrl.u32 %v242, 3
      %v244 = vmul.u32 %v243, 10
      %v245 = vsub.s32 %v239, %v244
      %v246 = vsub.s32 0, %v245
      %v247 = vsel %vm237, %v246, %v245
      %vm248 = vcmp.lt.s32.totalorder %v228, 0
      %v249 = vsub.s32 0, %v228
      %v250 = vsel %vm248, %v249, %v228
      %v251 = vmul.u32.u64.compose %v250, 3435973837
      %v252 = vextract.low.u32 %v251
      %v253 = vextract.high.u32 %v251
      %v254 = vshrl.u32 %v253, 3
      %v255 = vmul.u32 %v254, 10
      %v256 = vsub.s32 %v250, %v255
      %v257 = vsub.s32 0, %v256
      %v258 = vsel %vm248, %v257, %v256
      %vm259 = vcmp.lt.s32.totalorder %v229, 0
      %v260 = vsub.s32 0, %v229
      %v261 = vsel %vm259, %v260, %v229
      %v262 = vmul.u32.u64.compose %v261, 3435973837
      %v263 = vextract.low.u32 %v262
      %v264 = vextract.high.u32 %v262
      %v265 = vshrl.u32 %v264, 3
      %v266 = vmul.u32 %v265, 10
      %v267 = vsub.s32 %v261, %v266
      %v268 = vsub.s32 0, %v267
      %v269 = vsel %vm259, %v268, %v267
      %vm270 = vcmp.lt.s32.totalorder %v230, 0
      %v271 = vsub.s32 0, %v230
      %v272 = vsel %vm270, %v271, %v230
      %v273 = vmul.u32.u64.compose %v272, 3435973837
      %v274 = vextract.low.u32 %v273
      %v275 = vextract.high.u32 %v273
      %v276 = vshrl.u32 %v275, 3
      %v277 = vmul.u32 %v276, 10
      %v278 = vsub.s32 %v272, %v277
      %v279 = vsub.s32 0, %v278
      %v280 = vsel %vm270, %v279, %v278
      %vm281 = vcmp.lt.s32.totalorder %v231, 0
      %v282 = vsub.s32 0, %v231
      %v283 = vsel %vm281, %v282, %v231
      %v284 = vmul.u32.u64.compose %v283, 3435973837
      %v285 = vextract.low.u32 %v284
      %v286 = vextract.high.u32 %v284
      %v287 = vshrl.u32 %v286, 3
      %v288 = vmul.u32 %v287, 10
      %v289 = vsub.s32 %v283, %v288
      %v290 = vsub.s32 0, %v289
      %v291 = vsel %vm281, %v290, %v289
      %vm292 = vcmp.lt.s32.totalorder %v232, 0
      %v293 = vsub.s32 0, %v232
      %v294 = vsel %vm292, %v293, %v232
      %v295 = vmul.u32.u64.compose %v294, 3435973837
      %v296 = vextract.low.u32 %v295
      %v297 = vextract.high.u32 %v295
      %v298 = vshrl.u32 %v297, 3
      %v299 = vmul.u32 %v298, 10
      %v300 = vsub.s32 %v294, %v299
      %v301 = vsub.s32 0, %v300
      %v302 = vsel %vm292, %v301, %v300
      %vm303 = vcmp.lt.s32.totalorder %v233, 0
      %v304 = vsub.s32 0, %v233
      %v305 = vsel %vm303, %v304, %v233
      %v306 = vmul.u32.u64.compose %v305, 3435973837
      %v307 = vextract.low.u32 %v306
      %v308 = vextract.high.u32 %v306
      %v309 = vshrl.u32 %v308, 3
      %v310 = vmul.u32 %v309, 10
      %v311 = vsub.s32 %v305, %v310
      %v312 = vsub.s32 0, %v311
      %v313 = vsel %vm303, %v312, %v311
      %vm314 = vcmp.lt.s32.totalorder %v234, 0
      %v315 = vsub.s32 0, %v234
      %v316 = vsel %vm314, %v315, %v234
      %v317 = vmul.u32.u64.compose %v316, 3435973837
      %v318 = vextract.low.u32 %v317
      %v319 = vextract.high.u32 %v317
      %v320 = vshrl.u32 %v319, 3
      %v321 = vmul.u32 %v320, 10
      %v322 = vsub.s32 %v316, %v321
      %v323 = vsub.s32 0, %v322
      %v324 = vsel %vm314, %v323, %v322
      %vm325 = vcmp.lt.s32.totalorder %v235, 0
      %v326 = vsub.s32 0, %v235
      %v327 = vsel %vm325, %v326, %v235
      %v328 = vmul.u32.u64.compose %v327, 3435973837
      %v329 = vextract.low.u32 %v328
      %v330 = vextract.high.u32 %v328
      %v331 = vshrl.u32 %v330, 3
      %v332 = vmul.u32 %v331, 10
      %v333 = vsub.s32 %v327, %v332
      %v334 = vsub.s32 0, %v333
      %v335 = vsel %vm325, %v334, %v333
      %vm336 = vcmp.lt.s32.totalorder %v236, 0
      %v337 = vsub.s32 0, %v236
      %v338 = vsel %vm336, %v337, %v236
      %v339 = vmul.u32.u64.compose %v338, 3435973837
      %v340 = vextract.low.u32 %v339
      %v341 = vextract.high.u32 %v339
      %v342 = vshrl.u32 %v341, 3
      %v343 = vmul.u32 %v342, 10
      %v344 = vsub.s32 %v338, %v343
      %v345 = vsub.s32 0, %v344
      %v346 = vsel %vm336, %v345, %v344
      %vm347 = vcmp.ne.s32.totalorder %v247, 0
      %vm348 = vcmp.ne.s32.totalorder %v258, 0
      %vm349 = vcmp.ne.s32.totalorder %v269, 0
      %vm350 = vcmp.ne.s32.totalorder %v280, 0
      %vm351 = vcmp.ne.s32.totalorder %v291, 0
      %vm352 = vcmp.ne.s32.totalorder %v302, 0
      %vm353 = vcmp.ne.s32.totalorder %v313, 0
      %vm354 = vcmp.ne.s32.totalorder %v324, 0
      %vm355 = vcmp.ne.s32.totalorder %v335, 0
      %vm356 = vcmp.ne.s32.totalorder %v346, 0
      %vm357 = vcmp.lt.s32.totalorder %v247, 0
      %vm358 = vcmp.lt.s32.totalorder %v258, 0
      %vm359 = vcmp.lt.s32.totalorder %v269, 0
      %vm360 = vcmp.lt.s32.totalorder %v280, 0
      %vm361 = vcmp.lt.s32.totalorder %v291, 0
      %vm362 = vcmp.lt.s32.totalorder %v302, 0
      %vm363 = vcmp.lt.s32.totalorder %v313, 0
      %vm364 = vcmp.lt.s32.totalorder %v324, 0
      %vm365 = vcmp.lt.s32.totalorder %v335, 0
      %vm366 = vcmp.lt.s32.totalorder %v346, 0
      %vm367 = vmand %vm357, %vm347
      %vm368 = vmand %vm358, %vm348
      %vm369 = vmand %vm359, %vm349
      %vm370 = vmand %vm360, %vm350
      %vm371 = vmand %vm361, %vm351
      %vm372 = vmand %vm362, %vm352
      %vm373 = vmand %vm363, %vm353
      %vm374 = vmand %vm364, %vm354
      %vm375 = vmand %vm365, %vm355
      %vm376 = vmand %vm366, %vm356
      %v377 = vadd.s32 %v247, 10
      %v378 = vadd.s32 %v258, 10
      %v379 = vadd.s32 %v269, 10
      %v380 = vadd.s32 %v280, 10
      %v381 = vadd.s32 %v291, 10
      %v382 = vadd.s32 %v302, 10
      %v383 = vadd.s32 %v313, 10
      %v384 = vadd.s32 %v324, 10
      %v385 = vadd.s32 %v335, 10
      %v386 = vadd.s32 %v346, 10
      %v387 = vsel %vm367, %v377, %v247
      %v388 = vsel %vm368, %v378, %v258
      %v389 = vsel %vm369, %v379, %v269
      %v390 = vsel %vm370, %v380, %v280
      %v391 = vsel %vm371, %v381, %v291
      %v392 = vsel %vm372, %v382, %v302
      %v393 = vsel %vm373, %v383, %v313
      %v394 = vsel %vm374, %v384, %v324
      %v395 = vsel %vm375, %v385, %v335
      %v396 = vsel %vm376, %v386, %v346
      %vm397 = vcmp.lt.s32.totalorder %v387, 8
      %vm398 = vcmp.lt.s32.totalorder %v388, 8
      %vm399 = vcmp.lt.s32.totalorder %v389, 8
      %vm400 = vcmp.lt.s32.totalorder %v390, 8
      %vm401 = vcmp.lt.s32.totalorder %v391, 8
      %vm402 = vcmp.lt.s32.totalorder %v392, 8
      %vm403 = vcmp.lt.s32.totalorder %v393, 8
      %vm404 = vcmp.lt.s32.totalorder %v394, 8
      %vm405 = vcmp.lt.s32.totalorder %v395, 8
      %vm406 = vcmp.lt.s32.totalorder %v396, 8
      %v407 = vld [vmem:[%s219] sm:$0xff]
      %v408 = vld [vmem:[%s219 + $0x8] sm:$0xff]
      %v409 = vld [vmem:[%s219 + $0x10] sm:$0xff]
      %v410 = vld [vmem:[%s219 + $0x18] sm:$0xff]
      %v411 = vld [vmem:[%s219 + $0x20] sm:$0xff]
      %v412 = vld [vmem:[%s219 + $0x28] sm:$0xff]
      %v413 = vld [vmem:[%s219 + $0x30] sm:$0xff]
      %v414 = vld [vmem:[%s219 + $0x38] sm:$0xff]
      %v415 = vld [vmem:[%s219 + $0x40] sm:$0xff]
      %v416 = vld [vmem:[%s219 + $0x48] sm:$0xff]
      %v417 = vpack.c.bf16 %v408, %v407
      %v418 = vpack.c.bf16 %v410, %v409
      %v419 = vpack.c.bf16 %v412, %v411
      %v420 = vpack.c.bf16 %v414, %v413
      %v421 = vpack.c.bf16 %v416, %v415
      %v422 = vld [vmem:[%s1] sm:$0x3]
      %v423 = vld [vmem:[%s219 + $0x6e] sm:$0xff]
      %v424 = vld [vmem:[%s219 + $0x76] sm:$0xff]
      %v425 = vld [vmem:[%s219 + $0x7e] sm:$0xff]
      %v426 = vld [vmem:[%s219 + $0x86] sm:$0xff]
      %v427 = vld [vmem:[%s219 + $0x8e] sm:$0xff]
      %v428 = vld [vmem:[%s219 + $0x96] sm:$0xff]
      %v429 = vld [vmem:[%s219 + $0x9e] sm:$0xff]
      %v430 = vld [vmem:[%s219 + $0xa6] sm:$0xff]
      %v431 = vld [vmem:[%s219 + $0xae] sm:$0xff]
      %v432 = vld [vmem:[%s219 + $0xb6] sm:$0xff]
      %v433 = vpack.c.bf16 %v424, %v423
      %v434 = vpack.c.bf16 %v426, %v425
      %v435 = vpack.c.bf16 %v428, %v427
      %v436 = vpack.c.bf16 %v430, %v429
      %v437 = vpack.c.bf16 %v432, %v431
      %s438 = scalar_lea.vmem %s1, 2
      %v439 = vld [vmem:[%s438] sm:$0x3]
      %vm440 = vcmask 31744
      %v442 = vsel %vm440, %v433, 0
      %v445 = vsel %vm440, %v434, 0
      %v448 = vsel %vm440, %v435, 0
      %v451 = vsel %vm440, %v436, 0
      %v454 = vsel %vm440, %v437, 0
      %vm456 = vcmask 1041408
      %v458 = vsel %vm456, %v439, 0
      %460 = vmatprep.subr.bf16.mxu0 0
      %461 = vmatpush1.bf16.msra.mxu0 0
      %462 = vmatprep.subr.bf16.mxu0 0
      %463 = vmatpush1.bf16.msra.mxu0 0
      %464 = vmatprep.subr.bf16.mxu0 0
      %465 = vmatpush1.bf16.msra.mxu0 0
      %466 = vmatprep.subr.bf16.mxu0 0
      %467 = vmatpush1.bf16.msra.mxu0 0
      %468 = vmatprep.subr.bf16.mxu0 0
      %469 = vmatpush1.bf16.msra.mxu0 0
      %470 = vmatprep.subr.bf16.mxu0 0
      %471 = vmatpush1.bf16.msra.mxu0 0
      %472 = vmatprep.subr.bf16.mxu0 0
      %473 = vmatpush1.bf16.msra.mxu0 0
      %474 = vmatprep.subr.bf16.mxu0 0
      %475 = vmatpush1.bf16.msra.mxu0 %v458
      %476 = vmatprep.subr.bf16.mxu0 0
      %477 = vmatpush2.bf16.msra.mxu0 0
      %478 = vmatprep.subr.bf16.mxu0 0
      %479 = vmatpush2.bf16.msra.mxu0 0
      %480 = vmatprep.subr.bf16.mxu0 0
      %481 = vmatpush2.bf16.msra.mxu0 0
      %482 = vmatprep.subr.bf16.mxu0 0
      %483 = vmatpush2.bf16.msra.mxu0 0
      %484 = vmatprep.subr.bf16.mxu0 0
      %485 = vmatpush2.bf16.msra.mxu0 0
      %486 = vmatprep.subr.bf16.mxu0 0
      %487 = vmatpush2.bf16.msra.mxu0 0
      %488 = vmatprep.subr.bf16.mxu0 0
      %489 = vmatpush2.bf16.msra.mxu0 0
      %490 = vmatprep.subr.bf16.mxu0 0
      %491 = vmatpush2.bf16.msra.mxu0 0
      %492 = vmatprep.mubr.bf16.mxu0 0
      %493 = vmatmul.mubr.bf16.gmra.mxu0 %v442
      %v494 = vpop.f32.mrf.mxu0
      %v495 = vadd.f32 0.0, %v494
      %v496 = vpop.f32.mrf.mxu0
      %v497 = vpop.f32.mrf.mxu0
      %v498 = vadd.f32 0.0, %v497
      %v499 = vpop.f32.mrf.mxu0
      %500 = vmatprep.mubr.bf16.mxu0 0
      %501 = vmatmul.mubr.bf16.gmra.mxu0 %v445
      %v502 = vpop.f32.mrf.mxu0
      %v503 = vadd.f32 0.0, %v502
      %v504 = vpop.f32.mrf.mxu0
      %v505 = vpop.f32.mrf.mxu0
      %v506 = vadd.f32 0.0, %v505
      %v507 = vpop.f32.mrf.mxu0
      %508 = vmatprep.mubr.bf16.mxu0 0
      %509 = vmatmul.mubr.bf16.gmra.mxu0 %v448
      %v510 = vpop.f32.mrf.mxu0
      %v511 = vadd.f32 0.0, %v510
      %v512 = vpop.f32.mrf.mxu0
      %v513 = vpop.f32.mrf.mxu0
      %v514 = vadd.f32 0.0, %v513
      %v515 = vpop.f32.mrf.mxu0
      %516 = vmatprep.mubr.bf16.mxu0 0
      %517 = vmatmul.mubr.bf16.gmra.mxu0 %v451
      %v518 = vpop.f32.mrf.mxu0
      %v519 = vadd.f32 0.0, %v518
      %v520 = vpop.f32.mrf.mxu0
      %v521 = vpop.f32.mrf.mxu0
      %v522 = vadd.f32 0.0, %v521
      %v523 = vpop.f32.mrf.mxu0
      %524 = vmatprep.mubr.bf16.mxu0 0
      %525 = vmatmul.mubr.bf16.gmra.mxu0 %v454
      %v526 = vpop.f32.mrf.mxu0
      %v527 = vadd.f32 0.0, %v526
      %v528 = vpop.f32.mrf.mxu0
      %v529 = vpop.f32.mrf.mxu0
      %v530 = vadd.f32 0.0, %v529
      %v531 = vpop.f32.mrf.mxu0
      %532 = vdwg.mxu0
      %v534 = vsel %vm440, %v417, 0
      %v537 = vsel %vm440, %v418, 0
      %v540 = vsel %vm440, %v419, 0
      %v543 = vsel %vm440, %v420, 0
      %v546 = vsel %vm440, %v421, 0
      %v549 = vsel %vm456, %v422, 0
      %551 = vmatprep.subr.bf16.mxu0 0
      %552 = vmatpush1.bf16.msra.mxu0 0
      %553 = vmatprep.subr.bf16.mxu0 0
      %554 = vmatpush1.bf16.msra.mxu0 0
      %555 = vmatprep.subr.bf16.mxu0 0
      %556 = vmatpush1.bf16.msra.mxu0 0
      %557 = vmatprep.subr.bf16.mxu0 0
      %558 = vmatpush1.bf16.msra.mxu0 0
      %559 = vmatprep.subr.bf16.mxu0 0
      %560 = vmatpush1.bf16.msra.mxu0 0
      %561 = vmatprep.subr.bf16.mxu0 0
      %562 = vmatpush1.bf16.msra.mxu0 0
      %563 = vmatprep.subr.bf16.mxu0 0
      %564 = vmatpush1.bf16.msra.mxu0 0
      %565 = vmatprep.subr.bf16.mxu0 0
      %566 = vmatpush1.bf16.msra.mxu0 %v549
      %567 = vmatprep.subr.bf16.mxu0 0
      %568 = vmatpush2.bf16.msra.mxu0 0
      %569 = vmatprep.subr.bf16.mxu0 0
      %570 = vmatpush2.bf16.msra.mxu0 0
      %571 = vmatprep.subr.bf16.mxu0 0
      %572 = vmatpush2.bf16.msra.mxu0 0
      %573 = vmatprep.subr.bf16.mxu0 0
      %574 = vmatpush2.bf16.msra.mxu0 0
      %575 = vmatprep.subr.bf16.mxu0 0
      %576 = vmatpush2.bf16.msra.mxu0 0
      %577 = vmatprep.subr.bf16.mxu0 0
      %578 = vmatpush2.bf16.msra.mxu0 0
      %579 = vmatprep.subr.bf16.mxu0 0
      %580 = vmatpush2.bf16.msra.mxu0 0
      %581 = vmatprep.subr.bf16.mxu0 0
      %582 = vmatpush2.bf16.msra.mxu0 0
      %583 = vmatprep.mubr.bf16.mxu0 0
      %584 = vmatmul.mubr.bf16.gmra.mxu0 %v534
      %v585 = vpop.f32.mrf.mxu0
      %v586 = vadd.f32 %v495, %v585
      %v587 = vpop.f32.mrf.mxu0
      %v588 = vpop.f32.mrf.mxu0
      %v589 = vadd.f32 %v498, %v588
      %v590 = vpop.f32.mrf.mxu0
      %591 = vmatprep.mubr.bf16.mxu0 0
      %592 = vmatmul.mubr.bf16.gmra.mxu0 %v537
      %v593 = vpop.f32.mrf.mxu0
      %v594 = vadd.f32 %v503, %v593
      %v595 = vpop.f32.mrf.mxu0
      %v596 = vpop.f32.mrf.mxu0
      %v597 = vadd.f32 %v506, %v596
      %v598 = vpop.f32.mrf.mxu0
      %599 = vmatprep.mubr.bf16.mxu0 0
      %600 = vmatmul.mubr.bf16.gmra.mxu0 %v540
      %v601 = vpop.f32.mrf.mxu0
      %v602 = vadd.f32 %v511, %v601
      %v603 = vpop.f32.mrf.mxu0
      %v604 = vpop.f32.mrf.mxu0
      %v605 = vadd.f32 %v514, %v604
      %v606 = vpop.f32.mrf.mxu0
      %607 = vmatprep.mubr.bf16.mxu0 0
      %608 = vmatmul.mubr.bf16.gmra.mxu0 %v543
      %v609 = vpop.f32.mrf.mxu0
      %v610 = vadd.f32 %v519, %v609
      %v611 = vpop.f32.mrf.mxu0
      %v612 = vpop.f32.mrf.mxu0
      %v613 = vadd.f32 %v522, %v612
      %v614 = vpop.f32.mrf.mxu0
      %615 = vmatprep.mubr.bf16.mxu0 0
      %616 = vmatmul.mubr.bf16.gmra.mxu0 %v546
      %v617 = vpop.f32.mrf.mxu0
      %v618 = vadd.f32 %v527, %v617
      %v619 = vpop.f32.mrf.mxu0
      %v620 = vpop.f32.mrf.mxu0
      %v621 = vadd.f32 %v530, %v620
      %v622 = vpop.f32.mrf.mxu0
      %623 = vdwg.mxu0
      %v624 = vld [vmem:[%s219 + $0x1] sm:$0xff]
      %v625 = vld [vmem:[%s219 + $0x9] sm:$0xff]
      %v626 = vld [vmem:[%s219 + $0x11] sm:$0xff]
      %v627 = vld [vmem:[%s219 + $0x19] sm:$0xff]
      %v628 = vld [vmem:[%s219 + $0x21] sm:$0xff]
      %v629 = vld [vmem:[%s219 + $0x29] sm:$0xff]
      %v630 = vld [vmem:[%s219 + $0x31] sm:$0xff]
      %v631 = vld [vmem:[%s219 + $0x39] sm:$0xff]
      %v632 = vld [vmem:[%s219 + $0x41] sm:$0xff]
      %v633 = vld [vmem:[%s219 + $0x49] sm:$0xff]
      %v634 = vpack.c.bf16 %v625, %v624
      %v635 = vpack.c.bf16 %v627, %v626
      %v636 = vpack.c.bf16 %v629, %v628
      %v637 = vpack.c.bf16 %v631, %v630
      %v638 = vpack.c.bf16 %v633, %v632
      %s639 = scalar_lea.vmem %s1, 4
      %v640 = vld [vmem:[%s639] sm:$0x3]
      %v642 = vsel %vm440, %v634, 0
      %v645 = vsel %vm440, %v635, 0
      %v648 = vsel %vm440, %v636, 0
      %v651 = vsel %vm440, %v637, 0
      %v654 = vsel %vm440, %v638, 0
      %v657 = vsel %vm456, %v640, 0
      %659 = vmatprep.subr.bf16.mxu0 0
      %660 = vmatpush1.bf16.msra.mxu0 0
      %661 = vmatprep.subr.bf16.mxu0 0
      %662 = vmatpush1.bf16.msra.mxu0 0
      %663 = vmatprep.subr.bf16.mxu0 0
      %664 = vmatpush1.bf16.msra.mxu0 0
      %665 = vmatprep.subr.bf16.mxu0 0
      %666 = vmatpush1.bf16.msra.mxu0 0
      %667 = vmatprep.subr.bf16.mxu0 0
      %668 = vmatpush1.bf16.msra.mxu0 0
      %669 = vmatprep.subr.bf16.mxu0 0
      %670 = vmatpush1.bf16.msra.mxu0 0
      %671 = vmatprep.subr.bf16.mxu0 0
      %672 = vmatpush1.bf16.msra.mxu0 0
      %673 = vmatprep.subr.bf16.mxu0 0
      %674 = vmatpush1.bf16.msra.mxu0 %v657
      %675 = vmatprep.subr.bf16.mxu0 0
      %676 = vmatpush2.bf16.msra.mxu0 0
      %677 = vmatprep.subr.bf16.mxu0 0
      %678 = vmatpush2.bf16.msra.mxu0 0
      %679 = vmatprep.subr.bf16.mxu0 0
      %680 = vmatpush2.bf16.msra.mxu0 0
      %681 = vmatprep.subr.bf16.mxu0 0
      %682 = vmatpush2.bf16.msra.mxu0 0
      %683 = vmatprep.subr.bf16.mxu0 0
      %684 = vmatpush2.bf16.msra.mxu0 0
      %685 = vmatprep.subr.bf16.mxu0 0
      %686 = vmatpush2.bf16.msra.mxu0 0
      %687 = vmatprep.subr.bf16.mxu0 0
      %688 = vmatpush2.bf16.msra.mxu0 0
      %689 = vmatprep.subr.bf16.mxu0 0
      %690 = vmatpush2.bf16.msra.mxu0 0
      %691 = vmatprep.mubr.bf16.mxu0 0
      %692 = vmatmul.mubr.bf16.gmra.mxu0 %v642
      %v693 = vpop.f32.mrf.mxu0
      %v694 = vadd.f32 0.0, %v693
      %v695 = vpop.f32.mrf.mxu0
      %v696 = vpop.f32.mrf.mxu0
      %v697 = vadd.f32 0.0, %v696
      %v698 = vpop.f32.mrf.mxu0
      %699 = vmatprep.mubr.bf16.mxu0 0
      %700 = vmatmul.mubr.bf16.gmra.mxu0 %v645
      %v701 = vpop.f32.mrf.mxu0
      %v702 = vadd.f32 0.0, %v701
      %v703 = vpop.f32.mrf.mxu0
      %v704 = vpop.f32.mrf.mxu0
      %v705 = vadd.f32 0.0, %v704
      %v706 = vpop.f32.mrf.mxu0
      %707 = vmatprep.mubr.bf16.mxu0 0
      %708 = vmatmul.mubr.bf16.gmra.mxu0 %v648
      %v709 = vpop.f32.mrf.mxu0
      %v710 = vadd.f32 0.0, %v709
      %v711 = vpop.f32.mrf.mxu0
      %v712 = vpop.f32.mrf.mxu0
      %v713 = vadd.f32 0.0, %v712
      %v714 = vpop.f32.mrf.mxu0
      %715 = vmatprep.mubr.bf16.mxu0 0
      %716 = vmatmul.mubr.bf16.gmra.mxu0 %v651
      %v717 = vpop.f32.mrf.mxu0
      %v718 = vadd.f32 0.0, %v717
      %v719 = vpop.f32.mrf.mxu0
      %v720 = vpop.f32.mrf.mxu0
      %v721 = vadd.f32 0.0, %v720
      %v722 = vpop.f32.mrf.mxu0
      %723 = vmatprep.mubr.bf16.mxu0 0
      %724 = vmatmul.mubr.bf16.gmra.mxu0 %v654
      %v725 = vpop.f32.mrf.mxu0
      %v726 = vadd.f32 0.0, %v725
      %v727 = vpop.f32.mrf.mxu0
      %v728 = vpop.f32.mrf.mxu0
      %v729 = vadd.f32 0.0, %v728
      %v730 = vpop.f32.mrf.mxu0
      %731 = vdwg.mxu0
      %v732 = vadd.f32 %v586, %v694
      %v733 = vadd.f32 %v589, %v697
      %v734 = vadd.f32 %v594, %v702
      %v735 = vadd.f32 %v597, %v705
      %v736 = vadd.f32 %v602, %v710
      %v737 = vadd.f32 %v605, %v713
      %v738 = vadd.f32 %v610, %v718
      %v739 = vadd.f32 %v613, %v721
      %v740 = vadd.f32 %v618, %v726
      %v741 = vadd.f32 %v621, %v729
      %v742 = vld [vmem:[%s219 + $0xdc] sm:$0xff]
      %v743 = vld [vmem:[%s219 + $0xe4] sm:$0xff]
      %v744 = vld [vmem:[%s219 + $0xec] sm:$0xff]
      %v745 = vld [vmem:[%s219 + $0xf4] sm:$0xff]
      %v746 = vld [vmem:[%s219 + $0xfc] sm:$0xff]
      %v747 = vld [vmem:[%s219 + $0x104] sm:$0xff]
      %v748 = vld [vmem:[%s219 + $0x10c] sm:$0xff]
      %v749 = vld [vmem:[%s219 + $0x114] sm:$0xff]
      %v750 = vld [vmem:[%s219 + $0x11c] sm:$0xff]
      %v751 = vld [vmem:[%s219 + $0x124] sm:$0xff]
      %v752 = vpack.c.bf16 %v743, %v742
      %v753 = vpack.c.bf16 %v745, %v744
      %v754 = vpack.c.bf16 %v747, %v746
      %v755 = vpack.c.bf16 %v749, %v748
      %v756 = vpack.c.bf16 %v751, %v750
      %s757 = scalar_lea.vmem %s1, 6
      %v758 = vld [vmem:[%s757] sm:$0x3]
      %v760 = vsel %vm440, %v752, 0
      %v763 = vsel %vm440, %v753, 0
      %v766 = vsel %vm440, %v754, 0
      %v769 = vsel %vm440, %v755, 0
      %v772 = vsel %vm440, %v756, 0
      %v775 = vsel %vm456, %v758, 0
      %777 = vmatprep.subr.bf16.mxu0 0
      %778 = vmatpush1.bf16.msra.mxu0 0
      %779 = vmatprep.subr.bf16.mxu0 0
      %780 = vmatpush1.bf16.msra.mxu0 0
      %781 = vmatprep.subr.bf16.mxu0 0
      %782 = vmatpush1.bf16.msra.mxu0 0
      %783 = vmatprep.subr.bf16.mxu0 0
      %784 = vmatpush1.bf16.msra.mxu0 0
      %785 = vmatprep.subr.bf16.mxu0 0
      %786 = vmatpush1.bf16.msra.mxu0 0
      %787 = vmatprep.subr.bf16.mxu0 0
      %788 = vmatpush1.bf16.msra.mxu0 0
      %789 = vmatprep.subr.bf16.mxu0 0
      %790 = vmatpush1.bf16.msra.mxu0 0
      %791 = vmatprep.subr.bf16.mxu0 0
      %792 = vmatpush1.bf16.msra.mxu0 %v775
      %793 = vmatprep.subr.bf16.mxu0 0
      %794 = vmatpush2.bf16.msra.mxu0 0
      %795 = vmatprep.subr.bf16.mxu0 0
      %796 = vmatpush2.bf16.msra.mxu0 0
      %797 = vmatprep.subr.bf16.mxu0 0
      %798 = vmatpush2.bf16.msra.mxu0 0
      %799 = vmatprep.subr.bf16.mxu0 0
      %800 = vmatpush2.bf16.msra.mxu0 0
      %801 = vmatprep.subr.bf16.mxu0 0
      %802 = vmatpush2.bf16.msra.mxu0 0
      %803 = vmatprep.subr.bf16.mxu0 0
      %804 = vmatpush2.bf16.msra.mxu0 0
      %805 = vmatprep.subr.bf16.mxu0 0
      %806 = vmatpush2.bf16.msra.mxu0 0
      %807 = vmatprep.subr.bf16.mxu0 0
      %808 = vmatpush2.bf16.msra.mxu0 0
      %809 = vmatprep.mubr.bf16.mxu0 0
      %810 = vmatmul.mubr.bf16.gmra.mxu0 %v760
      %v811 = vpop.f32.mrf.mxu0
      %v812 = vadd.f32 0.0, %v811
      %v813 = vpop.f32.mrf.mxu0
      %v814 = vpop.f32.mrf.mxu0
      %v815 = vadd.f32 0.0, %v814
      %v816 = vpop.f32.mrf.mxu0
      %817 = vmatprep.mubr.bf16.mxu0 0
      %818 = vmatmul.mubr.bf16.gmra.mxu0 %v763
      %v819 = vpop.f32.mrf.mxu0
      %v820 = vadd.f32 0.0, %v819
      %v821 = vpop.f32.mrf.mxu0
      %v822 = vpop.f32.mrf.mxu0
      %v823 = vadd.f32 0.0, %v822
      %v824 = vpop.f32.mrf.mxu0
      %825 = vmatprep.mubr.bf16.mxu0 0
      %826 = vmatmul.mubr.bf16.gmra.mxu0 %v766
      %v827 = vpop.f32.mrf.mxu0
      %v828 = vadd.f32 0.0, %v827
      %v829 = vpop.f32.mrf.mxu0
      %v830 = vpop.f32.mrf.mxu0
      %v831 = vadd.f32 0.0, %v830
      %v832 = vpop.f32.mrf.mxu0
      %833 = vmatprep.mubr.bf16.mxu0 0
      %834 = vmatmul.mubr.bf16.gmra.mxu0 %v769
      %v835 = vpop.f32.mrf.mxu0
      %v836 = vadd.f32 0.0, %v835
      %v837 = vpop.f32.mrf.mxu0
      %v838 = vpop.f32.mrf.mxu0
      %v839 = vadd.f32 0.0, %v838
      %v840 = vpop.f32.mrf.mxu0
      %841 = vmatprep.mubr.bf16.mxu0 0
      %842 = vmatmul.mubr.bf16.gmra.mxu0 %v772
      %v843 = vpop.f32.mrf.mxu0
      %v844 = vadd.f32 0.0, %v843
      %v845 = vpop.f32.mrf.mxu0
      %v846 = vpop.f32.mrf.mxu0
      %v847 = vadd.f32 0.0, %v846
      %v848 = vpop.f32.mrf.mxu0
      %849 = vdwg.mxu0
      %v850 = vadd.f32 %v732, %v812
      %v851 = vadd.f32 %v733, %v815
      %v852 = vadd.f32 %v734, %v820
      %v853 = vadd.f32 %v735, %v823
      %v854 = vadd.f32 %v736, %v828
      %v855 = vadd.f32 %v737, %v831
      %v856 = vadd.f32 %v738, %v836
      %v857 = vadd.f32 %v739, %v839
      %v858 = vadd.f32 %v740, %v844
      %v859 = vadd.f32 %v741, %v847
      %v860 = vld [vmem:[%s219 + $0x14a] sm:$0xff]
      %v861 = vld [vmem:[%s219 + $0x152] sm:$0xff]
      %v862 = vld [vmem:[%s219 + $0x15a] sm:$0xff]
      %v863 = vld [vmem:[%s219 + $0x162] sm:$0xff]
      %v864 = vld [vmem:[%s219 + $0x16a] sm:$0xff]
      %v865 = vld [vmem:[%s219 + $0x172] sm:$0xff]
      %v866 = vld [vmem:[%s219 + $0x17a] sm:$0xff]
      %v867 = vld [vmem:[%s219 + $0x182] sm:$0xff]
      %v868 = vld [vmem:[%s219 + $0x18a] sm:$0xff]
      %v869 = vld [vmem:[%s219 + $0x192] sm:$0xff]
      %v870 = vpack.c.bf16 %v861, %v860
      %v871 = vpack.c.bf16 %v863, %v862
      %v872 = vpack.c.bf16 %v865, %v864
      %v873 = vpack.c.bf16 %v867, %v866
      %v874 = vpack.c.bf16 %v869, %v868
      %s875 = scalar_lea.vmem %s1, 8
      %v876 = vld [vmem:[%s875] sm:$0x3]
      %v878 = vsel %vm440, %v870, 0
      %v881 = vsel %vm440, %v871, 0
      %v884 = vsel %vm440, %v872, 0
      %v887 = vsel %vm440, %v873, 0
      %v890 = vsel %vm440, %v874, 0
      %v893 = vsel %vm456, %v876, 0
      %895 = vmatprep.subr.bf16.mxu0 0
      %896 = vmatpush1.bf16.msra.mxu0 0
      %897 = vmatprep.subr.bf16.mxu0 0
      %898 = vmatpush1.bf16.msra.mxu0 0
      %899 = vmatprep.subr.bf16.mxu0 0
      %900 = vmatpush1.bf16.msra.mxu0 0
      %901 = vmatprep.subr.bf16.mxu0 0
      %902 = vmatpush1.bf16.msra.mxu0 0
      %903 = vmatprep.subr.bf16.mxu0 0
      %904 = vmatpush1.bf16.msra.mxu0 0
      %905 = vmatprep.subr.bf16.mxu0 0
      %906 = vmatpush1.bf16.msra.mxu0 0
      %907 = vmatprep.subr.bf16.mxu0 0
      %908 = vmatpush1.bf16.msra.mxu0 0
      %909 = vmatprep.subr.bf16.mxu0 0
      %910 = vmatpush1.bf16.msra.mxu0 %v893
      %911 = vmatprep.subr.bf16.mxu0 0
      %912 = vmatpush2.bf16.msra.mxu0 0
      %913 = vmatprep.subr.bf16.mxu0 0
      %914 = vmatpush2.bf16.msra.mxu0 0
      %915 = vmatprep.subr.bf16.mxu0 0
      %916 = vmatpush2.bf16.msra.mxu0 0
      %917 = vmatprep.subr.bf16.mxu0 0
      %918 = vmatpush2.bf16.msra.mxu0 0
      %919 = vmatprep.subr.bf16.mxu0 0
      %920 = vmatpush2.bf16.msra.mxu0 0
      %921 = vmatprep.subr.bf16.mxu0 0
      %922 = vmatpush2.bf16.msra.mxu0 0
      %923 = vmatprep.subr.bf16.mxu0 0
      %924 = vmatpush2.bf16.msra.mxu0 0
      %925 = vmatprep.subr.bf16.mxu0 0
      %926 = vmatpush2.bf16.msra.mxu0 0
      %927 = vmatprep.mubr.bf16.mxu0 0
      %928 = vmatmul.mubr.bf16.gmra.mxu0 %v878
      %v929 = vpop.f32.mrf.mxu0
      %v930 = vadd.f32 0.0, %v929
      %v931 = vpop.f32.mrf.mxu0
      %v932 = vpop.f32.mrf.mxu0
      %v933 = vadd.f32 0.0, %v932
      %v934 = vpop.f32.mrf.mxu0
      %935 = vmatprep.mubr.bf16.mxu0 0
      %936 = vmatmul.mubr.bf16.gmra.mxu0 %v881
      %v937 = vpop.f32.mrf.mxu0
      %v938 = vadd.f32 0.0, %v937
      %v939 = vpop.f32.mrf.mxu0
      %v940 = vpop.f32.mrf.mxu0
      %v941 = vadd.f32 0.0, %v940
      %v942 = vpop.f32.mrf.mxu0
      %943 = vmatprep.mubr.bf16.mxu0 0
      %944 = vmatmul.mubr.bf16.gmra.mxu0 %v884
      %v945 = vpop.f32.mrf.mxu0
      %v946 = vadd.f32 0.0, %v945
      %v947 = vpop.f32.mrf.mxu0
      %v948 = vpop.f32.mrf.mxu0
      %v949 = vadd.f32 0.0, %v948
      %v950 = vpop.f32.mrf.mxu0
      %951 = vmatprep.mubr.bf16.mxu0 0
      %952 = vmatmul.mubr.bf16.gmra.mxu0 %v887
      %v953 = vpop.f32.mrf.mxu0
      %v954 = vadd.f32 0.0, %v953
      %v955 = vpop.f32.mrf.mxu0
      %v956 = vpop.f32.mrf.mxu0
      %v957 = vadd.f32 0.0, %v956
      %v958 = vpop.f32.mrf.mxu0
      %959 = vmatprep.mubr.bf16.mxu0 0
      %960 = vmatmul.mubr.bf16.gmra.mxu0 %v890
      %v961 = vpop.f32.mrf.mxu0
      %v962 = vadd.f32 0.0, %v961
      %v963 = vpop.f32.mrf.mxu0
      %v964 = vpop.f32.mrf.mxu0
      %v965 = vadd.f32 0.0, %v964
      %v966 = vpop.f32.mrf.mxu0
      %967 = vdwg.mxu0
      %v968 = vadd.f32 %v850, %v930
      %v969 = vadd.f32 %v851, %v933
      %v970 = vadd.f32 %v852, %v938
      %v971 = vadd.f32 %v853, %v941
      %v972 = vadd.f32 %v854, %v946
      %v973 = vadd.f32 %v855, %v949
      %v974 = vadd.f32 %v856, %v954
      %v975 = vadd.f32 %v857, %v957
      %v976 = vadd.f32 %v858, %v962
      %v977 = vadd.f32 %v859, %v965
      %v978 = vld [vmem:[%s219 + $0xdd] sm:$0xff]
      %v979 = vld [vmem:[%s219 + $0xe5] sm:$0xff]
      %v980 = vld [vmem:[%s219 + $0xed] sm:$0xff]
      %v981 = vld [vmem:[%s219 + $0xf5] sm:$0xff]
      %v982 = vld [vmem:[%s219 + $0xfd] sm:$0xff]
      %v983 = vld [vmem:[%s219 + $0x105] sm:$0xff]
      %v984 = vld [vmem:[%s219 + $0x10d] sm:$0xff]
      %v985 = vld [vmem:[%s219 + $0x115] sm:$0xff]
      %v986 = vld [vmem:[%s219 + $0x11d] sm:$0xff]
      %v987 = vld [vmem:[%s219 + $0x125] sm:$0xff]
      %v988 = vpack.c.bf16 %v979, %v978
      %v989 = vpack.c.bf16 %v981, %v980
      %v990 = vpack.c.bf16 %v983, %v982
      %v991 = vpack.c.bf16 %v985, %v984
      %v992 = vpack.c.bf16 %v987, %v986
      %s993 = scalar_lea.vmem %s1, 10
      %v994 = vld [vmem:[%s993] sm:$0x3]
      %v996 = vsel %vm440, %v988, 0
      %v999 = vsel %vm440, %v989, 0
      %v1002 = vsel %vm440, %v990, 0
      %v1005 = vsel %vm440, %v991, 0
      %v1008 = vsel %vm440, %v992, 0
      %v1011 = vsel %vm456, %v994, 0
      %1013 = vmatprep.subr.bf16.mxu0 0
      %1014 = vmatpush1.bf16.msra.mxu0 0
      %1015 = vmatprep.subr.bf16.mxu0 0
      %1016 = vmatpush1.bf16.msra.mxu0 0
      %1017 = vmatprep.subr.bf16.mxu0 0
      %1018 = vmatpush1.bf16.msra.mxu0 0
      %1019 = vmatprep.subr.bf16.mxu0 0
      %1020 = vmatpush1.bf16.msra.mxu0 0
      %1021 = vmatprep.subr.bf16.mxu0 0
      %1022 = vmatpush1.bf16.msra.mxu0 0
      %1023 = vmatprep.subr.bf16.mxu0 0
      %1024 = vmatpush1.bf16.msra.mxu0 0
      %1025 = vmatprep.subr.bf16.mxu0 0
      %1026 = vmatpush1.bf16.msra.mxu0 0
      %1027 = vmatprep.subr.bf16.mxu0 0
      %1028 = vmatpush1.bf16.msra.mxu0 %v1011
      %1029 = vmatprep.subr.bf16.mxu0 0
      %1030 = vmatpush2.bf16.msra.mxu0 0
      %1031 = vmatprep.subr.bf16.mxu0 0
      %1032 = vmatpush2.bf16.msra.mxu0 0
      %1033 = vmatprep.subr.bf16.mxu0 0
      %1034 = vmatpush2.bf16.msra.mxu0 0
      %1035 = vmatprep.subr.bf16.mxu0 0
      %1036 = vmatpush2.bf16.msra.mxu0 0
      %1037 = vmatprep.subr.bf16.mxu0 0
      %1038 = vmatpush2.bf16.msra.mxu0 0
      %1039 = vmatprep.subr.bf16.mxu0 0
      %1040 = vmatpush2.bf16.msra.mxu0 0
      %1041 = vmatprep.subr.bf16.mxu0 0
      %1042 = vmatpush2.bf16.msra.mxu0 0
      %1043 = vmatprep.subr.bf16.mxu0 0
      %1044 = vmatpush2.bf16.msra.mxu0 0
      %1045 = vmatprep.mubr.bf16.mxu0 0
      %1046 = vmatmul.mubr.bf16.gmra.mxu0 %v996
      %v1047 = vpop.f32.mrf.mxu0
      %v1048 = vadd.f32 0.0, %v1047
      %v1049 = vpop.f32.mrf.mxu0
      %v1050 = vpop.f32.mrf.mxu0
      %v1051 = vadd.f32 0.0, %v1050
      %v1052 = vpop.f32.mrf.mxu0
      %1053 = vmatprep.mubr.bf16.mxu0 0
      %1054 = vmatmul.mubr.bf16.gmra.mxu0 %v999
      %v1055 = vpop.f32.mrf.mxu0
      %v1056 = vadd.f32 0.0, %v1055
      %v1057 = vpop.f32.mrf.mxu0
      %v1058 = vpop.f32.mrf.mxu0
      %v1059 = vadd.f32 0.0, %v1058
      %v1060 = vpop.f32.mrf.mxu0
      %1061 = vmatprep.mubr.bf16.mxu0 0
      %1062 = vmatmul.mubr.bf16.gmra.mxu0 %v1002
      %v1063 = vpop.f32.mrf.mxu0
      %v1064 = vadd.f32 0.0, %v1063
      %v1065 = vpop.f32.mrf.mxu0
      %v1066 = vpop.f32.mrf.mxu0
      %v1067 = vadd.f32 0.0, %v1066
      %v1068 = vpop.f32.mrf.mxu0
      %1069 = vmatprep.mubr.bf16.mxu0 0
      %1070 = vmatmul.mubr.bf16.gmra.mxu0 %v1005
      %v1071 = vpop.f32.mrf.mxu0
      %v1072 = vadd.f32 0.0, %v1071
      %v1073 = vpop.f32.mrf.mxu0
      %v1074 = vpop.f32.mrf.mxu0
      %v1075 = vadd.f32 0.0, %v1074
      %v1076 = vpop.f32.mrf.mxu0
      %1077 = vmatprep.mubr.bf16.mxu0 0
      %1078 = vmatmul.mubr.bf16.gmra.mxu0 %v1008
      %v1079 = vpop.f32.mrf.mxu0
      %v1080 = vadd.f32 0.0, %v1079
      %v1081 = vpop.f32.mrf.mxu0
      %v1082 = vpop.f32.mrf.mxu0
      %v1083 = vadd.f32 0.0, %v1082
      %v1084 = vpop.f32.mrf.mxu0
      %1085 = vdwg.mxu0
      %v1086 = vadd.f32 %v968, %v1048
      %v1087 = vadd.f32 %v969, %v1051
      %v1088 = vadd.f32 %v970, %v1056
      %v1089 = vadd.f32 %v971, %v1059
      %v1090 = vadd.f32 %v972, %v1064
      %v1091 = vadd.f32 %v973, %v1067
      %v1092 = vadd.f32 %v974, %v1072
      %v1093 = vadd.f32 %v975, %v1075
      %v1094 = vadd.f32 %v976, %v1080
      %v1095 = vadd.f32 %v977, %v1083
      %v1096 = vld [vmem:[%s219 + $0xa] sm:$0xff]
      %v1097 = vld [vmem:[%s219 + $0x12] sm:$0xff]
      %v1098 = vld [vmem:[%s219 + $0x1a] sm:$0xff]
      %v1099 = vld [vmem:[%s219 + $0x22] sm:$0xff]
      %v1100 = vld [vmem:[%s219 + $0x2a] sm:$0xff]
      %v1101 = vld [vmem:[%s219 + $0x32] sm:$0xff]
      %v1102 = vld [vmem:[%s219 + $0x3a] sm:$0xff]
      %v1103 = vld [vmem:[%s219 + $0x42] sm:$0xff]
      %v1104 = vld [vmem:[%s219 + $0x4a] sm:$0xff]
      %v1105 = vld [vmem:[%s219 + $0x52] sm:$0xff]
      %v1106 = vpack.c.bf16 %v1097, %v1096
      %v1107 = vpack.c.bf16 %v1099, %v1098
      %v1108 = vpack.c.bf16 %v1101, %v1100
      %v1109 = vpack.c.bf16 %v1103, %v1102
      %v1110 = vpack.c.bf16 %v1105, %v1104
      %s1111 = scalar_lea.vmem %s1, 12
      %v1112 = vld [vmem:[%s1111] sm:$0x3]
      %v1114 = vsel %vm440, %v1106, 0
      %v1117 = vsel %vm440, %v1107, 0
      %v1120 = vsel %vm440, %v1108, 0
      %v1123 = vsel %vm440, %v1109, 0
      %v1126 = vsel %vm440, %v1110, 0
      %v1129 = vsel %vm456, %v1112, 0
      %1131 = vmatprep.subr.bf16.mxu0 0
      %1132 = vmatpush1.bf16.msra.mxu0 0
      %1133 = vmatprep.subr.bf16.mxu0 0
      %1134 = vmatpush1.bf16.msra.mxu0 0
      %1135 = vmatprep.subr.bf16.mxu0 0
      %1136 = vmatpush1.bf16.msra.mxu0 0
      %1137 = vmatprep.subr.bf16.mxu0 0
      %1138 = vmatpush1.bf16.msra.mxu0 0
      %1139 = vmatprep.subr.bf16.mxu0 0
      %1140 = vmatpush1.bf16.msra.mxu0 0
      %1141 = vmatprep.subr.bf16.mxu0 0
      %1142 = vmatpush1.bf16.msra.mxu0 0
      %1143 = vmatprep.subr.bf16.mxu0 0
      %1144 = vmatpush1.bf16.msra.mxu0 0
      %1145 = vmatprep.subr.bf16.mxu0 0
      %1146 = vmatpush1.bf16.msra.mxu0 %v1129
      %1147 = vmatprep.subr.bf16.mxu0 0
      %1148 = vmatpush2.bf16.msra.mxu0 0
      %1149 = vmatprep.subr.bf16.mxu0 0
      %1150 = vmatpush2.bf16.msra.mxu0 0
      %1151 = vmatprep.subr.bf16.mxu0 0
      %1152 = vmatpush2.bf16.msra.mxu0 0
      %1153 = vmatprep.subr.bf16.mxu0 0
      %1154 = vmatpush2.bf16.msra.mxu0 0
      %1155 = vmatprep.subr.bf16.mxu0 0
      %1156 = vmatpush2.bf16.msra.mxu0 0
      %1157 = vmatprep.subr.bf16.mxu0 0
      %1158 = vmatpush2.bf16.msra.mxu0 0
      %1159 = vmatprep.subr.bf16.mxu0 0
      %1160 = vmatpush2.bf16.msra.mxu0 0
      %1161 = vmatprep.subr.bf16.mxu0 0
      %1162 = vmatpush2.bf16.msra.mxu0 0
      %1163 = vmatprep.mubr.bf16.mxu0 0
      %1164 = vmatmul.mubr.bf16.gmra.mxu0 %v1114
      %v1165 = vpop.f32.mrf.mxu0
      %v1166 = vadd.f32 0.0, %v1165
      %v1167 = vpop.f32.mrf.mxu0
      %v1168 = vpop.f32.mrf.mxu0
      %v1169 = vadd.f32 0.0, %v1168
      %v1170 = vpop.f32.mrf.mxu0
      %1171 = vmatprep.mubr.bf16.mxu0 0
      %1172 = vmatmul.mubr.bf16.gmra.mxu0 %v1117
      %v1173 = vpop.f32.mrf.mxu0
      %v1174 = vadd.f32 0.0, %v1173
      %v1175 = vpop.f32.mrf.mxu0
      %v1176 = vpop.f32.mrf.mxu0
      %v1177 = vadd.f32 0.0, %v1176
      %v1178 = vpop.f32.mrf.mxu0
      %1179 = vmatprep.mubr.bf16.mxu0 0
      %1180 = vmatmul.mubr.bf16.gmra.mxu0 %v1120
      %v1181 = vpop.f32.mrf.mxu0
      %v1182 = vadd.f32 0.0, %v1181
      %v1183 = vpop.f32.mrf.mxu0
      %v1184 = vpop.f32.mrf.mxu0
      %v1185 = vadd.f32 0.0, %v1184
      %v1186 = vpop.f32.mrf.mxu0
      %1187 = vmatprep.mubr.bf16.mxu0 0
      %1188 = vmatmul.mubr.bf16.gmra.mxu0 %v1123
      %v1189 = vpop.f32.mrf.mxu0
      %v1190 = vadd.f32 0.0, %v1189
      %v1191 = vpop.f32.mrf.mxu0
      %v1192 = vpop.f32.mrf.mxu0
      %v1193 = vadd.f32 0.0, %v1192
      %v1194 = vpop.f32.mrf.mxu0
      %1195 = vmatprep.mubr.bf16.mxu0 0
      %1196 = vmatmul.mubr.bf16.gmra.mxu0 %v1126
      %v1197 = vpop.f32.mrf.mxu0
      %v1198 = vadd.f32 0.0, %v1197
      %v1199 = vpop.f32.mrf.mxu0
      %v1200 = vpop.f32.mrf.mxu0
      %v1201 = vadd.f32 0.0, %v1200
      %v1202 = vpop.f32.mrf.mxu0
      %1203 = vdwg.mxu0
      %v1204 = vadd.f32 %v1086, %v1166
      %v1205 = vadd.f32 %v1087, %v1169
      %v1206 = vadd.f32 %v1088, %v1174
      %v1207 = vadd.f32 %v1089, %v1177
      %v1208 = vadd.f32 %v1090, %v1182
      %v1209 = vadd.f32 %v1091, %v1185
      %v1210 = vadd.f32 %v1092, %v1190
      %v1211 = vadd.f32 %v1093, %v1193
      %v1212 = vadd.f32 %v1094, %v1198
      %v1213 = vadd.f32 %v1095, %v1201
      %v1214 = vld [vmem:[%s219 + $0x78] sm:$0xff]
      %v1215 = vld [vmem:[%s219 + $0x80] sm:$0xff]
      %v1216 = vld [vmem:[%s219 + $0x88] sm:$0xff]
      %v1217 = vld [vmem:[%s219 + $0x90] sm:$0xff]
      %v1218 = vld [vmem:[%s219 + $0x98] sm:$0xff]
      %v1219 = vld [vmem:[%s219 + $0xa0] sm:$0xff]
      %v1220 = vld [vmem:[%s219 + $0xa8] sm:$0xff]
      %v1221 = vld [vmem:[%s219 + $0xb0] sm:$0xff]
      %v1222 = vld [vmem:[%s219 + $0xb8] sm:$0xff]
      %v1223 = vld [vmem:[%s219 + $0xc0] sm:$0xff]
      %v1224 = vpack.c.bf16 %v1215, %v1214
      %v1225 = vpack.c.bf16 %v1217, %v1216
      %v1226 = vpack.c.bf16 %v1219, %v1218
      %v1227 = vpack.c.bf16 %v1221, %v1220
      %v1228 = vpack.c.bf16 %v1223, %v1222
      %s1229 = scalar_lea.vmem %s1, 14
      %v1230 = vld [vmem:[%s1229] sm:$0x3]
      %v1232 = vsel %vm440, %v1224, 0
      %v1235 = vsel %vm440, %v1225, 0
      %v1238 = vsel %vm440, %v1226, 0
      %v1241 = vsel %vm440, %v1227, 0
      %v1244 = vsel %vm440, %v1228, 0
      %v1247 = vsel %vm456, %v1230, 0
      %1249 = vmatprep.subr.bf16.mxu0 0
      %1250 = vmatpush1.bf16.msra.mxu0 0
      %1251 = vmatprep.subr.bf16.mxu0 0
      %1252 = vmatpush1.bf16.msra.mxu0 0
      %1253 = vmatprep.subr.bf16.mxu0 0
      %1254 = vmatpush1.bf16.msra.mxu0 0
      %1255 = vmatprep.subr.bf16.mxu0 0
      %1256 = vmatpush1.bf16.msra.mxu0 0
      %1257 = vmatprep.subr.bf16.mxu0 0
      %1258 = vmatpush1.bf16.msra.mxu0 0
      %1259 = vmatprep.subr.bf16.mxu0 0
      %1260 = vmatpush1.bf16.msra.mxu0 0
      %1261 = vmatprep.subr.bf16.mxu0 0
      %1262 = vmatpush1.bf16.msra.mxu0 0
      %1263 = vmatprep.subr.bf16.mxu0 0
      %1264 = vmatpush1.bf16.msra.mxu0 %v1247
      %1265 = vmatprep.subr.bf16.mxu0 0
      %1266 = vmatpush2.bf16.msra.mxu0 0
      %1267 = vmatprep.subr.bf16.mxu0 0
      %1268 = vmatpush2.bf16.msra.mxu0 0
      %1269 = vmatprep.subr.bf16.mxu0 0
      %1270 = vmatpush2.bf16.msra.mxu0 0
      %1271 = vmatprep.subr.bf16.mxu0 0
      %1272 = vmatpush2.bf16.msra.mxu0 0
      %1273 = vmatprep.subr.bf16.mxu0 0
      %1274 = vmatpush2.bf16.msra.mxu0 0
      %1275 = vmatprep.subr.bf16.mxu0 0
      %1276 = vmatpush2.bf16.msra.mxu0 0
      %1277 = vmatprep.subr.bf16.mxu0 0
      %1278 = vmatpush2.bf16.msra.mxu0 0
      %1279 = vmatprep.subr.bf16.mxu0 0
      %1280 = vmatpush2.bf16.msra.mxu0 0
      %1281 = vmatprep.mubr.bf16.mxu0 0
      %1282 = vmatmul.mubr.bf16.gmra.mxu0 %v1232
      %v1283 = vpop.f32.mrf.mxu0
      %v1284 = vadd.f32 0.0, %v1283
      %v1285 = vpop.f32.mrf.mxu0
      %v1286 = vpop.f32.mrf.mxu0
      %v1287 = vadd.f32 0.0, %v1286
      %v1288 = vpop.f32.mrf.mxu0
      %1289 = vmatprep.mubr.bf16.mxu0 0
      %1290 = vmatmul.mubr.bf16.gmra.mxu0 %v1235
      %v1291 = vpop.f32.mrf.mxu0
      %v1292 = vadd.f32 0.0, %v1291
      %v1293 = vpop.f32.mrf.mxu0
      %v1294 = vpop.f32.mrf.mxu0
      %v1295 = vadd.f32 0.0, %v1294
      %v1296 = vpop.f32.mrf.mxu0
      %1297 = vmatprep.mubr.bf16.mxu0 0
      %1298 = vmatmul.mubr.bf16.gmra.mxu0 %v1238
      %v1299 = vpop.f32.mrf.mxu0
      %v1300 = vadd.f32 0.0, %v1299
      %v1301 = vpop.f32.mrf.mxu0
      %v1302 = vpop.f32.mrf.mxu0
      %v1303 = vadd.f32 0.0, %v1302
      %v1304 = vpop.f32.mrf.mxu0
      %1305 = vmatprep.mubr.bf16.mxu0 0
      %1306 = vmatmul.mubr.bf16.gmra.mxu0 %v1241
      %v1307 = vpop.f32.mrf.mxu0
      %v1308 = vadd.f32 0.0, %v1307
      %v1309 = vpop.f32.mrf.mxu0
      %v1310 = vpop.f32.mrf.mxu0
      %v1311 = vadd.f32 0.0, %v1310
      %v1312 = vpop.f32.mrf.mxu0
      %1313 = vmatprep.mubr.bf16.mxu0 0
      %1314 = vmatmul.mubr.bf16.gmra.mxu0 %v1244
      %v1315 = vpop.f32.mrf.mxu0
      %v1316 = vadd.f32 0.0, %v1315
      %v1317 = vpop.f32.mrf.mxu0
      %v1318 = vpop.f32.mrf.mxu0
      %v1319 = vadd.f32 0.0, %v1318
      %v1320 = vpop.f32.mrf.mxu0
      %1321 = vdwg.mxu0
      %v1322 = vadd.f32 %v1204, %v1284
      %v1323 = vadd.f32 %v1205, %v1287
      %v1324 = vadd.f32 %v1206, %v1292
      %v1325 = vadd.f32 %v1207, %v1295
      %v1326 = vadd.f32 %v1208, %v1300
      %v1327 = vadd.f32 %v1209, %v1303
      %v1328 = vadd.f32 %v1210, %v1308
      %v1329 = vadd.f32 %v1211, %v1311
      %v1330 = vadd.f32 %v1212, %v1316
      %v1331 = vadd.f32 %v1213, %v1319
      %v1332 = vld [vmem:[%s219 + $0xb] sm:$0xff]
      %v1333 = vld [vmem:[%s219 + $0x13] sm:$0xff]
      %v1334 = vld [vmem:[%s219 + $0x1b] sm:$0xff]
      %v1335 = vld [vmem:[%s219 + $0x23] sm:$0xff]
      %v1336 = vld [vmem:[%s219 + $0x2b] sm:$0xff]
      %v1337 = vld [vmem:[%s219 + $0x33] sm:$0xff]
      %v1338 = vld [vmem:[%s219 + $0x3b] sm:$0xff]
      %v1339 = vld [vmem:[%s219 + $0x43] sm:$0xff]
      %v1340 = vld [vmem:[%s219 + $0x4b] sm:$0xff]
      %v1341 = vld [vmem:[%s219 + $0x53] sm:$0xff]
      %v1342 = vpack.c.bf16 %v1333, %v1332
      %v1343 = vpack.c.bf16 %v1335, %v1334
      %v1344 = vpack.c.bf16 %v1337, %v1336
      %v1345 = vpack.c.bf16 %v1339, %v1338
      %v1346 = vpack.c.bf16 %v1341, %v1340
      %s1347 = scalar_lea.vmem %s1, 16
      %v1348 = vld [vmem:[%s1347] sm:$0x3]
      %v1350 = vsel %vm440, %v1342, 0
      %v1353 = vsel %vm440, %v1343, 0
      %v1356 = vsel %vm440, %v1344, 0
      %v1359 = vsel %vm440, %v1345, 0
      %v1362 = vsel %vm440, %v1346, 0
      %v1365 = vsel %vm456, %v1348, 0
      %1367 = vmatprep.subr.bf16.mxu0 0
      %1368 = vmatpush1.bf16.msra.mxu0 0
      %1369 = vmatprep.subr.bf16.mxu0 0
      %1370 = vmatpush1.bf16.msra.mxu0 0
      %1371 = vmatprep.subr.bf16.mxu0 0
      %1372 = vmatpush1.bf16.msra.mxu0 0
      %1373 = vmatprep.subr.bf16.mxu0 0
      %1374 = vmatpush1.bf16.msra.mxu0 0
      %1375 = vmatprep.subr.bf16.mxu0 0
      %1376 = vmatpush1.bf16.msra.mxu0 0
      %1377 = vmatprep.subr.bf16.mxu0 0
      %1378 = vmatpush1.bf16.msra.mxu0 0
      %1379 = vmatprep.subr.bf16.mxu0 0
      %1380 = vmatpush1.bf16.msra.mxu0 0
      %1381 = vmatprep.subr.bf16.mxu0 0
      %1382 = vmatpush1.bf16.msra.mxu0 %v1365
      %1383 = vmatprep.subr.bf16.mxu0 0
      %1384 = vmatpush2.bf16.msra.mxu0 0
      %1385 = vmatprep.subr.bf16.mxu0 0
      %1386 = vmatpush2.bf16.msra.mxu0 0
      %1387 = vmatprep.subr.bf16.mxu0 0
      %1388 = vmatpush2.bf16.msra.mxu0 0
      %1389 = vmatprep.subr.bf16.mxu0 0
      %1390 = vmatpush2.bf16.msra.mxu0 0
      %1391 = vmatprep.subr.bf16.mxu0 0
      %1392 = vmatpush2.bf16.msra.mxu0 0
      %1393 = vmatprep.subr.bf16.mxu0 0
      %1394 = vmatpush2.bf16.msra.mxu0 0
      %1395 = vmatprep.subr.bf16.mxu0 0
      %1396 = vmatpush2.bf16.msra.mxu0 0
      %1397 = vmatprep.subr.bf16.mxu0 0
      %1398 = vmatpush2.bf16.msra.mxu0 0
      %1399 = vmatprep.mubr.bf16.mxu0 0
      %1400 = vmatmul.mubr.bf16.gmra.mxu0 %v1350
      %v1401 = vpop.f32.mrf.mxu0
      %v1402 = vadd.f32 0.0, %v1401
      %v1403 = vpop.f32.mrf.mxu0
      %v1404 = vpop.f32.mrf.mxu0
      %v1405 = vadd.f32 0.0, %v1404
      %v1406 = vpop.f32.mrf.mxu0
      %1407 = vmatprep.mubr.bf16.mxu0 0
      %1408 = vmatmul.mubr.bf16.gmra.mxu0 %v1353
      %v1409 = vpop.f32.mrf.mxu0
      %v1410 = vadd.f32 0.0, %v1409
      %v1411 = vpop.f32.mrf.mxu0
      %v1412 = vpop.f32.mrf.mxu0
      %v1413 = vadd.f32 0.0, %v1412
      %v1414 = vpop.f32.mrf.mxu0
      %1415 = vmatprep.mubr.bf16.mxu0 0
      %1416 = vmatmul.mubr.bf16.gmra.mxu0 %v1356
      %v1417 = vpop.f32.mrf.mxu0
      %v1418 = vadd.f32 0.0, %v1417
      %v1419 = vpop.f32.mrf.mxu0
      %v1420 = vpop.f32.mrf.mxu0
      %v1421 = vadd.f32 0.0, %v1420
      %v1422 = vpop.f32.mrf.mxu0
      %1423 = vmatprep.mubr.bf16.mxu0 0
      %1424 = vmatmul.mubr.bf16.gmra.mxu0 %v1359
      %v1425 = vpop.f32.mrf.mxu0
      %v1426 = vadd.f32 0.0, %v1425
      %v1427 = vpop.f32.mrf.mxu0
      %v1428 = vpop.f32.mrf.mxu0
      %v1429 = vadd.f32 0.0, %v1428
      %v1430 = vpop.f32.mrf.mxu0
      %1431 = vmatprep.mubr.bf16.mxu0 0
      %1432 = vmatmul.mubr.bf16.gmra.mxu0 %v1362
      %v1433 = vpop.f32.mrf.mxu0
      %v1434 = vadd.f32 0.0, %v1433
      %v1435 = vpop.f32.mrf.mxu0
      %v1436 = vpop.f32.mrf.mxu0
      %v1437 = vadd.f32 0.0, %v1436
      %v1438 = vpop.f32.mrf.mxu0
      %1439 = vdwg.mxu0
      %v1440 = vadd.f32 %v1322, %v1402
      %v1441 = vadd.f32 %v1323, %v1405
      %v1442 = vadd.f32 %v1324, %v1410
      %v1443 = vadd.f32 %v1325, %v1413
      %v1444 = vadd.f32 %v1326, %v1418
      %v1445 = vadd.f32 %v1327, %v1421
      %v1446 = vadd.f32 %v1328, %v1426
      %v1447 = vadd.f32 %v1329, %v1429
      %v1448 = vadd.f32 %v1330, %v1434
      %v1449 = vadd.f32 %v1331, %v1437
      %v1450 = vld [vmem:[%s4] sm:$0x1]
      %v1451 = vlaneseq
      %v1452 = vshrl.u32 %v1451, 7
      %v1453 = vsub.s32 0, %v1452
      %v1454 = vrot.slane %v1450, %v1453
      %v1455 = vadd.f32 %v1440, %v1454
      %v1456 = vadd.f32 %v1441, %v1454
      %v1457 = vadd.f32 %v1442, %v1454
      %v1458 = vadd.f32 %v1443, %v1454
      %v1459 = vadd.f32 %v1444, %v1454
      %v1460 = vadd.f32 %v1445, %v1454
      %v1461 = vadd.f32 %v1446, %v1454
      %v1462 = vadd.f32 %v1447, %v1454
      %v1463 = vadd.f32 %v1448, %v1454
      %v1464 = vadd.f32 %v1449, %v1454
      %v1465 = vmax.f32 %v1455, 0.0
      %v1466 = vmax.f32 %v1456, 0.0
      %v1467 = vmax.f32 %v1457, 0.0
      %v1468 = vmax.f32 %v1458, 0.0
      %v1469 = vmax.f32 %v1459, 0.0
      %v1470 = vmax.f32 %v1460, 0.0
      %v1471 = vmax.f32 %v1461, 0.0
      %v1472 = vmax.f32 %v1462, 0.0
      %v1473 = vmax.f32 %v1463, 0.0
      %v1474 = vmax.f32 %v1464, 0.0
      %v1475 = vsel %vm397, 1, 0
      %v1476 = vsel %vm398, 1, 0
      %v1477 = vsel %vm399, 1, 0
      %v1478 = vsel %vm400, 1, 0
      %v1479 = vsel %vm401, 1, 0
      %v1480 = vsel %vm402, 1, 0
      %v1481 = vsel %vm403, 1, 0
      %v1482 = vsel %vm404, 1, 0
      %v1483 = vsel %vm405, 1, 0
      %v1484 = vsel %vm406, 1, 0
      %vm1485 = vcmp.eq.s32.totalorder %v1475, 1
      %vm1486 = vcmp.eq.s32.totalorder %v1476, 1
      %vm1487 = vcmp.eq.s32.totalorder %v1477, 1
      %vm1488 = vcmp.eq.s32.totalorder %v1478, 1
      %vm1489 = vcmp.eq.s32.totalorder %v1479, 1
      %vm1490 = vcmp.eq.s32.totalorder %v1480, 1
      %vm1491 = vcmp.eq.s32.totalorder %v1481, 1
      %vm1492 = vcmp.eq.s32.totalorder %v1482, 1
      %vm1493 = vcmp.eq.s32.totalorder %v1483, 1
      %vm1494 = vcmp.eq.s32.totalorder %v1484, 1
      %v1495 = vsel %vm1485, %v1465, 0.0
      %v1496 = vsel %vm1486, %v1466, 0.0
      %v1497 = vsel %vm1487, %v1467, 0.0
      %v1498 = vsel %vm1488, %v1468, 0.0
      %v1499 = vsel %vm1489, %v1469, 0.0
      %v1500 = vsel %vm1490, %v1470, 0.0
      %v1501 = vsel %vm1491, %v1471, 0.0
      %v1502 = vsel %vm1492, %v1472, 0.0
      %v1503 = vsel %vm1493, %v1473, 0.0
      %v1504 = vsel %vm1494, %v1474, 0.0
      %1505 = vst [vmem:[#allocation2] sm:$0xff] 0.0
      %1506 = vst [vmem:[#allocation2 + $0x8] sm:$0xff] 0.0
      %1507 = vst [vmem:[#allocation2 + $0x10] sm:$0xff] 0.0
      %1508 = vst [vmem:[#allocation2 + $0x18] sm:$0xff] 0.0
      %1509 = vst [vmem:[#allocation2 + $0x20] sm:$0xff] 0.0
      %1510 = vst [vmem:[#allocation2 + $0x28] sm:$0xff] 0.0
      %1511 = vst [vmem:[#allocation2 + $0x30] sm:$0xff] 0.0
      %1512 = vst [vmem:[#allocation2 + $0x38] sm:$0xff] 0.0
      %1513 = vst [vmem:[#allocation2 + $0x40] sm:$0xff] 0.0
      %1514 = vst [vmem:[#allocation2 + $0x48] sm:$0xff] 0.0
      %1515 = vst [vmem:[#allocation2 + $0x50] sm:$0xff] 0.0
      %1516 = vst [vmem:[#allocation2 + $0x58] sm:$0xff] 0.0
      %1517 = vst [vmem:[#allocation2 + $0x60] sm:$0xff] 0.0
      %1518 = vst [vmem:[#allocation2 + $0x68] sm:$0xff] 0.0
      %1519 = vst [vmem:[#allocation2 + $0x10] sm:$0xff] %v1495
      %1520 = vst [vmem:[#allocation2 + $0x18] sm:$0xff] %v1496
      %1521 = vst [vmem:[#allocation2 + $0x20] sm:$0xff] %v1497
      %1522 = vst [vmem:[#allocation2 + $0x28] sm:$0xff] %v1498
      %1523 = vst [vmem:[#allocation2 + $0x30] sm:$0xff] %v1499
      %1524 = vst [vmem:[#allocation2 + $0x38] sm:$0xff] %v1500
      %1525 = vst [vmem:[#allocation2 + $0x40] sm:$0xff] %v1501
      %1526 = vst [vmem:[#allocation2 + $0x48] sm:$0xff] %v1502
      %1527 = vst [vmem:[#allocation2 + $0x50] sm:$0xff] %v1503
      %1528 = vst [vmem:[#allocation2 + $0x58] sm:$0xff] %v1504
      %v1529 = vld [vmem:[%s219 + $0x14a] sm:$0xff]
      %v1530 = vld [vmem:[%s219 + $0x152] sm:$0xff]
      %v1531 = vld [vmem:[%s219 + $0x15a] sm:$0xff]
      %v1532 = vld [vmem:[%s219 + $0x162] sm:$0xff]
      %v1533 = vld [vmem:[%s219 + $0x16a] sm:$0xff]
      %v1534 = vld [vmem:[%s219 + $0x172] sm:$0xff]
      %v1535 = vld [vmem:[%s219 + $0x17a] sm:$0xff]
      %v1536 = vld [vmem:[%s219 + $0x182] sm:$0xff]
      %v1537 = vld [vmem:[%s219 + $0x18a] sm:$0xff]
      %v1538 = vld [vmem:[%s219 + $0x192] sm:$0xff]
      %v1539 = vpack.c.bf16 %v1530, %v1529
      %v1540 = vpack.c.bf16 %v1532, %v1531
      %v1541 = vpack.c.bf16 %v1534, %v1533
      %v1542 = vpack.c.bf16 %v1536, %v1535
      %v1543 = vpack.c.bf16 %v1538, %v1537
      %v1544 = vld [vmem:[%s2] sm:$0x3]
      %v1545 = vld [vmem:[%s4 + $0x1] sm:$0x1]
      %v1546 = vlaneseq
      %v1547 = vshrl.u32 %v1546, 7
      %v1548 = vsub.s32 0, %v1547
      %v1549 = vrot.slane %v1545, %v1548
      %v1551 = vsel %vm440, %v1539, 0
      %v1554 = vsel %vm440, %v1540, 0
      %v1557 = vsel %vm440, %v1541, 0
      %v1560 = vsel %vm440, %v1542, 0
      %v1563 = vsel %vm440, %v1543, 0
      %v1566 = vsel %vm456, %v1544, 0
      %1568 = vmatprep.subr.bf16.mxu0 0
      %1569 = vmatpush1.bf16.msra.mxu0 0
      %1570 = vmatprep.subr.bf16.mxu0 0
      %1571 = vmatpush1.bf16.msra.mxu0 0
      %1572 = vmatprep.subr.bf16.mxu0 0
      %1573 = vmatpush1.bf16.msra.mxu0 0
      %1574 = vmatprep.subr.bf16.mxu0 0
      %1575 = vmatpush1.bf16.msra.mxu0 0
      %1576 = vmatprep.subr.bf16.mxu0 0
      %1577 = vmatpush1.bf16.msra.mxu0 0
      %1578 = vmatprep.subr.bf16.mxu0 0
      %1579 = vmatpush1.bf16.msra.mxu0 0
      %1580 = vmatprep.subr.bf16.mxu0 0
      %1581 = vmatpush1.bf16.msra.mxu0 0
      %1582 = vmatprep.subr.bf16.mxu0 0
      %1583 = vmatpush1.bf16.msra.mxu0 %v1566
      %1584 = vmatprep.subr.bf16.mxu0 0
      %1585 = vmatpush2.bf16.msra.mxu0 0
      %1586 = vmatprep.subr.bf16.mxu0 0
      %1587 = vmatpush2.bf16.msra.mxu0 0
      %1588 = vmatprep.subr.bf16.mxu0 0
      %1589 = vmatpush2.bf16.msra.mxu0 0
      %1590 = vmatprep.subr.bf16.mxu0 0
      %1591 = vmatpush2.bf16.msra.mxu0 0
      %1592 = vmatprep.subr.bf16.mxu0 0
      %1593 = vmatpush2.bf16.msra.mxu0 0
      %1594 = vmatprep.subr.bf16.mxu0 0
      %1595 = vmatpush2.bf16.msra.mxu0 0
      %1596 = vmatprep.subr.bf16.mxu0 0
      %1597 = vmatpush2.bf16.msra.mxu0 0
      %1598 = vmatprep.subr.bf16.mxu0 0
      %1599 = vmatpush2.bf16.msra.mxu0 0
      %1600 = vmatprep.mubr.bf16.mxu0 0
      %1601 = vmatmul.mubr.bf16.gmra.mxu0 %v1551
      %v1602 = vpop.f32.mrf.mxu0
      %v1603 = vadd.f32 %v1549, %v1602
      %v1604 = vpop.f32.mrf.mxu0
      %v1605 = vpop.f32.mrf.mxu0
      %v1606 = vadd.f32 %v1549, %v1605
      %v1607 = vpop.f32.mrf.mxu0
      %1608 = vmatprep.mubr.bf16.mxu0 0
      %1609 = vmatmul.mubr.bf16.gmra.mxu0 %v1554
      %v1610 = vpop.f32.mrf.mxu0
      %v1611 = vadd.f32 %v1549, %v1610
      %v1612 = vpop.f32.mrf.mxu0
      %v1613 = vpop.f32.mrf.mxu0
      %v1614 = vadd.f32 %v1549, %v1613
      %v1615 = vpop.f32.mrf.mxu0
      %1616 = vmatprep.mubr.bf16.mxu0 0
      %1617 = vmatmul.mubr.bf16.gmra.mxu0 %v1557
      %v1618 = vpop.f32.mrf.mxu0
      %v1619 = vadd.f32 %v1549, %v1618
      %v1620 = vpop.f32.mrf.mxu0
      %v1621 = vpop.f32.mrf.mxu0
      %v1622 = vadd.f32 %v1549, %v1621
      %v1623 = vpop.f32.mrf.mxu0
      %1624 = vmatprep.mubr.bf16.mxu0 0
      %1625 = vmatmul.mubr.bf16.gmra.mxu0 %v1560
      %v1626 = vpop.f32.mrf.mxu0
      %v1627 = vadd.f32 %v1549, %v1626
      %v1628 = vpop.f32.mrf.mxu0
      %v1629 = vpop.f32.mrf.mxu0
      %v1630 = vadd.f32 %v1549, %v1629
      %v1631 = vpop.f32.mrf.mxu0
      %1632 = vmatprep.mubr.bf16.mxu0 0
      %1633 = vmatmul.mubr.bf16.gmra.mxu0 %v1563
      %v1634 = vpop.f32.mrf.mxu0
      %v1635 = vadd.f32 %v1549, %v1634
      %v1636 = vpop.f32.mrf.mxu0
      %v1637 = vpop.f32.mrf.mxu0
      %v1638 = vadd.f32 %v1549, %v1637
      %v1639 = vpop.f32.mrf.mxu0
      %1640 = vdwg.mxu0
      %v1641 = vld [vmem:[#allocation2 + $0x5] sm:$0xff]
      %v1642 = vld [vmem:[#allocation2 + $0xd] sm:$0xff]
      %v1643 = vld [vmem:[#allocation2 + $0x15] sm:$0xff]
      %v1644 = vld [vmem:[#allocation2 + $0x1d] sm:$0xff]
      %v1645 = vld [vmem:[#allocation2 + $0x25] sm:$0xff]
      %v1646 = vld [vmem:[#allocation2 + $0x2d] sm:$0xff]
      %v1647 = vld [vmem:[#allocation2 + $0x35] sm:$0xff]
      %v1648 = vld [vmem:[#allocation2 + $0x3d] sm:$0xff]
      %v1649 = vld [vmem:[#allocation2 + $0x45] sm:$0xff]
      %v1650 = vld [vmem:[#allocation2 + $0x4d] sm:$0xff]
      %v1651 = vpack.c.bf16 %v1642, %v1641
      %v1652 = vpack.c.bf16 %v1644, %v1643
      %v1653 = vpack.c.bf16 %v1646, %v1645
      %v1654 = vpack.c.bf16 %v1648, %v1647
      %v1655 = vpack.c.bf16 %v1650, %v1649
      %v1656 = vld [vmem:[%s3] sm:$0xf]
      %v1657 = vld [vmem:[%s3 + $0x4] sm:$0xf]
      %v1658 = vld [vmem:[%s3 + $0x8] sm:$0xf]
      %v1659 = vld [vmem:[%s3 + $0xc] sm:$0xf]
      %v1660 = vld [vmem:[%s3 + $0x10] sm:$0xf]
      %v1661 = vld [vmem:[%s3 + $0x14] sm:$0xf]
      %v1662 = vld [vmem:[%s3 + $0x18] sm:$0xf]
      %v1663 = vld [vmem:[%s3 + $0x1c] sm:$0xf]
      %v1664 = vld [vmem:[%s3 + $0x20] sm:$0xf]
      %v1665 = vld [vmem:[%s3 + $0x24] sm:$0xf]
      %v1666 = vld [vmem:[%s3 + $0x28] sm:$0xf]
      %v1667 = vld [vmem:[%s3 + $0x2c] sm:$0xf]
      %v1668 = vld [vmem:[%s3 + $0x30] sm:$0xf]
      %v1669 = vld [vmem:[%s3 + $0x34] sm:$0xf]
      %v1670 = vld [vmem:[%s3 + $0x38] sm:$0xf]
      %v1671 = vld [vmem:[%s3 + $0x3c] sm:$0xf]
      %v1672 = vld [vmem:[#allocation2 + $0x6] sm:$0xff]
      %v1673 = vld [vmem:[#allocation2 + $0xe] sm:$0xff]
      %v1674 = vld [vmem:[#allocation2 + $0x16] sm:$0xff]
      %v1675 = vld [vmem:[#allocation2 + $0x1e] sm:$0xff]
      %v1676 = vld [vmem:[#allocation2 + $0x26] sm:$0xff]
      %v1677 = vld [vmem:[#allocation2 + $0x2e] sm:$0xff]
      %v1678 = vld [vmem:[#allocation2 + $0x36] sm:$0xff]
      %v1679 = vld [vmem:[#allocation2 + $0x3e] sm:$0xff]
      %v1680 = vld [vmem:[#allocation2 + $0x46] sm:$0xff]
      %v1681 = vld [vmem:[#allocation2 + $0x4e] sm:$0xff]
      %v1682 = vpack.c.bf16 %v1673, %v1672
      %v1683 = vpack.c.bf16 %v1675, %v1674
      %v1684 = vpack.c.bf16 %v1677, %v1676
      %v1685 = vpack.c.bf16 %v1679, %v1678
      %v1686 = vpack.c.bf16 %v1681, %v1680
      %s1687 = scalar_lea.vmem %s3, 64
      %v1688 = vld [vmem:[%s1687] sm:$0xf]
      %v1689 = vld [vmem:[%s1687 + $0x4] sm:$0xf]
      %v1690 = vld [vmem:[%s1687 + $0x8] sm:$0xf]
      %v1691 = vld [vmem:[%s1687 + $0xc] sm:$0xf]
      %v1692 = vld [vmem:[%s1687 + $0x10] sm:$0xf]
      %v1693 = vld [vmem:[%s1687 + $0x14] sm:$0xf]
      %v1694 = vld [vmem:[%s1687 + $0x18] sm:$0xf]
      %v1695 = vld [vmem:[%s1687 + $0x1c] sm:$0xf]
      %v1696 = vld [vmem:[%s1687 + $0x20] sm:$0xf]
      %v1697 = vld [vmem:[%s1687 + $0x24] sm:$0xf]
      %v1698 = vld [vmem:[%s1687 + $0x28] sm:$0xf]
      %v1699 = vld [vmem:[%s1687 + $0x2c] sm:$0xf]
      %v1700 = vld [vmem:[%s1687 + $0x30] sm:$0xf]
      %v1701 = vld [vmem:[%s1687 + $0x34] sm:$0xf]
      %v1702 = vld [vmem:[%s1687 + $0x38] sm:$0xf]
      %v1703 = vld [vmem:[%s1687 + $0x3c] sm:$0xf]
      %v1720 = vunpack.c.l.b16 %v1688
      %v1721 = vunpack.c.l.b16 %v1689
      %v1722 = vunpack.c.l.b16 %v1690
      %v1723 = vunpack.c.l.b16 %v1691
      %v1724 = vunpack.c.l.b16 %v1692
      %v1725 = vunpack.c.l.b16 %v1693
      %v1726 = vunpack.c.l.b16 %v1694
      %v1727 = vunpack.c.l.b16 %v1695
      %v1728 = vunpack.c.l.b16 %v1696
      %v1729 = vunpack.c.l.b16 %v1697
      %v1730 = vunpack.c.l.b16 %v1698
      %v1731 = vunpack.c.l.b16 %v1699
      %v1732 = vunpack.c.l.b16 %v1700
      %v1733 = vunpack.c.l.b16 %v1701
      %v1734 = vunpack.c.l.b16 %v1702
      %v1735 = vunpack.c.l.b16 %v1703
      %v1736 = vpack.c.b16 %v1721, %v1720
      %v1737 = vpack.c.b16 %v1723, %v1722
      %v1738 = vpack.c.b16 %v1725, %v1724
      %v1739 = vpack.c.b16 %v1727, %v1726
      %v1740 = vpack.c.b16 %v1729, %v1728
      %v1741 = vpack.c.b16 %v1731, %v1730
      %v1742 = vpack.c.b16 %v1733, %v1732
      %v1743 = vpack.c.b16 %v1735, %v1734
      %1752 = vmatprep.subr.bf16.mxu0 0
      %1753 = vmatpush1.bf16.msra.mxu0 %v1743
      %1754 = vmatprep.subr.bf16.mxu0 0
      %1755 = vmatpush1.bf16.msra.mxu0 %v1742
      %1756 = vmatprep.subr.bf16.mxu0 0
      %1757 = vmatpush1.bf16.msra.mxu0 %v1741
      %1758 = vmatprep.subr.bf16.mxu0 0
      %1759 = vmatpush1.bf16.msra.mxu0 %v1740
      %1760 = vmatprep.subr.bf16.mxu0 0
      %1761 = vmatpush1.bf16.msra.mxu0 %v1739
      %1762 = vmatprep.subr.bf16.mxu0 0
      %1763 = vmatpush1.bf16.msra.mxu0 %v1738
      %1764 = vmatprep.subr.bf16.mxu0 0
      %1765 = vmatpush1.bf16.msra.mxu0 %v1737
      %1766 = vmatprep.subr.bf16.mxu0 0
      %1767 = vmatpush1.bf16.msra.mxu0 %v1736
      %1768 = vmatprep.subr.bf16.mxu0 0
      %1769 = vmatpush2.bf16.msra.mxu0 0
      %1770 = vmatprep.subr.bf16.mxu0 0
      %1771 = vmatpush2.bf16.msra.mxu0 0
      %1772 = vmatprep.subr.bf16.mxu0 0
      %1773 = vmatpush2.bf16.msra.mxu0 0
      %1774 = vmatprep.subr.bf16.mxu0 0
      %1775 = vmatpush2.bf16.msra.mxu0 0
      %1776 = vmatprep.subr.bf16.mxu0 0
      %1777 = vmatpush2.bf16.msra.mxu0 0
      %1778 = vmatprep.subr.bf16.mxu0 0
      %1779 = vmatpush2.bf16.msra.mxu0 0
      %1780 = vmatprep.subr.bf16.mxu0 0
      %1781 = vmatpush2.bf16.msra.mxu0 0
      %1782 = vmatprep.subr.bf16.mxu0 0
      %1783 = vmatpush2.bf16.msra.mxu0 0
      %1784 = vmatprep.mubr.bf16.mxu0 0
      %1785 = vmatmul.mubr.bf16.gmra.mxu0 %v1682
      %v1786 = vpop.f32.mrf.mxu0
      %v1787 = vadd.f32 0.0, %v1786
      %v1788 = vpop.f32.mrf.mxu0
      %v1789 = vpop.f32.mrf.mxu0
      %v1790 = vadd.f32 0.0, %v1789
      %v1791 = vpop.f32.mrf.mxu0
      %1792 = vmatprep.mubr.bf16.mxu0 0
      %1793 = vmatmul.mubr.bf16.gmra.mxu0 %v1683
      %v1794 = vpop.f32.mrf.mxu0
      %v1795 = vadd.f32 0.0, %v1794
      %v1796 = vpop.f32.mrf.mxu0
      %v1797 = vpop.f32.mrf.mxu0
      %v1798 = vadd.f32 0.0, %v1797
      %v1799 = vpop.f32.mrf.mxu0
      %1800 = vmatprep.mubr.bf16.mxu0 0
      %1801 = vmatmul.mubr.bf16.gmra.mxu0 %v1684
      %v1802 = vpop.f32.mrf.mxu0
      %v1803 = vadd.f32 0.0, %v1802
      %v1804 = vpop.f32.mrf.mxu0
      %v1805 = vpop.f32.mrf.mxu0
      %v1806 = vadd.f32 0.0, %v1805
      %v1807 = vpop.f32.mrf.mxu0
      %1808 = vmatprep.mubr.bf16.mxu0 0
      %1809 = vmatmul.mubr.bf16.gmra.mxu0 %v1685
      %v1810 = vpop.f32.mrf.mxu0
      %v1811 = vadd.f32 0.0, %v1810
      %v1812 = vpop.f32.mrf.mxu0
      %v1813 = vpop.f32.mrf.mxu0
      %v1814 = vadd.f32 0.0, %v1813
      %v1815 = vpop.f32.mrf.mxu0
      %1816 = vmatprep.mubr.bf16.mxu0 0
      %1817 = vmatmul.mubr.bf16.gmra.mxu0 %v1686
      %v1818 = vpop.f32.mrf.mxu0
      %v1819 = vadd.f32 0.0, %v1818
      %v1820 = vpop.f32.mrf.mxu0
      %v1821 = vpop.f32.mrf.mxu0
      %v1822 = vadd.f32 0.0, %v1821
      %v1823 = vpop.f32.mrf.mxu0
      %1824 = vdwg.mxu0
      %v1841 = vunpack.c.l.b16 %v1656
      %v1842 = vunpack.c.l.b16 %v1657
      %v1843 = vunpack.c.l.b16 %v1658
      %v1844 = vunpack.c.l.b16 %v1659
      %v1845 = vunpack.c.l.b16 %v1660
      %v1846 = vunpack.c.l.b16 %v1661
      %v1847 = vunpack.c.l.b16 %v1662
      %v1848 = vunpack.c.l.b16 %v1663
      %v1849 = vunpack.c.l.b16 %v1664
      %v1850 = vunpack.c.l.b16 %v1665
      %v1851 = vunpack.c.l.b16 %v1666
      %v1852 = vunpack.c.l.b16 %v1667
      %v1853 = vunpack.c.l.b16 %v1668
      %v1854 = vunpack.c.l.b16 %v1669
      %v1855 = vunpack.c.l.b16 %v1670
      %v1856 = vunpack.c.l.b16 %v1671
      %v1857 = vpack.c.b16 %v1842, %v1841
      %v1858 = vpack.c.b16 %v1844, %v1843
      %v1859 = vpack.c.b16 %v1846, %v1845
      %v1860 = vpack.c.b16 %v1848, %v1847
      %v1861 = vpack.c.b16 %v1850, %v1849
      %v1862 = vpack.c.b16 %v1852, %v1851
      %v1863 = vpack.c.b16 %v1854, %v1853
      %v1864 = vpack.c.b16 %v1856, %v1855
      %1873 = vmatprep.subr.bf16.mxu0 0
      %1874 = vmatpush1.bf16.msra.mxu0 %v1864
      %1875 = vmatprep.subr.bf16.mxu0 0
      %1876 = vmatpush1.bf16.msra.mxu0 %v1863
      %1877 = vmatprep.subr.bf16.mxu0 0
      %1878 = vmatpush1.bf16.msra.mxu0 %v1862
      %1879 = vmatprep.subr.bf16.mxu0 0
      %1880 = vmatpush1.bf16.msra.mxu0 %v1861
      %1881 = vmatprep.subr.bf16.mxu0 0
      %1882 = vmatpush1.bf16.msra.mxu0 %v1860
      %1883 = vmatprep.subr.bf16.mxu0 0
      %1884 = vmatpush1.bf16.msra.mxu0 %v1859
      %1885 = vmatprep.subr.bf16.mxu0 0
      %1886 = vmatpush1.bf16.msra.mxu0 %v1858
      %1887 = vmatprep.subr.bf16.mxu0 0
      %1888 = vmatpush1.bf16.msra.mxu0 %v1857
      %1889 = vmatprep.subr.bf16.mxu0 0
      %1890 = vmatpush2.bf16.msra.mxu0 0
      %1891 = vmatprep.subr.bf16.mxu0 0
      %1892 = vmatpush2.bf16.msra.mxu0 0
      %1893 = vmatprep.subr.bf16.mxu0 0
      %1894 = vmatpush2.bf16.msra.mxu0 0
      %1895 = vmatprep.subr.bf16.mxu0 0
      %1896 = vmatpush2.bf16.msra.mxu0 0
      %1897 = vmatprep.subr.bf16.mxu0 0
      %1898 = vmatpush2.bf16.msra.mxu0 0
      %1899 = vmatprep.subr.bf16.mxu0 0
      %1900 = vmatpush2.bf16.msra.mxu0 0
      %1901 = vmatprep.subr.bf16.mxu0 0
      %1902 = vmatpush2.bf16.msra.mxu0 0
      %1903 = vmatprep.subr.bf16.mxu0 0
      %1904 = vmatpush2.bf16.msra.mxu0 0
      %1905 = vmatprep.mubr.bf16.mxu0 0
      %1906 = vmatmul.mubr.bf16.gmra.mxu0 %v1651
      %v1907 = vpop.f32.mrf.mxu0
      %v1908 = vadd.f32 %v1787, %v1907
      %v1909 = vpop.f32.mrf.mxu0
      %v1910 = vpop.f32.mrf.mxu0
      %v1911 = vadd.f32 %v1790, %v1910
      %v1912 = vpop.f32.mrf.mxu0
      %1913 = vmatprep.mubr.bf16.mxu0 0
      %1914 = vmatmul.mubr.bf16.gmra.mxu0 %v1652
      %v1915 = vpop.f32.mrf.mxu0
      %v1916 = vadd.f32 %v1795, %v1915
      %v1917 = vpop.f32.mrf.mxu0
      %v1918 = vpop.f32.mrf.mxu0
      %v1919 = vadd.f32 %v1798, %v1918
      %v1920 = vpop.f32.mrf.mxu0
      %1921 = vmatprep.mubr.bf16.mxu0 0
      %1922 = vmatmul.mubr.bf16.gmra.mxu0 %v1653
      %v1923 = vpop.f32.mrf.mxu0
      %v1924 = vadd.f32 %v1803, %v1923
      %v1925 = vpop.f32.mrf.mxu0
      %v1926 = vpop.f32.mrf.mxu0
      %v1927 = vadd.f32 %v1806, %v1926
      %v1928 = vpop.f32.mrf.mxu0
      %1929 = vmatprep.mubr.bf16.mxu0 0
      %1930 = vmatmul.mubr.bf16.gmra.mxu0 %v1654
      %v1931 = vpop.f32.mrf.mxu0
      %v1932 = vadd.f32 %v1811, %v1931
      %v1933 = vpop.f32.mrf.mxu0
      %v1934 = vpop.f32.mrf.mxu0
      %v1935 = vadd.f32 %v1814, %v1934
      %v1936 = vpop.f32.mrf.mxu0
      %1937 = vmatprep.mubr.bf16.mxu0 0
      %1938 = vmatmul.mubr.bf16.gmra.mxu0 %v1655
      %v1939 = vpop.f32.mrf.mxu0
      %v1940 = vadd.f32 %v1819, %v1939
      %v1941 = vpop.f32.mrf.mxu0
      %v1942 = vpop.f32.mrf.mxu0
      %v1943 = vadd.f32 %v1822, %v1942
      %v1944 = vpop.f32.mrf.mxu0
      %1945 = vdwg.mxu0
      %v1946 = vld [vmem:[#allocation2 + $0x7] sm:$0xff]
      %v1947 = vld [vmem:[#allocation2 + $0xf] sm:$0xff]
      %v1948 = vld [vmem:[#allocation2 + $0x17] sm:$0xff]
      %v1949 = vld [vmem:[#allocation2 + $0x1f] sm:$0xff]
      %v1950 = vld [vmem:[#allocation2 + $0x27] sm:$0xff]
      %v1951 = vld [vmem:[#allocation2 + $0x2f] sm:$0xff]
      %v1952 = vld [vmem:[#allocation2 + $0x37] sm:$0xff]
      %v1953 = vld [vmem:[#allocation2 + $0x3f] sm:$0xff]
      %v1954 = vld [vmem:[#allocation2 + $0x47] sm:$0xff]
      %v1955 = vld [vmem:[#allocation2 + $0x4f] sm:$0xff]
      %v1956 = vpack.c.bf16 %v1947, %v1946
      %v1957 = vpack.c.bf16 %v1949, %v1948
      %v1958 = vpack.c.bf16 %v1951, %v1950
      %v1959 = vpack.c.bf16 %v1953, %v1952
      %v1960 = vpack.c.bf16 %v1955, %v1954
      %s1961 = scalar_lea.vmem %s3, 128
      %v1962 = vld [vmem:[%s1961] sm:$0xf]
      %v1963 = vld [vmem:[%s1961 + $0x4] sm:$0xf]
      %v1964 = vld [vmem:[%s1961 + $0x8] sm:$0xf]
      %v1965 = vld [vmem:[%s1961 + $0xc] sm:$0xf]
      %v1966 = vld [vmem:[%s1961 + $0x10] sm:$0xf]
      %v1967 = vld [vmem:[%s1961 + $0x14] sm:$0xf]
      %v1968 = vld [vmem:[%s1961 + $0x18] sm:$0xf]
      %v1969 = vld [vmem:[%s1961 + $0x1c] sm:$0xf]
      %v1970 = vld [vmem:[%s1961 + $0x20] sm:$0xf]
      %v1971 = vld [vmem:[%s1961 + $0x24] sm:$0xf]
      %v1972 = vld [vmem:[%s1961 + $0x28] sm:$0xf]
      %v1973 = vld [vmem:[%s1961 + $0x2c] sm:$0xf]
      %v1974 = vld [vmem:[%s1961 + $0x30] sm:$0xf]
      %v1975 = vld [vmem:[%s1961 + $0x34] sm:$0xf]
      %v1976 = vld [vmem:[%s1961 + $0x38] sm:$0xf]
      %v1977 = vld [vmem:[%s1961 + $0x3c] sm:$0xf]
      %v1994 = vunpack.c.l.b16 %v1962
      %v1995 = vunpack.c.l.b16 %v1963
      %v1996 = vunpack.c.l.b16 %v1964
      %v1997 = vunpack.c.l.b16 %v1965
      %v1998 = vunpack.c.l.b16 %v1966
      %v1999 = vunpack.c.l.b16 %v1967
      %v2000 = vunpack.c.l.b16 %v1968
      %v2001 = vunpack.c.l.b16 %v1969
      %v2002 = vunpack.c.l.b16 %v1970
      %v2003 = vunpack.c.l.b16 %v1971
      %v2004 = vunpack.c.l.b16 %v1972
      %v2005 = vunpack.c.l.b16 %v1973
      %v2006 = vunpack.c.l.b16 %v1974
      %v2007 = vunpack.c.l.b16 %v1975
      %v2008 = vunpack.c.l.b16 %v1976
      %v2009 = vunpack.c.l.b16 %v1977
      %v2010 = vpack.c.b16 %v1995, %v1994
      %v2011 = vpack.c.b16 %v1997, %v1996
      %v2012 = vpack.c.b16 %v1999, %v1998
      %v2013 = vpack.c.b16 %v2001, %v2000
      %v2014 = vpack.c.b16 %v2003, %v2002
      %v2015 = vpack.c.b16 %v2005, %v2004
      %v2016 = vpack.c.b16 %v2007, %v2006
      %v2017 = vpack.c.b16 %v2009, %v2008
      %2026 = vmatprep.subr.bf16.mxu0 0
      %2027 = vmatpush1.bf16.msra.mxu0 %v2017
      %2028 = vmatprep.subr.bf16.mxu0 0
      %2029 = vmatpush1.bf16.msra.mxu0 %v2016
      %2030 = vmatprep.subr.bf16.mxu0 0
      %2031 = vmatpush1.bf16.msra.mxu0 %v2015
      %2032 = vmatprep.subr.bf16.mxu0 0
      %2033 = vmatpush1.bf16.msra.mxu0 %v2014
      %2034 = vmatprep.subr.bf16.mxu0 0
      %2035 = vmatpush1.bf16.msra.mxu0 %v2013
      %2036 = vmatprep.subr.bf16.mxu0 0
      %2037 = vmatpush1.bf16.msra.mxu0 %v2012
      %2038 = vmatprep.subr.bf16.mxu0 0
      %2039 = vmatpush1.bf16.msra.mxu0 %v2011
      %2040 = vmatprep.subr.bf16.mxu0 0
      %2041 = vmatpush1.bf16.msra.mxu0 %v2010
      %2042 = vmatprep.subr.bf16.mxu0 0
      %2043 = vmatpush2.bf16.msra.mxu0 0
      %2044 = vmatprep.subr.bf16.mxu0 0
      %2045 = vmatpush2.bf16.msra.mxu0 0
      %2046 = vmatprep.subr.bf16.mxu0 0
      %2047 = vmatpush2.bf16.msra.mxu0 0
      %2048 = vmatprep.subr.bf16.mxu0 0
      %2049 = vmatpush2.bf16.msra.mxu0 0
      %2050 = vmatprep.subr.bf16.mxu0 0
      %2051 = vmatpush2.bf16.msra.mxu0 0
      %2052 = vmatprep.subr.bf16.mxu0 0
      %2053 = vmatpush2.bf16.msra.mxu0 0
      %2054 = vmatprep.subr.bf16.mxu0 0
      %2055 = vmatpush2.bf16.msra.mxu0 0
      %2056 = vmatprep.subr.bf16.mxu0 0
      %2057 = vmatpush2.bf16.msra.mxu0 0
      %2058 = vmatprep.mubr.bf16.mxu0 0
      %2059 = vmatmul.mubr.bf16.gmra.mxu0 %v1956
      %v2060 = vpop.f32.mrf.mxu0
      %v2061 = vadd.f32 0.0, %v2060
      %v2062 = vpop.f32.mrf.mxu0
      %v2063 = vpop.f32.mrf.mxu0
      %v2064 = vadd.f32 0.0, %v2063
      %v2065 = vpop.f32.mrf.mxu0
      %2066 = vmatprep.mubr.bf16.mxu0 0
      %2067 = vmatmul.mubr.bf16.gmra.mxu0 %v1957
      %v2068 = vpop.f32.mrf.mxu0
      %v2069 = vadd.f32 0.0, %v2068
      %v2070 = vpop.f32.mrf.mxu0
      %v2071 = vpop.f32.mrf.mxu0
      %v2072 = vadd.f32 0.0, %v2071
      %v2073 = vpop.f32.mrf.mxu0
      %2074 = vmatprep.mubr.bf16.mxu0 0
      %2075 = vmatmul.mubr.bf16.gmra.mxu0 %v1958
      %v2076 = vpop.f32.mrf.mxu0
      %v2077 = vadd.f32 0.0, %v2076
      %v2078 = vpop.f32.mrf.mxu0
      %v2079 = vpop.f32.mrf.mxu0
      %v2080 = vadd.f32 0.0, %v2079
      %v2081 = vpop.f32.mrf.mxu0
      %2082 = vmatprep.mubr.bf16.mxu0 0
      %2083 = vmatmul.mubr.bf16.gmra.mxu0 %v1959
      %v2084 = vpop.f32.mrf.mxu0
      %v2085 = vadd.f32 0.0, %v2084
      %v2086 = vpop.f32.mrf.mxu0
      %v2087 = vpop.f32.mrf.mxu0
      %v2088 = vadd.f32 0.0, %v2087
      %v2089 = vpop.f32.mrf.mxu0
      %2090 = vmatprep.mubr.bf16.mxu0 0
      %2091 = vmatmul.mubr.bf16.gmra.mxu0 %v1960
      %v2092 = vpop.f32.mrf.mxu0
      %v2093 = vadd.f32 0.0, %v2092
      %v2094 = vpop.f32.mrf.mxu0
      %v2095 = vpop.f32.mrf.mxu0
      %v2096 = vadd.f32 0.0, %v2095
      %v2097 = vpop.f32.mrf.mxu0
      %2098 = vdwg.mxu0
      %v2099 = vadd.f32 %v1908, %v2061
      %v2100 = vadd.f32 %v1911, %v2064
      %v2101 = vadd.f32 %v1916, %v2069
      %v2102 = vadd.f32 %v1919, %v2072
      %v2103 = vadd.f32 %v1924, %v2077
      %v2104 = vadd.f32 %v1927, %v2080
      %v2105 = vadd.f32 %v1932, %v2085
      %v2106 = vadd.f32 %v1935, %v2088
      %v2107 = vadd.f32 %v1940, %v2093
      %v2108 = vadd.f32 %v1943, %v2096
      %v2109 = vld [vmem:[#allocation2 + $0xf] sm:$0xff]
      %v2110 = vld [vmem:[#allocation2 + $0x17] sm:$0xff]
      %v2111 = vld [vmem:[#allocation2 + $0x1f] sm:$0xff]
      %v2112 = vld [vmem:[#allocation2 + $0x27] sm:$0xff]
      %v2113 = vld [vmem:[#allocation2 + $0x2f] sm:$0xff]
      %v2114 = vld [vmem:[#allocation2 + $0x37] sm:$0xff]
      %v2115 = vld [vmem:[#allocation2 + $0x3f] sm:$0xff]
      %v2116 = vld [vmem:[#allocation2 + $0x47] sm:$0xff]
      %v2117 = vld [vmem:[#allocation2 + $0x4f] sm:$0xff]
      %v2118 = vld [vmem:[#allocation2 + $0x57] sm:$0xff]
      %v2119 = vpack.c.bf16 %v2110, %v2109
      %v2120 = vpack.c.bf16 %v2112, %v2111
      %v2121 = vpack.c.bf16 %v2114, %v2113
      %v2122 = vpack.c.bf16 %v2116, %v2115
      %v2123 = vpack.c.bf16 %v2118, %v2117
      %s2124 = scalar_lea.vmem %s3, 192
      %v2125 = vld [vmem:[%s2124] sm:$0xf]
      %v2126 = vld [vmem:[%s2124 + $0x4] sm:$0xf]
      %v2127 = vld [vmem:[%s2124 + $0x8] sm:$0xf]
      %v2128 = vld [vmem:[%s2124 + $0xc] sm:$0xf]
      %v2129 = vld [vmem:[%s2124 + $0x10] sm:$0xf]
      %v2130 = vld [vmem:[%s2124 + $0x14] sm:$0xf]
      %v2131 = vld [vmem:[%s2124 + $0x18] sm:$0xf]
      %v2132 = vld [vmem:[%s2124 + $0x1c] sm:$0xf]
      %v2133 = vld [vmem:[%s2124 + $0x20] sm:$0xf]
      %v2134 = vld [vmem:[%s2124 + $0x24] sm:$0xf]
      %v2135 = vld [vmem:[%s2124 + $0x28] sm:$0xf]
      %v2136 = vld [vmem:[%s2124 + $0x2c] sm:$0xf]
      %v2137 = vld [vmem:[%s2124 + $0x30] sm:$0xf]
      %v2138 = vld [vmem:[%s2124 + $0x34] sm:$0xf]
      %v2139 = vld [vmem:[%s2124 + $0x38] sm:$0xf]
      %v2140 = vld [vmem:[%s2124 + $0x3c] sm:$0xf]
      %v2157 = vunpack.c.l.b16 %v2125
      %v2158 = vunpack.c.l.b16 %v2126
      %v2159 = vunpack.c.l.b16 %v2127
      %v2160 = vunpack.c.l.b16 %v2128
      %v2161 = vunpack.c.l.b16 %v2129
      %v2162 = vunpack.c.l.b16 %v2130
      %v2163 = vunpack.c.l.b16 %v2131
      %v2164 = vunpack.c.l.b16 %v2132
      %v2165 = vunpack.c.l.b16 %v2133
      %v2166 = vunpack.c.l.b16 %v2134
      %v2167 = vunpack.c.l.b16 %v2135
      %v2168 = vunpack.c.l.b16 %v2136
      %v2169 = vunpack.c.l.b16 %v2137
      %v2170 = vunpack.c.l.b16 %v2138
      %v2171 = vunpack.c.l.b16 %v2139
      %v2172 = vunpack.c.l.b16 %v2140
      %v2173 = vpack.c.b16 %v2158, %v2157
      %v2174 = vpack.c.b16 %v2160, %v2159
      %v2175 = vpack.c.b16 %v2162, %v2161
      %v2176 = vpack.c.b16 %v2164, %v2163
      %v2177 = vpack.c.b16 %v2166, %v2165
      %v2178 = vpack.c.b16 %v2168, %v2167
      %v2179 = vpack.c.b16 %v2170, %v2169
      %v2180 = vpack.c.b16 %v2172, %v2171
      %2189 = vmatprep.subr.bf16.mxu0 0
      %2190 = vmatpush1.bf16.msra.mxu0 %v2180
      %2191 = vmatprep.subr.bf16.mxu0 0
      %2192 = vmatpush1.bf16.msra.mxu0 %v2179
      %2193 = vmatprep.subr.bf16.mxu0 0
      %2194 = vmatpush1.bf16.msra.mxu0 %v2178
      %2195 = vmatprep.subr.bf16.mxu0 0
      %2196 = vmatpush1.bf16.msra.mxu0 %v2177
      %2197 = vmatprep.subr.bf16.mxu0 0
      %2198 = vmatpush1.bf16.msra.mxu0 %v2176
      %2199 = vmatprep.subr.bf16.mxu0 0
      %2200 = vmatpush1.bf16.msra.mxu0 %v2175
      %2201 = vmatprep.subr.bf16.mxu0 0
      %2202 = vmatpush1.bf16.msra.mxu0 %v2174
      %2203 = vmatprep.subr.bf16.mxu0 0
      %2204 = vmatpush1.bf16.msra.mxu0 %v2173
      %2205 = vmatprep.subr.bf16.mxu0 0
      %2206 = vmatpush2.bf16.msra.mxu0 0
      %2207 = vmatprep.subr.bf16.mxu0 0
      %2208 = vmatpush2.bf16.msra.mxu0 0
      %2209 = vmatprep.subr.bf16.mxu0 0
      %2210 = vmatpush2.bf16.msra.mxu0 0
      %2211 = vmatprep.subr.bf16.mxu0 0
      %2212 = vmatpush2.bf16.msra.mxu0 0
      %2213 = vmatprep.subr.bf16.mxu0 0
      %2214 = vmatpush2.bf16.msra.mxu0 0
      %2215 = vmatprep.subr.bf16.mxu0 0
      %2216 = vmatpush2.bf16.msra.mxu0 0
      %2217 = vmatprep.subr.bf16.mxu0 0
      %2218 = vmatpush2.bf16.msra.mxu0 0
      %2219 = vmatprep.subr.bf16.mxu0 0
      %2220 = vmatpush2.bf16.msra.mxu0 0
      %2221 = vmatprep.mubr.bf16.mxu0 0
      %2222 = vmatmul.mubr.bf16.gmra.mxu0 %v2119
      %v2223 = vpop.f32.mrf.mxu0
      %v2224 = vadd.f32 0.0, %v2223
      %v2225 = vpop.f32.mrf.mxu0
      %v2226 = vpop.f32.mrf.mxu0
      %v2227 = vadd.f32 0.0, %v2226
      %v2228 = vpop.f32.mrf.mxu0
      %2229 = vmatprep.mubr.bf16.mxu0 0
      %2230 = vmatmul.mubr.bf16.gmra.mxu0 %v2120
      %v2231 = vpop.f32.mrf.mxu0
      %v2232 = vadd.f32 0.0, %v2231
      %v2233 = vpop.f32.mrf.mxu0
      %v2234 = vpop.f32.mrf.mxu0
      %v2235 = vadd.f32 0.0, %v2234
      %v2236 = vpop.f32.mrf.mxu0
      %2237 = vmatprep.mubr.bf16.mxu0 0
      %2238 = vmatmul.mubr.bf16.gmra.mxu0 %v2121
      %v2239 = vpop.f32.mrf.mxu0
      %v2240 = vadd.f32 0.0, %v2239
      %v2241 = vpop.f32.mrf.mxu0
      %v2242 = vpop.f32.mrf.mxu0
      %v2243 = vadd.f32 0.0, %v2242
      %v2244 = vpop.f32.mrf.mxu0
      %2245 = vmatprep.mubr.bf16.mxu0 0
      %2246 = vmatmul.mubr.bf16.gmra.mxu0 %v2122
      %v2247 = vpop.f32.mrf.mxu0
      %v2248 = vadd.f32 0.0, %v2247
      %v2249 = vpop.f32.mrf.mxu0
      %v2250 = vpop.f32.mrf.mxu0
      %v2251 = vadd.f32 0.0, %v2250
      %v2252 = vpop.f32.mrf.mxu0
      %2253 = vmatprep.mubr.bf16.mxu0 0
      %2254 = vmatmul.mubr.bf16.gmra.mxu0 %v2123
      %v2255 = vpop.f32.mrf.mxu0
      %v2256 = vadd.f32 0.0, %v2255
      %v2257 = vpop.f32.mrf.mxu0
      %v2258 = vpop.f32.mrf.mxu0
      %v2259 = vadd.f32 0.0, %v2258
      %v2260 = vpop.f32.mrf.mxu0
      %2261 = vdwg.mxu0
      %v2262 = vadd.f32 %v2099, %v2224
      %v2263 = vadd.f32 %v2100, %v2227
      %v2264 = vadd.f32 %v2101, %v2232
      %v2265 = vadd.f32 %v2102, %v2235
      %v2266 = vadd.f32 %v2103, %v2240
      %v2267 = vadd.f32 %v2104, %v2243
      %v2268 = vadd.f32 %v2105, %v2248
      %v2269 = vadd.f32 %v2106, %v2251
      %v2270 = vadd.f32 %v2107, %v2256
      %v2271 = vadd.f32 %v2108, %v2259
      %v2272 = vld [vmem:[#allocation2 + $0x10] sm:$0xff]
      %v2273 = vld [vmem:[#allocation2 + $0x18] sm:$0xff]
      %v2274 = vld [vmem:[#allocation2 + $0x20] sm:$0xff]
      %v2275 = vld [vmem:[#allocation2 + $0x28] sm:$0xff]
      %v2276 = vld [vmem:[#allocation2 + $0x30] sm:$0xff]
      %v2277 = vld [vmem:[#allocation2 + $0x38] sm:$0xff]
      %v2278 = vld [vmem:[#allocation2 + $0x40] sm:$0xff]
      %v2279 = vld [vmem:[#allocation2 + $0x48] sm:$0xff]
      %v2280 = vld [vmem:[#allocation2 + $0x50] sm:$0xff]
      %v2281 = vld [vmem:[#allocation2 + $0x58] sm:$0xff]
      %v2282 = vpack.c.bf16 %v2273, %v2272
      %v2283 = vpack.c.bf16 %v2275, %v2274
      %v2284 = vpack.c.bf16 %v2277, %v2276
      %v2285 = vpack.c.bf16 %v2279, %v2278
      %v2286 = vpack.c.bf16 %v2281, %v2280
      %s2287 = scalar_lea.vmem %s3, 256
      %v2288 = vld [vmem:[%s2287] sm:$0xf]
      %v2289 = vld [vmem:[%s2287 + $0x4] sm:$0xf]
      %v2290 = vld [vmem:[%s2287 + $0x8] sm:$0xf]
      %v2291 = vld [vmem:[%s2287 + $0xc] sm:$0xf]
      %v2292 = vld [vmem:[%s2287 + $0x10] sm:$0xf]
      %v2293 = vld [vmem:[%s2287 + $0x14] sm:$0xf]
      %v2294 = vld [vmem:[%s2287 + $0x18] sm:$0xf]
      %v2295 = vld [vmem:[%s2287 + $0x1c] sm:$0xf]
      %v2296 = vld [vmem:[%s2287 + $0x20] sm:$0xf]
      %v2297 = vld [vmem:[%s2287 + $0x24] sm:$0xf]
      %v2298 = vld [vmem:[%s2287 + $0x28] sm:$0xf]
      %v2299 = vld [vmem:[%s2287 + $0x2c] sm:$0xf]
      %v2300 = vld [vmem:[%s2287 + $0x30] sm:$0xf]
      %v2301 = vld [vmem:[%s2287 + $0x34] sm:$0xf]
      %v2302 = vld [vmem:[%s2287 + $0x38] sm:$0xf]
      %v2303 = vld [vmem:[%s2287 + $0x3c] sm:$0xf]
      %v2320 = vunpack.c.l.b16 %v2288
      %v2321 = vunpack.c.l.b16 %v2289
      %v2322 = vunpack.c.l.b16 %v2290
      %v2323 = vunpack.c.l.b16 %v2291
      %v2324 = vunpack.c.l.b16 %v2292
      %v2325 = vunpack.c.l.b16 %v2293
      %v2326 = vunpack.c.l.b16 %v2294
      %v2327 = vunpack.c.l.b16 %v2295
      %v2328 = vunpack.c.l.b16 %v2296
      %v2329 = vunpack.c.l.b16 %v2297
      %v2330 = vunpack.c.l.b16 %v2298
      %v2331 = vunpack.c.l.b16 %v2299
      %v2332 = vunpack.c.l.b16 %v2300
      %v2333 = vunpack.c.l.b16 %v2301
      %v2334 = vunpack.c.l.b16 %v2302
      %v2335 = vunpack.c.l.b16 %v2303
      %v2336 = vpack.c.b16 %v2321, %v2320
      %v2337 = vpack.c.b16 %v2323, %v2322
      %v2338 = vpack.c.b16 %v2325, %v2324
      %v2339 = vpack.c.b16 %v2327, %v2326
      %v2340 = vpack.c.b16 %v2329, %v2328
      %v2341 = vpack.c.b16 %v2331, %v2330
      %v2342 = vpack.c.b16 %v2333, %v2332
      %v2343 = vpack.c.b16 %v2335, %v2334
      %2352 = vmatprep.subr.bf16.mxu0 0
      %2353 = vmatpush1.bf16.msra.mxu0 %v2343
      %2354 = vmatprep.subr.bf16.mxu0 0
      %2355 = vmatpush1.bf16.msra.mxu0 %v2342
      %2356 = vmatprep.subr.bf16.mxu0 0
      %2357 = vmatpush1.bf16.msra.mxu0 %v2341
      %2358 = vmatprep.subr.bf16.mxu0 0
      %2359 = vmatpush1.bf16.msra.mxu0 %v2340
      %2360 = vmatprep.subr.bf16.mxu0 0
      %2361 = vmatpush1.bf16.msra.mxu0 %v2339
      %2362 = vmatprep.subr.bf16.mxu0 0
      %2363 = vmatpush1.bf16.msra.mxu0 %v2338
      %2364 = vmatprep.subr.bf16.mxu0 0
      %2365 = vmatpush1.bf16.msra.mxu0 %v2337
      %2366 = vmatprep.subr.bf16.mxu0 0
      %2367 = vmatpush1.bf16.msra.mxu0 %v2336
      %2368 = vmatprep.subr.bf16.mxu0 0
      %2369 = vmatpush2.bf16.msra.mxu0 0
      %2370 = vmatprep.subr.bf16.mxu0 0
      %2371 = vmatpush2.bf16.msra.mxu0 0
      %2372 = vmatprep.subr.bf16.mxu0 0
      %2373 = vmatpush2.bf16.msra.mxu0 0
      %2374 = vmatprep.subr.bf16.mxu0 0
      %2375 = vmatpush2.bf16.msra.mxu0 0
      %2376 = vmatprep.subr.bf16.mxu0 0
      %2377 = vmatpush2.bf16.msra.mxu0 0
      %2378 = vmatprep.subr.bf16.mxu0 0
      %2379 = vmatpush2.bf16.msra.mxu0 0
      %2380 = vmatprep.subr.bf16.mxu0 0
      %2381 = vmatpush2.bf16.msra.mxu0 0
      %2382 = vmatprep.subr.bf16.mxu0 0
      %2383 = vmatpush2.bf16.msra.mxu0 0
      %2384 = vmatprep.mubr.bf16.mxu0 0
      %2385 = vmatmul.mubr.bf16.gmra.mxu0 %v2282
      %v2386 = vpop.f32.mrf.mxu0
      %v2387 = vadd.f32 0.0, %v2386
      %v2388 = vpop.f32.mrf.mxu0
      %v2389 = vpop.f32.mrf.mxu0
      %v2390 = vadd.f32 0.0, %v2389
      %v2391 = vpop.f32.mrf.mxu0
      %2392 = vmatprep.mubr.bf16.mxu0 0
      %2393 = vmatmul.mubr.bf16.gmra.mxu0 %v2283
      %v2394 = vpop.f32.mrf.mxu0
      %v2395 = vadd.f32 0.0, %v2394
      %v2396 = vpop.f32.mrf.mxu0
      %v2397 = vpop.f32.mrf.mxu0
      %v2398 = vadd.f32 0.0, %v2397
      %v2399 = vpop.f32.mrf.mxu0
      %2400 = vmatprep.mubr.bf16.mxu0 0
      %2401 = vmatmul.mubr.bf16.gmra.mxu0 %v2284
      %v2402 = vpop.f32.mrf.mxu0
      %v2403 = vadd.f32 0.0, %v2402
      %v2404 = vpop.f32.mrf.mxu0
      %v2405 = vpop.f32.mrf.mxu0
      %v2406 = vadd.f32 0.0, %v2405
      %v2407 = vpop.f32.mrf.mxu0
      %2408 = vmatprep.mubr.bf16.mxu0 0
      %2409 = vmatmul.mubr.bf16.gmra.mxu0 %v2285
      %v2410 = vpop.f32.mrf.mxu0
      %v2411 = vadd.f32 0.0, %v2410
      %v2412 = vpop.f32.mrf.mxu0
      %v2413 = vpop.f32.mrf.mxu0
      %v2414 = vadd.f32 0.0, %v2413
      %v2415 = vpop.f32.mrf.mxu0
      %2416 = vmatprep.mubr.bf16.mxu0 0
      %2417 = vmatmul.mubr.bf16.gmra.mxu0 %v2286
      %v2418 = vpop.f32.mrf.mxu0
      %v2419 = vadd.f32 0.0, %v2418
      %v2420 = vpop.f32.mrf.mxu0
      %v2421 = vpop.f32.mrf.mxu0
      %v2422 = vadd.f32 0.0, %v2421
      %v2423 = vpop.f32.mrf.mxu0
      %2424 = vdwg.mxu0
      %v2425 = vadd.f32 %v2262, %v2387
      %v2426 = vadd.f32 %v2263, %v2390
      %v2427 = vadd.f32 %v2264, %v2395
      %v2428 = vadd.f32 %v2265, %v2398
      %v2429 = vadd.f32 %v2266, %v2403
      %v2430 = vadd.f32 %v2267, %v2406
      %v2431 = vadd.f32 %v2268, %v2411
      %v2432 = vadd.f32 %v2269, %v2414
      %v2433 = vadd.f32 %v2270, %v2419
      %v2434 = vadd.f32 %v2271, %v2422
      %v2435 = vld [vmem:[#allocation2 + $0x11] sm:$0xff]
      %v2436 = vld [vmem:[#allocation2 + $0x19] sm:$0xff]
      %v2437 = vld [vmem:[#allocation2 + $0x21] sm:$0xff]
      %v2438 = vld [vmem:[#allocation2 + $0x29] sm:$0xff]
      %v2439 = vld [vmem:[#allocation2 + $0x31] sm:$0xff]
      %v2440 = vld [vmem:[#allocation2 + $0x39] sm:$0xff]
      %v2441 = vld [vmem:[#allocation2 + $0x41] sm:$0xff]
      %v2442 = vld [vmem:[#allocation2 + $0x49] sm:$0xff]
      %v2443 = vld [vmem:[#allocation2 + $0x51] sm:$0xff]
      %v2444 = vld [vmem:[#allocation2 + $0x59] sm:$0xff]
      %v2445 = vpack.c.bf16 %v2436, %v2435
      %v2446 = vpack.c.bf16 %v2438, %v2437
      %v2447 = vpack.c.bf16 %v2440, %v2439
      %v2448 = vpack.c.bf16 %v2442, %v2441
      %v2449 = vpack.c.bf16 %v2444, %v2443
      %s2450 = scalar_lea.vmem %s3, 320
      %v2451 = vld [vmem:[%s2450] sm:$0xf]
      %v2452 = vld [vmem:[%s2450 + $0x4] sm:$0xf]
      %v2453 = vld [vmem:[%s2450 + $0x8] sm:$0xf]
      %v2454 = vld [vmem:[%s2450 + $0xc] sm:$0xf]
      %v2455 = vld [vmem:[%s2450 + $0x10] sm:$0xf]
      %v2456 = vld [vmem:[%s2450 + $0x14] sm:$0xf]
      %v2457 = vld [vmem:[%s2450 + $0x18] sm:$0xf]
      %v2458 = vld [vmem:[%s2450 + $0x1c] sm:$0xf]
      %v2459 = vld [vmem:[%s2450 + $0x20] sm:$0xf]
      %v2460 = vld [vmem:[%s2450 + $0x24] sm:$0xf]
      %v2461 = vld [vmem:[%s2450 + $0x28] sm:$0xf]
      %v2462 = vld [vmem:[%s2450 + $0x2c] sm:$0xf]
      %v2463 = vld [vmem:[%s2450 + $0x30] sm:$0xf]
      %v2464 = vld [vmem:[%s2450 + $0x34] sm:$0xf]
      %v2465 = vld [vmem:[%s2450 + $0x38] sm:$0xf]
      %v2466 = vld [vmem:[%s2450 + $0x3c] sm:$0xf]
      %v2483 = vunpack.c.l.b16 %v2451
      %v2484 = vunpack.c.l.b16 %v2452
      %v2485 = vunpack.c.l.b16 %v2453
      %v2486 = vunpack.c.l.b16 %v2454
      %v2487 = vunpack.c.l.b16 %v2455
      %v2488 = vunpack.c.l.b16 %v2456
      %v2489 = vunpack.c.l.b16 %v2457
      %v2490 = vunpack.c.l.b16 %v2458
      %v2491 = vunpack.c.l.b16 %v2459
      %v2492 = vunpack.c.l.b16 %v2460
      %v2493 = vunpack.c.l.b16 %v2461
      %v2494 = vunpack.c.l.b16 %v2462
      %v2495 = vunpack.c.l.b16 %v2463
      %v2496 = vunpack.c.l.b16 %v2464
      %v2497 = vunpack.c.l.b16 %v2465
      %v2498 = vunpack.c.l.b16 %v2466
      %v2499 = vpack.c.b16 %v2484, %v2483
      %v2500 = vpack.c.b16 %v2486, %v2485
      %v2501 = vpack.c.b16 %v2488, %v2487
      %v2502 = vpack.c.b16 %v2490, %v2489
      %v2503 = vpack.c.b16 %v2492, %v2491
      %v2504 = vpack.c.b16 %v2494, %v2493
      %v2505 = vpack.c.b16 %v2496, %v2495
      %v2506 = vpack.c.b16 %v2498, %v2497
      %2515 = vmatprep.subr.bf16.mxu0 0
      %2516 = vmatpush1.bf16.msra.mxu0 %v2506
      %2517 = vmatprep.subr.bf16.mxu0 0
      %2518 = vmatpush1.bf16.msra.mxu0 %v2505
      %2519 = vmatprep.subr.bf16.mxu0 0
      %2520 = vmatpush1.bf16.msra.mxu0 %v2504
      %2521 = vmatprep.subr.bf16.mxu0 0
      %2522 = vmatpush1.bf16.msra.mxu0 %v2503
      %2523 = vmatprep.subr.bf16.mxu0 0
      %2524 = vmatpush1.bf16.msra.mxu0 %v2502
      %2525 = vmatprep.subr.bf16.mxu0 0
      %2526 = vmatpush1.bf16.msra.mxu0 %v2501
      %2527 = vmatprep.subr.bf16.mxu0 0
      %2528 = vmatpush1.bf16.msra.mxu0 %v2500
      %2529 = vmatprep.subr.bf16.mxu0 0
      %2530 = vmatpush1.bf16.msra.mxu0 %v2499
      %2531 = vmatprep.subr.bf16.mxu0 0
      %2532 = vmatpush2.bf16.msra.mxu0 0
      %2533 = vmatprep.subr.bf16.mxu0 0
      %2534 = vmatpush2.bf16.msra.mxu0 0
      %2535 = vmatprep.subr.bf16.mxu0 0
      %2536 = vmatpush2.bf16.msra.mxu0 0
      %2537 = vmatprep.subr.bf16.mxu0 0
      %2538 = vmatpush2.bf16.msra.mxu0 0
      %2539 = vmatprep.subr.bf16.mxu0 0
      %2540 = vmatpush2.bf16.msra.mxu0 0
      %2541 = vmatprep.subr.bf16.mxu0 0
      %2542 = vmatpush2.bf16.msra.mxu0 0
      %2543 = vmatprep.subr.bf16.mxu0 0
      %2544 = vmatpush2.bf16.msra.mxu0 0
      %2545 = vmatprep.subr.bf16.mxu0 0
      %2546 = vmatpush2.bf16.msra.mxu0 0
      %2547 = vmatprep.mubr.bf16.mxu0 0
      %2548 = vmatmul.mubr.bf16.gmra.mxu0 %v2445
      %v2549 = vpop.f32.mrf.mxu0
      %v2550 = vadd.f32 0.0, %v2549
      %v2551 = vpop.f32.mrf.mxu0
      %v2552 = vpop.f32.mrf.mxu0
      %v2553 = vadd.f32 0.0, %v2552
      %v2554 = vpop.f32.mrf.mxu0
      %2555 = vmatprep.mubr.bf16.mxu0 0
      %2556 = vmatmul.mubr.bf16.gmra.mxu0 %v2446
      %v2557 = vpop.f32.mrf.mxu0
      %v2558 = vadd.f32 0.0, %v2557
      %v2559 = vpop.f32.mrf.mxu0
      %v2560 = vpop.f32.mrf.mxu0
      %v2561 = vadd.f32 0.0, %v2560
      %v2562 = vpop.f32.mrf.mxu0
      %2563 = vmatprep.mubr.bf16.mxu0 0
      %2564 = vmatmul.mubr.bf16.gmra.mxu0 %v2447
      %v2565 = vpop.f32.mrf.mxu0
      %v2566 = vadd.f32 0.0, %v2565
      %v2567 = vpop.f32.mrf.mxu0
      %v2568 = vpop.f32.mrf.mxu0
      %v2569 = vadd.f32 0.0, %v2568
      %v2570 = vpop.f32.mrf.mxu0
      %2571 = vmatprep.mubr.bf16.mxu0 0
      %2572 = vmatmul.mubr.bf16.gmra.mxu0 %v2448
      %v2573 = vpop.f32.mrf.mxu0
      %v2574 = vadd.f32 0.0, %v2573
      %v2575 = vpop.f32.mrf.mxu0
      %v2576 = vpop.f32.mrf.mxu0
      %v2577 = vadd.f32 0.0, %v2576
      %v2578 = vpop.f32.mrf.mxu0
      %2579 = vmatprep.mubr.bf16.mxu0 0
      %2580 = vmatmul.mubr.bf16.gmra.mxu0 %v2449
      %v2581 = vpop.f32.mrf.mxu0
      %v2582 = vadd.f32 0.0, %v2581
      %v2583 = vpop.f32.mrf.mxu0
      %v2584 = vpop.f32.mrf.mxu0
      %v2585 = vadd.f32 0.0, %v2584
      %v2586 = vpop.f32.mrf.mxu0
      %2587 = vdwg.mxu0
      %v2588 = vadd.f32 %v2425, %v2550
      %v2589 = vadd.f32 %v2426, %v2553
      %v2590 = vadd.f32 %v2427, %v2558
      %v2591 = vadd.f32 %v2428, %v2561
      %v2592 = vadd.f32 %v2429, %v2566
      %v2593 = vadd.f32 %v2430, %v2569
      %v2594 = vadd.f32 %v2431, %v2574
      %v2595 = vadd.f32 %v2432, %v2577
      %v2596 = vadd.f32 %v2433, %v2582
      %v2597 = vadd.f32 %v2434, %v2585
      %v2598 = vld [vmem:[#allocation2 + $0x19] sm:$0xff]
      %v2599 = vld [vmem:[#allocation2 + $0x21] sm:$0xff]
      %v2600 = vld [vmem:[#allocation2 + $0x29] sm:$0xff]
      %v2601 = vld [vmem:[#allocation2 + $0x31] sm:$0xff]
      %v2602 = vld [vmem:[#allocation2 + $0x39] sm:$0xff]
      %v2603 = vld [vmem:[#allocation2 + $0x41] sm:$0xff]
      %v2604 = vld [vmem:[#allocation2 + $0x49] sm:$0xff]
      %v2605 = vld [vmem:[#allocation2 + $0x51] sm:$0xff]
      %v2606 = vld [vmem:[#allocation2 + $0x59] sm:$0xff]
      %v2607 = vld [vmem:[#allocation2 + $0x61] sm:$0xff]
      %v2608 = vpack.c.bf16 %v2599, %v2598
      %v2609 = vpack.c.bf16 %v2601, %v2600
      %v2610 = vpack.c.bf16 %v2603, %v2602
      %v2611 = vpack.c.bf16 %v2605, %v2604
      %v2612 = vpack.c.bf16 %v2607, %v2606
      %s2613 = scalar_lea.vmem %s3, 384
      %v2614 = vld [vmem:[%s2613] sm:$0xf]
      %v2615 = vld [vmem:[%s2613 + $0x4] sm:$0xf]
      %v2616 = vld [vmem:[%s2613 + $0x8] sm:$0xf]
      %v2617 = vld [vmem:[%s2613 + $0xc] sm:$0xf]
      %v2618 = vld [vmem:[%s2613 + $0x10] sm:$0xf]
      %v2619 = vld [vmem:[%s2613 + $0x14] sm:$0xf]
      %v2620 = vld [vmem:[%s2613 + $0x18] sm:$0xf]
      %v2621 = vld [vmem:[%s2613 + $0x1c] sm:$0xf]
      %v2622 = vld [vmem:[%s2613 + $0x20] sm:$0xf]
      %v2623 = vld [vmem:[%s2613 + $0x24] sm:$0xf]
      %v2624 = vld [vmem:[%s2613 + $0x28] sm:$0xf]
      %v2625 = vld [vmem:[%s2613 + $0x2c] sm:$0xf]
      %v2626 = vld [vmem:[%s2613 + $0x30] sm:$0xf]
      %v2627 = vld [vmem:[%s2613 + $0x34] sm:$0xf]
      %v2628 = vld [vmem:[%s2613 + $0x38] sm:$0xf]
      %v2629 = vld [vmem:[%s2613 + $0x3c] sm:$0xf]
      %v2646 = vunpack.c.l.b16 %v2614
      %v2647 = vunpack.c.l.b16 %v2615
      %v2648 = vunpack.c.l.b16 %v2616
      %v2649 = vunpack.c.l.b16 %v2617
      %v2650 = vunpack.c.l.b16 %v2618
      %v2651 = vunpack.c.l.b16 %v2619
      %v2652 = vunpack.c.l.b16 %v2620
      %v2653 = vunpack.c.l.b16 %v2621
      %v2654 = vunpack.c.l.b16 %v2622
      %v2655 = vunpack.c.l.b16 %v2623
      %v2656 = vunpack.c.l.b16 %v2624
      %v2657 = vunpack.c.l.b16 %v2625
      %v2658 = vunpack.c.l.b16 %v2626
      %v2659 = vunpack.c.l.b16 %v2627
      %v2660 = vunpack.c.l.b16 %v2628
      %v2661 = vunpack.c.l.b16 %v2629
      %v2662 = vpack.c.b16 %v2647, %v2646
      %v2663 = vpack.c.b16 %v2649, %v2648
      %v2664 = vpack.c.b16 %v2651, %v2650
      %v2665 = vpack.c.b16 %v2653, %v2652
      %v2666 = vpack.c.b16 %v2655, %v2654
      %v2667 = vpack.c.b16 %v2657, %v2656
      %v2668 = vpack.c.b16 %v2659, %v2658
      %v2669 = vpack.c.b16 %v2661, %v2660
      %2678 = vmatprep.subr.bf16.mxu0 0
      %2679 = vmatpush1.bf16.msra.mxu0 %v2669
      %2680 = vmatprep.subr.bf16.mxu0 0
      %2681 = vmatpush1.bf16.msra.mxu0 %v2668
      %2682 = vmatprep.subr.bf16.mxu0 0
      %2683 = vmatpush1.bf16.msra.mxu0 %v2667
      %2684 = vmatprep.subr.bf16.mxu0 0
      %2685 = vmatpush1.bf16.msra.mxu0 %v2666
      %2686 = vmatprep.subr.bf16.mxu0 0
      %2687 = vmatpush1.bf16.msra.mxu0 %v2665
      %2688 = vmatprep.subr.bf16.mxu0 0
      %2689 = vmatpush1.bf16.msra.mxu0 %v2664
      %2690 = vmatprep.subr.bf16.mxu0 0
      %2691 = vmatpush1.bf16.msra.mxu0 %v2663
      %2692 = vmatprep.subr.bf16.mxu0 0
      %2693 = vmatpush1.bf16.msra.mxu0 %v2662
      %2694 = vmatprep.subr.bf16.mxu0 0
      %2695 = vmatpush2.bf16.msra.mxu0 0
      %2696 = vmatprep.subr.bf16.mxu0 0
      %2697 = vmatpush2.bf16.msra.mxu0 0
      %2698 = vmatprep.subr.bf16.mxu0 0
      %2699 = vmatpush2.bf16.msra.mxu0 0
      %2700 = vmatprep.subr.bf16.mxu0 0
      %2701 = vmatpush2.bf16.msra.mxu0 0
      %2702 = vmatprep.subr.bf16.mxu0 0
      %2703 = vmatpush2.bf16.msra.mxu0 0
      %2704 = vmatprep.subr.bf16.mxu0 0
      %2705 = vmatpush2.bf16.msra.mxu0 0
      %2706 = vmatprep.subr.bf16.mxu0 0
      %2707 = vmatpush2.bf16.msra.mxu0 0
      %2708 = vmatprep.subr.bf16.mxu0 0
      %2709 = vmatpush2.bf16.msra.mxu0 0
      %2710 = vmatprep.mubr.bf16.mxu0 0
      %2711 = vmatmul.mubr.bf16.gmra.mxu0 %v2608
      %v2712 = vpop.f32.mrf.mxu0
      %v2713 = vadd.f32 0.0, %v2712
      %v2714 = vpop.f32.mrf.mxu0
      %v2715 = vpop.f32.mrf.mxu0
      %v2716 = vadd.f32 0.0, %v2715
      %v2717 = vpop.f32.mrf.mxu0
      %2718 = vmatprep.mubr.bf16.mxu0 0
      %2719 = vmatmul.mubr.bf16.gmra.mxu0 %v2609
      %v2720 = vpop.f32.mrf.mxu0
      %v2721 = vadd.f32 0.0, %v2720
      %v2722 = vpop.f32.mrf.mxu0
      %v2723 = vpop.f32.mrf.mxu0
      %v2724 = vadd.f32 0.0, %v2723
      %v2725 = vpop.f32.mrf.mxu0
      %2726 = vmatprep.mubr.bf16.mxu0 0
      %2727 = vmatmul.mubr.bf16.gmra.mxu0 %v2610
      %v2728 = vpop.f32.mrf.mxu0
      %v2729 = vadd.f32 0.0, %v2728
      %v2730 = vpop.f32.mrf.mxu0
      %v2731 = vpop.f32.mrf.mxu0
      %v2732 = vadd.f32 0.0, %v2731
      %v2733 = vpop.f32.mrf.mxu0
      %2734 = vmatprep.mubr.bf16.mxu0 0
      %2735 = vmatmul.mubr.bf16.gmra.mxu0 %v2611
      %v2736 = vpop.f32.mrf.mxu0
      %v2737 = vadd.f32 0.0, %v2736
      %v2738 = vpop.f32.mrf.mxu0
      %v2739 = vpop.f32.mrf.mxu0
      %v2740 = vadd.f32 0.0, %v2739
      %v2741 = vpop.f32.mrf.mxu0
      %2742 = vmatprep.mubr.bf16.mxu0 0
      %2743 = vmatmul.mubr.bf16.gmra.mxu0 %v2612
      %v2744 = vpop.f32.mrf.mxu0
      %v2745 = vadd.f32 0.0, %v2744
      %v2746 = vpop.f32.mrf.mxu0
      %v2747 = vpop.f32.mrf.mxu0
      %v2748 = vadd.f32 0.0, %v2747
      %v2749 = vpop.f32.mrf.mxu0
      %2750 = vdwg.mxu0
      %v2751 = vadd.f32 %v2588, %v2713
      %v2752 = vadd.f32 %v2589, %v2716
      %v2753 = vadd.f32 %v2590, %v2721
      %v2754 = vadd.f32 %v2591, %v2724
      %v2755 = vadd.f32 %v2592, %v2729
      %v2756 = vadd.f32 %v2593, %v2732
      %v2757 = vadd.f32 %v2594, %v2737
      %v2758 = vadd.f32 %v2595, %v2740
      %v2759 = vadd.f32 %v2596, %v2745
      %v2760 = vadd.f32 %v2597, %v2748
      %v2761 = vld [vmem:[#allocation2 + $0x1a] sm:$0xff]
      %v2762 = vld [vmem:[#allocation2 + $0x22] sm:$0xff]
      %v2763 = vld [vmem:[#allocation2 + $0x2a] sm:$0xff]
      %v2764 = vld [vmem:[#allocation2 + $0x32] sm:$0xff]
      %v2765 = vld [vmem:[#allocation2 + $0x3a] sm:$0xff]
      %v2766 = vld [vmem:[#allocation2 + $0x42] sm:$0xff]
      %v2767 = vld [vmem:[#allocation2 + $0x4a] sm:$0xff]
      %v2768 = vld [vmem:[#allocation2 + $0x52] sm:$0xff]
      %v2769 = vld [vmem:[#allocation2 + $0x5a] sm:$0xff]
      %v2770 = vld [vmem:[#allocation2 + $0x62] sm:$0xff]
      %v2771 = vpack.c.bf16 %v2762, %v2761
      %v2772 = vpack.c.bf16 %v2764, %v2763
      %v2773 = vpack.c.bf16 %v2766, %v2765
      %v2774 = vpack.c.bf16 %v2768, %v2767
      %v2775 = vpack.c.bf16 %v2770, %v2769
      %s2776 = scalar_lea.vmem %s3, 448
      %v2777 = vld [vmem:[%s2776] sm:$0xf]
      %v2778 = vld [vmem:[%s2776 + $0x4] sm:$0xf]
      %v2779 = vld [vmem:[%s2776 + $0x8] sm:$0xf]
      %v2780 = vld [vmem:[%s2776 + $0xc] sm:$0xf]
      %v2781 = vld [vmem:[%s2776 + $0x10] sm:$0xf]
      %v2782 = vld [vmem:[%s2776 + $0x14] sm:$0xf]
      %v2783 = vld [vmem:[%s2776 + $0x18] sm:$0xf]
      %v2784 = vld [vmem:[%s2776 + $0x1c] sm:$0xf]
      %v2785 = vld [vmem:[%s2776 + $0x20] sm:$0xf]
      %v2786 = vld [vmem:[%s2776 + $0x24] sm:$0xf]
      %v2787 = vld [vmem:[%s2776 + $0x28] sm:$0xf]
      %v2788 = vld [vmem:[%s2776 + $0x2c] sm:$0xf]
      %v2789 = vld [vmem:[%s2776 + $0x30] sm:$0xf]
      %v2790 = vld [vmem:[%s2776 + $0x34] sm:$0xf]
      %v2791 = vld [vmem:[%s2776 + $0x38] sm:$0xf]
      %v2792 = vld [vmem:[%s2776 + $0x3c] sm:$0xf]
      %v2809 = vunpack.c.l.b16 %v2777
      %v2810 = vunpack.c.l.b16 %v2778
      %v2811 = vunpack.c.l.b16 %v2779
      %v2812 = vunpack.c.l.b16 %v2780
      %v2813 = vunpack.c.l.b16 %v2781
      %v2814 = vunpack.c.l.b16 %v2782
      %v2815 = vunpack.c.l.b16 %v2783
      %v2816 = vunpack.c.l.b16 %v2784
      %v2817 = vunpack.c.l.b16 %v2785
      %v2818 = vunpack.c.l.b16 %v2786
      %v2819 = vunpack.c.l.b16 %v2787
      %v2820 = vunpack.c.l.b16 %v2788
      %v2821 = vunpack.c.l.b16 %v2789
      %v2822 = vunpack.c.l.b16 %v2790
      %v2823 = vunpack.c.l.b16 %v2791
      %v2824 = vunpack.c.l.b16 %v2792
      %v2825 = vpack.c.b16 %v2810, %v2809
      %v2826 = vpack.c.b16 %v2812, %v2811
      %v2827 = vpack.c.b16 %v2814, %v2813
      %v2828 = vpack.c.b16 %v2816, %v2815
      %v2829 = vpack.c.b16 %v2818, %v2817
      %v2830 = vpack.c.b16 %v2820, %v2819
      %v2831 = vpack.c.b16 %v2822, %v2821
      %v2832 = vpack.c.b16 %v2824, %v2823
      %2841 = vmatprep.subr.bf16.mxu0 0
      %2842 = vmatpush1.bf16.msra.mxu0 %v2832
      %2843 = vmatprep.subr.bf16.mxu0 0
      %2844 = vmatpush1.bf16.msra.mxu0 %v2831
      %2845 = vmatprep.subr.bf16.mxu0 0
      %2846 = vmatpush1.bf16.msra.mxu0 %v2830
      %2847 = vmatprep.subr.bf16.mxu0 0
      %2848 = vmatpush1.bf16.msra.mxu0 %v2829
      %2849 = vmatprep.subr.bf16.mxu0 0
      %2850 = vmatpush1.bf16.msra.mxu0 %v2828
      %2851 = vmatprep.subr.bf16.mxu0 0
      %2852 = vmatpush1.bf16.msra.mxu0 %v2827
      %2853 = vmatprep.subr.bf16.mxu0 0
      %2854 = vmatpush1.bf16.msra.mxu0 %v2826
      %2855 = vmatprep.subr.bf16.mxu0 0
      %2856 = vmatpush1.bf16.msra.mxu0 %v2825
      %2857 = vmatprep.subr.bf16.mxu0 0
      %2858 = vmatpush2.bf16.msra.mxu0 0
      %2859 = vmatprep.subr.bf16.mxu0 0
      %2860 = vmatpush2.bf16.msra.mxu0 0
      %2861 = vmatprep.subr.bf16.mxu0 0
      %2862 = vmatpush2.bf16.msra.mxu0 0
      %2863 = vmatprep.subr.bf16.mxu0 0
      %2864 = vmatpush2.bf16.msra.mxu0 0
      %2865 = vmatprep.subr.bf16.mxu0 0
      %2866 = vmatpush2.bf16.msra.mxu0 0
      %2867 = vmatprep.subr.bf16.mxu0 0
      %2868 = vmatpush2.bf16.msra.mxu0 0
      %2869 = vmatprep.subr.bf16.mxu0 0
      %2870 = vmatpush2.bf16.msra.mxu0 0
      %2871 = vmatprep.subr.bf16.mxu0 0
      %2872 = vmatpush2.bf16.msra.mxu0 0
      %2873 = vmatprep.mubr.bf16.mxu0 0
      %2874 = vmatmul.mubr.bf16.gmra.mxu0 %v2771
      %v2875 = vpop.f32.mrf.mxu0
      %v2876 = vadd.f32 0.0, %v2875
      %v2877 = vpop.f32.mrf.mxu0
      %v2878 = vpop.f32.mrf.mxu0
      %v2879 = vadd.f32 0.0, %v2878
      %v2880 = vpop.f32.mrf.mxu0
      %2881 = vmatprep.mubr.bf16.mxu0 0
      %2882 = vmatmul.mubr.bf16.gmra.mxu0 %v2772
      %v2883 = vpop.f32.mrf.mxu0
      %v2884 = vadd.f32 0.0, %v2883
      %v2885 = vpop.f32.mrf.mxu0
      %v2886 = vpop.f32.mrf.mxu0
      %v2887 = vadd.f32 0.0, %v2886
      %v2888 = vpop.f32.mrf.mxu0
      %2889 = vmatprep.mubr.bf16.mxu0 0
      %2890 = vmatmul.mubr.bf16.gmra.mxu0 %v2773
      %v2891 = vpop.f32.mrf.mxu0
      %v2892 = vadd.f32 0.0, %v2891
      %v2893 = vpop.f32.mrf.mxu0
      %v2894 = vpop.f32.mrf.mxu0
      %v2895 = vadd.f32 0.0, %v2894
      %v2896 = vpop.f32.mrf.mxu0
      %2897 = vmatprep.mubr.bf16.mxu0 0
      %2898 = vmatmul.mubr.bf16.gmra.mxu0 %v2774
      %v2899 = vpop.f32.mrf.mxu0
      %v2900 = vadd.f32 0.0, %v2899
      %v2901 = vpop.f32.mrf.mxu0
      %v2902 = vpop.f32.mrf.mxu0
      %v2903 = vadd.f32 0.0, %v2902
      %v2904 = vpop.f32.mrf.mxu0
      %2905 = vmatprep.mubr.bf16.mxu0 0
      %2906 = vmatmul.mubr.bf16.gmra.mxu0 %v2775
      %v2907 = vpop.f32.mrf.mxu0
      %v2908 = vadd.f32 0.0, %v2907
      %v2909 = vpop.f32.mrf.mxu0
      %v2910 = vpop.f32.mrf.mxu0
      %v2911 = vadd.f32 0.0, %v2910
      %v2912 = vpop.f32.mrf.mxu0
      %2913 = vdwg.mxu0
      %v2914 = vadd.f32 %v2751, %v2876
      %v2915 = vadd.f32 %v2752, %v2879
      %v2916 = vadd.f32 %v2753, %v2884
      %v2917 = vadd.f32 %v2754, %v2887
      %v2918 = vadd.f32 %v2755, %v2892
      %v2919 = vadd.f32 %v2756, %v2895
      %v2920 = vadd.f32 %v2757, %v2900
      %v2921 = vadd.f32 %v2758, %v2903
      %v2922 = vadd.f32 %v2759, %v2908
      %v2923 = vadd.f32 %v2760, %v2911
      %v2924 = vld [vmem:[#allocation2 + $0x1b] sm:$0xff]
      %v2925 = vld [vmem:[#allocation2 + $0x23] sm:$0xff]
      %v2926 = vld [vmem:[#allocation2 + $0x2b] sm:$0xff]
      %v2927 = vld [vmem:[#allocation2 + $0x33] sm:$0xff]
      %v2928 = vld [vmem:[#allocation2 + $0x3b] sm:$0xff]
      %v2929 = vld [vmem:[#allocation2 + $0x43] sm:$0xff]
      %v2930 = vld [vmem:[#allocation2 + $0x4b] sm:$0xff]
      %v2931 = vld [vmem:[#allocation2 + $0x53] sm:$0xff]
      %v2932 = vld [vmem:[#allocation2 + $0x5b] sm:$0xff]
      %v2933 = vld [vmem:[#allocation2 + $0x63] sm:$0xff]
      %v2934 = vpack.c.bf16 %v2925, %v2924
      %v2935 = vpack.c.bf16 %v2927, %v2926
      %v2936 = vpack.c.bf16 %v2929, %v2928
      %v2937 = vpack.c.bf16 %v2931, %v2930
      %v2938 = vpack.c.bf16 %v2933, %v2932
      %s2939 = scalar_lea.vmem %s3, 512
      %v2940 = vld [vmem:[%s2939] sm:$0xf]
      %v2941 = vld [vmem:[%s2939 + $0x4] sm:$0xf]
      %v2942 = vld [vmem:[%s2939 + $0x8] sm:$0xf]
      %v2943 = vld [vmem:[%s2939 + $0xc] sm:$0xf]
      %v2944 = vld [vmem:[%s2939 + $0x10] sm:$0xf]
      %v2945 = vld [vmem:[%s2939 + $0x14] sm:$0xf]
      %v2946 = vld [vmem:[%s2939 + $0x18] sm:$0xf]
      %v2947 = vld [vmem:[%s2939 + $0x1c] sm:$0xf]
      %v2948 = vld [vmem:[%s2939 + $0x20] sm:$0xf]
      %v2949 = vld [vmem:[%s2939 + $0x24] sm:$0xf]
      %v2950 = vld [vmem:[%s2939 + $0x28] sm:$0xf]
      %v2951 = vld [vmem:[%s2939 + $0x2c] sm:$0xf]
      %v2952 = vld [vmem:[%s2939 + $0x30] sm:$0xf]
      %v2953 = vld [vmem:[%s2939 + $0x34] sm:$0xf]
      %v2954 = vld [vmem:[%s2939 + $0x38] sm:$0xf]
      %v2955 = vld [vmem:[%s2939 + $0x3c] sm:$0xf]
      %v2972 = vunpack.c.l.b16 %v2940
      %v2973 = vunpack.c.l.b16 %v2941
      %v2974 = vunpack.c.l.b16 %v2942
      %v2975 = vunpack.c.l.b16 %v2943
      %v2976 = vunpack.c.l.b16 %v2944
      %v2977 = vunpack.c.l.b16 %v2945
      %v2978 = vunpack.c.l.b16 %v2946
      %v2979 = vunpack.c.l.b16 %v2947
      %v2980 = vunpack.c.l.b16 %v2948
      %v2981 = vunpack.c.l.b16 %v2949
      %v2982 = vunpack.c.l.b16 %v2950
      %v2983 = vunpack.c.l.b16 %v2951
      %v2984 = vunpack.c.l.b16 %v2952
      %v2985 = vunpack.c.l.b16 %v2953
      %v2986 = vunpack.c.l.b16 %v2954
      %v2987 = vunpack.c.l.b16 %v2955
      %v2988 = vpack.c.b16 %v2973, %v2972
      %v2989 = vpack.c.b16 %v2975, %v2974
      %v2990 = vpack.c.b16 %v2977, %v2976
      %v2991 = vpack.c.b16 %v2979, %v2978
      %v2992 = vpack.c.b16 %v2981, %v2980
      %v2993 = vpack.c.b16 %v2983, %v2982
      %v2994 = vpack.c.b16 %v2985, %v2984
      %v2995 = vpack.c.b16 %v2987, %v2986
      %3004 = vmatprep.subr.bf16.mxu0 0
      %3005 = vmatpush1.bf16.msra.mxu0 %v2995
      %3006 = vmatprep.subr.bf16.mxu0 0
      %3007 = vmatpush1.bf16.msra.mxu0 %v2994
      %3008 = vmatprep.subr.bf16.mxu0 0
      %3009 = vmatpush1.bf16.msra.mxu0 %v2993
      %3010 = vmatprep.subr.bf16.mxu0 0
      %3011 = vmatpush1.bf16.msra.mxu0 %v2992
      %3012 = vmatprep.subr.bf16.mxu0 0
      %3013 = vmatpush1.bf16.msra.mxu0 %v2991
      %3014 = vmatprep.subr.bf16.mxu0 0
      %3015 = vmatpush1.bf16.msra.mxu0 %v2990
      %3016 = vmatprep.subr.bf16.mxu0 0
      %3017 = vmatpush1.bf16.msra.mxu0 %v2989
      %3018 = vmatprep.subr.bf16.mxu0 0
      %3019 = vmatpush1.bf16.msra.mxu0 %v2988
      %3020 = vmatprep.subr.bf16.mxu0 0
      %3021 = vmatpush2.bf16.msra.mxu0 0
      %3022 = vmatprep.subr.bf16.mxu0 0
      %3023 = vmatpush2.bf16.msra.mxu0 0
      %3024 = vmatprep.subr.bf16.mxu0 0
      %3025 = vmatpush2.bf16.msra.mxu0 0
      %3026 = vmatprep.subr.bf16.mxu0 0
      %3027 = vmatpush2.bf16.msra.mxu0 0
      %3028 = vmatprep.subr.bf16.mxu0 0
      %3029 = vmatpush2.bf16.msra.mxu0 0
      %3030 = vmatprep.subr.bf16.mxu0 0
      %3031 = vmatpush2.bf16.msra.mxu0 0
      %3032 = vmatprep.subr.bf16.mxu0 0
      %3033 = vmatpush2.bf16.msra.mxu0 0
      %3034 = vmatprep.subr.bf16.mxu0 0
      %3035 = vmatpush2.bf16.msra.mxu0 0
      %3036 = vmatprep.mubr.bf16.mxu0 0
      %3037 = vmatmul.mubr.bf16.gmra.mxu0 %v2934
      %v3038 = vpop.f32.mrf.mxu0
      %v3039 = vadd.f32 0.0, %v3038
      %v3040 = vpop.f32.mrf.mxu0
      %v3041 = vpop.f32.mrf.mxu0
      %v3042 = vadd.f32 0.0, %v3041
      %v3043 = vpop.f32.mrf.mxu0
      %3044 = vmatprep.mubr.bf16.mxu0 0
      %3045 = vmatmul.mubr.bf16.gmra.mxu0 %v2935
      %v3046 = vpop.f32.mrf.mxu0
      %v3047 = vadd.f32 0.0, %v3046
      %v3048 = vpop.f32.mrf.mxu0
      %v3049 = vpop.f32.mrf.mxu0
      %v3050 = vadd.f32 0.0, %v3049
      %v3051 = vpop.f32.mrf.mxu0
      %3052 = vmatprep.mubr.bf16.mxu0 0
      %3053 = vmatmul.mubr.bf16.gmra.mxu0 %v2936
      %v3054 = vpop.f32.mrf.mxu0
      %v3055 = vadd.f32 0.0, %v3054
      %v3056 = vpop.f32.mrf.mxu0
      %v3057 = vpop.f32.mrf.mxu0
      %v3058 = vadd.f32 0.0, %v3057
      %v3059 = vpop.f32.mrf.mxu0
      %3060 = vmatprep.mubr.bf16.mxu0 0
      %3061 = vmatmul.mubr.bf16.gmra.mxu0 %v2937
      %v3062 = vpop.f32.mrf.mxu0
      %v3063 = vadd.f32 0.0, %v3062
      %v3064 = vpop.f32.mrf.mxu0
      %v3065 = vpop.f32.mrf.mxu0
      %v3066 = vadd.f32 0.0, %v3065
      %v3067 = vpop.f32.mrf.mxu0
      %3068 = vmatprep.mubr.bf16.mxu0 0
      %3069 = vmatmul.mubr.bf16.gmra.mxu0 %v2938
      %v3070 = vpop.f32.mrf.mxu0
      %v3071 = vadd.f32 0.0, %v3070
      %v3072 = vpop.f32.mrf.mxu0
      %v3073 = vpop.f32.mrf.mxu0
      %v3074 = vadd.f32 0.0, %v3073
      %v3075 = vpop.f32.mrf.mxu0
      %3076 = vdwg.mxu0
      %v3077 = vadd.f32 %v2914, %v3039
      %v3078 = vadd.f32 %v2915, %v3042
      %v3079 = vadd.f32 %v2916, %v3047
      %v3080 = vadd.f32 %v2917, %v3050
      %v3081 = vadd.f32 %v2918, %v3055
      %v3082 = vadd.f32 %v2919, %v3058
      %v3083 = vadd.f32 %v2920, %v3063
      %v3084 = vadd.f32 %v2921, %v3066
      %v3085 = vadd.f32 %v2922, %v3071
      %v3086 = vadd.f32 %v2923, %v3074
      %v3087 = vld [vmem:[%s4 + $0x2] sm:$0x1]
      %v3088 = vlaneseq
      %v3089 = vshrl.u32 %v3088, 7
      %v3090 = vsub.s32 0, %v3089
      %v3091 = vrot.slane %v3087, %v3090
      %v3092 = vadd.f32 %v3077, %v3091
      %v3093 = vadd.f32 %v3078, %v3091
      %v3094 = vadd.f32 %v3079, %v3091
      %v3095 = vadd.f32 %v3080, %v3091
      %v3096 = vadd.f32 %v3081, %v3091
      %v3097 = vadd.f32 %v3082, %v3091
      %v3098 = vadd.f32 %v3083, %v3091
      %v3099 = vadd.f32 %v3084, %v3091
      %v3100 = vadd.f32 %v3085, %v3091
      %v3101 = vadd.f32 %v3086, %v3091
      %v3102 = vadd.f32 %v3092, %v1603
      %v3103 = vadd.f32 %v3093, %v1606
      %v3104 = vadd.f32 %v3094, %v1611
      %v3105 = vadd.f32 %v3095, %v1614
      %v3106 = vadd.f32 %v3096, %v1619
      %v3107 = vadd.f32 %v3097, %v1622
      %v3108 = vadd.f32 %v3098, %v1627
      %v3109 = vadd.f32 %v3099, %v1630
      %v3110 = vadd.f32 %v3100, %v1635
      %v3111 = vadd.f32 %v3101, %v1638
      %v3112 = vmax.f32 %v3102, 0.0
      %v3113 = vmax.f32 %v3103, 0.0
      %v3114 = vmax.f32 %v3104, 0.0
      %v3115 = vmax.f32 %v3105, 0.0
      %v3116 = vmax.f32 %v3106, 0.0
      %v3117 = vmax.f32 %v3107, 0.0
      %v3118 = vmax.f32 %v3108, 0.0
      %v3119 = vmax.f32 %v3109, 0.0
      %v3120 = vmax.f32 %v3110, 0.0
      %v3121 = vmax.f32 %v3111, 0.0
      %3122 = vst [vmem:[%s224] sm:$0xff] %v3112
      %3123 = vst [vmem:[%s224 + $0x8] sm:$0xff] %v3113
      %3124 = vst [vmem:[%s224 + $0x10] sm:$0xff] %v3114
      %3125 = vst [vmem:[%s224 + $0x18] sm:$0xff] %v3115
      %3126 = vst [vmem:[%s224 + $0x20] sm:$0xff] %v3116
      %3127 = vst [vmem:[%s224 + $0x28] sm:$0xff] %v3117
      %3128 = vst [vmem:[%s224 + $0x30] sm:$0xff] %v3118
      %3129 = vst [vmem:[%s224 + $0x38] sm:$0xff] %v3119
      %3130 = vst [vmem:[%s224 + $0x40] sm:$0xff] %v3120
      %3131 = vst [vmem:[%s224 + $0x48] sm:$0xff] %v3121
      %p3132 = scmp.lt.s32.totalorder %s16, 1
      %s3133 = scalar_select %p3132, %s16, 1
      %s3134 = smul.addr %s3133, 10
      %s3135 = smul.addr %s3134, 8
      %s3136 = scalar_lea.vmem %s5, %s3135
      // Predicated region
      $region41: #{residual_block_forward.1} parent=39 // pred_check
        %p3137 = pneg %p144
      $region42: #{residual_block_forward.1} parent=39 // pred_check_branch
        %3139 = sbr.rel (%p3137) target = $region44
      $region43: #{residual_block_forward.1} parent=39 // pred_region
        _
      $region44: #{residual_block_forward.1} parent=39 // pred_fallthru
        _
    $region40: #{residual_block_forward.1} parent=5 // pred_fallthru
      _
    %p3140 = scmp.le.s32.totalorder 2, %s11
    // Predicated region
    $region45: #{residual_block_forward.1} parent=5 // pred_check
      %p3141 = pneg %p3140
    $region46: #{residual_block_forward.1} parent=5 // pred_check_branch
      %3143 = sbr.rel (%p3141) target = $region48
    $region47: #{residual_block_forward.1} parent=5 // pred_region
      %s3144 = ssub.s32 %s11, 2
      // Predicated region
      $region49: #{residual_block_forward.1} parent=47 // pred_check
        %p3145 = pneg %p150
      $region50: #{residual_block_forward.1} parent=47 // pred_check_branch
        %3147 = sbr.rel (%p3145) target = $region52
      $region51: #{residual_block_forward.1} parent=47 // pred_region
        %p3148 = scmp.lt.s32.totalorder %s17, 1
        %s3149 = scalar_select %p3148, %s17, 1
        %s3150 = smul.addr %s3149, 10
        %s3151 = smul.addr %s3150, 8
        %s3152 = scalar_lea.vmem %s5, %s3151
      $region52: #{residual_block_forward.1} parent=47 // pred_fallthru
        _
    $region48: #{residual_block_forward.1} parent=5 // pred_fallthru
      _
  $region6: #{residual_block_forward.1} parent=0 // loop_footer
    %s15 = sadd.s32 1, %s11
  $region7: #{residual_block_forward.1} parent=0 // loop_footer_branch
    %10 = sbr.rel target = $region3
  $region8: #{residual_block_forward.1} parent=0 // loop_exit
    _

</llo_original>
